<compile_context>
chip_gen: v6e
topology: v6e:2x2x1
jax: 0.10.0
libtpu: 0.0.40
codegen_flags: <defaults>
</compile_context>

<pallas_src>
import jax
import jax.numpy as jnp
from jax import lax
from jax.experimental import pallas as pl
from jax.experimental.pallas import tpu as pltpu

# ---- module constants (from training.py) ----
BLOCK_SIZE = 32                      # max sequence length / tril size
N_EMBEDD = 384                       # embedding dim
NUM_HEADS = 4                        # args.num_att_heads default
HEAD_SIZE = N_EMBEDD // NUM_HEADS    # 96
HS_PAD = 128                         # head_size padded to one 128-lane tile


def mha_kernel(x_ref, wqkv_ref, wp_ref, bp_ref, o_ref):
    """One grid step processes `bb` batch elements.

    x_ref    : (bb, T, C)           VMEM, bf16
    wqkv_ref : (C, 3*H*HS_PAD)      VMEM, bf16  (Q heads | K heads | V heads)
    wp_ref   : (H*HS_PAD, C)        VMEM, bf16  (zero rows for padded head dims)
    bp_ref   : (1, C)               VMEM, f32
    o_ref    : (bb, T, C)           VMEM, f32
    """
    bb, T, C = x_ref.shape
    H = wp_ref.shape[0] // HS_PAD

    # ---- fused QKV projection for all heads / all batches in one MXU pass ----
    x2d = x_ref[...].reshape(bb * T, C)                                   # bf16
    qkv = jnp.dot(x2d, wqkv_ref[...],
                  preferred_element_type=jnp.float32)                    # (bb*T, 3*H*128) f32

    # ---- causal additive bias, built once per grid step ----
    row = lax.broadcasted_iota(jnp.int32, (T, T), 0)
    col = lax.broadcasted_iota(jnp.int32, (T, T), 1)
    bias = jnp.where(row >= col, 0.0, -1e30).astype(jnp.float32)         # (T, T)

    bp = bp_ref[0].astype(jnp.float32)                                   # (C,)
    wp = wp_ref[...]                                                     # (H*128, C) bf16

    for b in range(bb):                      # bb, H small & static -> unrolled
        r0 = b * T
        acc = jnp.zeros((T, C), jnp.float32)
        for h in range(H):
            q = qkv[r0:r0 + T, h * HS_PAD:(h + 1) * HS_PAD]              # (T, 128)
            k = qkv[r0:r0 + T, (H + h) * HS_PAD:(H + h + 1) * HS_PAD]    # (T, 128)
            v = qkv[r0:r0 + T, (2 * H + h) * HS_PAD:(2 * H + h + 1) * HS_PAD]

            # scores = q @ k^T (scale already folded into Wq); no explicit transpose
            s = lax.dot_general(q, k, (((1,), (1,)), ((), ())),
                                preferred_element_type=jnp.float32) + bias

            # softmax in f32, reciprocal on the EUP
            m = jnp.max(s, axis=-1, keepdims=True)
            e = jnp.exp(s - m)
            p = e * pl.reciprocal(jnp.sum(e, axis=-1, keepdims=True), approx=True)
            # dropout(p) -> identity (eval mode)

            hv = jnp.dot(p, v, preferred_element_type=jnp.float32)       # (T, 128)

            # per-head output-projection accumulation (no concatenate)
            acc = acc + jnp.dot(hv.astype(jnp.bfloat16),
                                wp[h * HS_PAD:(h + 1) * HS_PAD, :],
                                preferred_element_type=jnp.float32)      # (T, C)

        # dropout(out) -> identity (eval mode)
        o_ref[b] = (acc + bp).astype(o_ref.dtype)


def _pack_weights(wq, wk, wv, wp):
    """Pack per-head weights into lane-dense, zero-padded bf16 slabs.

    wq/wk/wv : (H, C, hs)   -> wqkv (C, 3*H*HS_PAD) with 1/sqrt(hs) folded into Q
    wp       : (H*hs, C)    -> wp_pad (H*HS_PAD, C) with zero rows for padded dims
    """
    H, C, hs = wq.shape
    scale = hs ** (-0.5)
    pad = HS_PAD - hs

    def pad_cols(w):                                   # (H, C, hs) -> (H, C, HS_PAD)
        return jnp.pad(w, ((0, 0), (0, 0), (0, pad)))

    def heads_to_cols(w):                              # (H, C, HS_PAD) -> (C, H*HS_PAD)
        return jnp.transpose(w, (1, 0, 2)).reshape(C, H * HS_PAD)

    wqkv = jnp.concatenate(
        [heads_to_cols(pad_cols(wq * scale)),
         heads_to_cols(pad_cols(wk)),
         heads_to_cols(pad_cols(wv))], axis=1)

    wp_pad = jnp.pad(wp.reshape(H, hs, C),
                     ((0, 0), (0, pad), (0, 0))).reshape(H * HS_PAD, C)

    return wqkv.astype(jnp.bfloat16), wp_pad.astype(jnp.bfloat16)


def multi_head_attention(x, wq, wk, wv, wp, bp, *, batch_block=None):
    """x: (B, T, C); wq/wk/wv: (H, C, hs); wp: (H*hs, C); bp: (C,)"""
    B, T, C = x.shape
    wqkv, wp_pad = _pack_weights(wq, wk, wv, wp)
    bp2 = bp.reshape(1, C).astype(jnp.float32)
    x_in = x.astype(jnp.bfloat16)

    if batch_block is None:
        batch_block = B          # fold all batches into one grid step (v5e/v6e)
        # TODO(synk): on v7x prefer batch_block = B // 2 to use both TensorCores.
    bb = batch_block
    grid = (pl.cdiv(B, bb),)

    return pl.pallas_call(
        mha_kernel,
        out_shape=jax.ShapeDtypeStruct((B, T, C), x.dtype),
        grid_spec=pltpu.PrefetchScalarGridSpec(
            num_scalar_prefetch=0,
            grid=grid,
            in_specs=[
                pl.BlockSpec((bb, T, C), lambda i: (i, 0, 0)),        # x
                pl.BlockSpec(wqkv.shape, lambda i: (0, 0)),           # fused QKV weights
                pl.BlockSpec(wp_pad.shape, lambda i: (0, 0)),         # output projection
                pl.BlockSpec((1, C), lambda i: (0, 0)),               # output bias
            ],
            out_specs=pl.BlockSpec((bb, T, C), lambda i: (i, 0, 0)),
        ),
        compiler_params=pltpu.CompilerParams(
            dimension_semantics=("parallel",),
        ),
    )(x_in, wqkv, wp_pad, bp2)


def reference(x, wq, wk, wv, wp, bp):
    """Pure-JAX f32 reference matching the PyTorch forward (eval mode)."""
    B, T, C = x.shape
    H, _, hs = wq.shape
    causal = jnp.tril(jnp.ones((T, T), dtype=bool))
    outs = []
    for h in range(H):
        q = x @ wq[h]
        k = x @ wk[h]
        v = x @ wv[h]
        s = (q @ jnp.swapaxes(k, -2, -1)) * hs ** (-0.5)
        s = jnp.where(causal, s, -jnp.inf)
        p = jax.nn.softmax(s, axis=-1)
        outs.append(p @ v)
    cat = jnp.concatenate(outs, axis=-1)
    return cat @ wp + bp


if __name__ == "__main__":
    B, T, C, H, hs = 2, BLOCK_SIZE, N_EMBEDD, NUM_HEADS, HEAD_SIZE

    key = jax.random.PRNGKey(0)
    kx, kq, kk, kv, kp, kb = jax.random.split(key, 6)

    x = jax.random.normal(kx, (B, T, C), dtype=jnp.float32)
    # deterministic parameter init (PyTorch Linear weights, stored pre-transposed)
    wq = jax.random.normal(kq, (H, C, hs), dtype=jnp.float32) * 0.02
    wk = jax.random.normal(kk, (H, C, hs), dtype=jnp.float32) * 0.02
    wv = jax.random.normal(kv, (H, C, hs), dtype=jnp.float32) * 0.02
    wp = jax.random.normal(kp, (H * hs, C), dtype=jnp.float32) * 0.02
    bp = jax.random.normal(kb, (C,), dtype=jnp.float32) * 0.02

    out = multi_head_attention(x, wq, wk, wv, wp, bp)
    out = jax.block_until_ready(out)

    ref = reference(x, wq, wk, wv, wp, bp)
    assert out.shape == (B, T, C)
    # bf16 MXU inputs (f32 accumulation) -> compare against the f32 reference
    # with a correspondingly looser tolerance.
    assert jnp.allclose(out, ref, atol=2e-2, rtol=2e-2), "mismatch vs reference"

    print("KERNEL_OK")
</pallas_src>

<mosaic_0001>
module attributes {stable_mosaic.version = 11 : i64} {
  func.func @mha_kernel(%arg0: i32, %arg1: memref<2x32x384xbf16, #tpu.memory_space<vmem>>, %arg2: memref<384x1536xbf16, #tpu.memory_space<vmem>>, %arg3: memref<512x384xbf16, #tpu.memory_space<vmem>>, %arg4: memref<1x384xf32, #tpu.memory_space<vmem>>, %arg5: memref<2x32x384xf32, #tpu.memory_space<vmem>>) attributes {dimension_semantics = [#tpu.dimension_semantics<parallel>], iteration_bounds = array<i64: 1>, scalar_prefetch = 0 : i64, scratch_operands = 0 : i64, tpu.core_type = #tpu.core_type<tc>, window_params = [{transform_indices = @transform_0, window_bounds = array<i64: 2, 32, 384>}, {pipeline_mode = #tpu.pipeline_mode<synchronous>, transform_indices = @transform_1, window_bounds = array<i64: 384, 1536>}, {pipeline_mode = #tpu.pipeline_mode<synchronous>, transform_indices = @transform_2, window_bounds = array<i64: 512, 384>}, {pipeline_mode = #tpu.pipeline_mode<synchronous>, transform_indices = @transform_3, window_bounds = array<i64: 1, 384>}, {transform_indices = @transform_4, window_bounds = array<i64: 2, 32, 384>}]} {
    %c0 = arith.constant 0 : index
    %c0_0 = arith.constant 0 : index
    %c0_1 = arith.constant 0 : index
    %0 = vector.load %arg1[%c0, %c0_0, %c0_1] : memref<2x32x384xbf16, #tpu.memory_space<vmem>>, vector<2x32x384xbf16>
    %1 = vector.shape_cast %0 : vector<2x32x384xbf16> to vector<64x384xbf16>
    %c0_2 = arith.constant 0 : index
    %c0_3 = arith.constant 0 : index
    %2 = vector.load %arg2[%c0_2, %c0_3] : memref<384x1536xbf16, #tpu.memory_space<vmem>>, vector<384x1536xbf16>
    %cst = arith.constant dense<0.000000e+00> : vector<64x1536xf32>
    %3 = tpu.matmul %1, %2, %cst {dimension_numbers = #tpu.dot_dimension_numbers<[1], [0], [0], [1], [0, 0, 1, 1], [], []>} : vector<64x384xbf16>, vector<384x1536xbf16>, vector<64x1536xf32> -> vector<64x1536xf32>
    %4 = tpu.iota {dimensions = array<i32: 0>} : vector<32x32xi32>
    %5 = tpu.iota {dimensions = array<i32: 1>} : vector<32x32xi32>
    %6 = arith.cmpi sge, %4, %5 : vector<32x32xi32>
    %cst_4 = arith.constant 0.000000e+00 : f32
    %cst_5 = arith.constant -1.000000e+30 : f32
    %7 = vector.broadcast %cst_4 : f32 to vector<32x32xf32>
    %8 = vector.broadcast %cst_5 : f32 to vector<32x32xf32>
    %9 = arith.select %6, %7, %8 : vector<32x32xi1>, vector<32x32xf32>
    %c0_6 = arith.constant 0 : index
    %c0_7 = arith.constant 0 : index
    %10 = vector.load %arg4[%c0_6, %c0_7] : memref<1x384xf32, #tpu.memory_space<vmem>>, vector<1x384xf32>
    %11 = vector.shape_cast %10 : vector<1x384xf32> to vector<384xf32>
    %c0_8 = arith.constant 0 : index
    %c0_9 = arith.constant 0 : index
    %12 = vector.load %arg3[%c0_8, %c0_9] : memref<512x384xbf16, #tpu.memory_space<vmem>>, vector<512x384xbf16>
    %cst_10 = arith.constant 0.000000e+00 : f32
    %13 = vector.broadcast %cst_10 : f32 to vector<32x384xf32>
    %14 = vector.extract_strided_slice %3 {offsets = [0, 0], sizes = [32, 128], strides = [1, 1]} : vector<64x1536xf32> to vector<32x128xf32>
    %15 = vector.extract_strided_slice %3 {offsets = [0, 512], sizes = [32, 128], strides = [1, 1]} : vector<64x1536xf32> to vector<32x128xf32>
    %16 = vector.extract_strided_slice %3 {offsets = [0, 1024], sizes = [32, 128], strides = [1, 1]} : vector<64x1536xf32> to vector<32x128xf32>
    %cst_11 = arith.constant dense<0.000000e+00> : vector<32x32xf32>
    %17 = tpu.matmul %14, %15, %cst_11 {dimension_numbers = #tpu.dot_dimension_numbers<[1], [1], [0], [0], [0, 0, 1, 0], [], []>} : vector<32x128xf32>, vector<32x128xf32>, vector<32x32xf32> -> vector<32x32xf32>
    %18 = arith.addf %17, %9 : vector<32x32xf32>
    %cst_12 = arith.constant dense<0xFF800000> : vector<32xf32>
    %19 = vector.multi_reduction <maximumf>, %18, %cst_12 [1] : vector<32x32xf32> to vector<32xf32>
    %20 = vector.shape_cast %19 : vector<32xf32> to vector<32x1xf32>
    %21 = vector.broadcast %20 : vector<32x1xf32> to vector<32x32xf32>
    %22 = arith.subf %18, %21 : vector<32x32xf32>
    %23 = math.exp %22 : vector<32x32xf32>
    %cst_13 = arith.constant dense<0.000000e+00> : vector<32xf32>
    %24 = vector.multi_reduction <add>, %23, %cst_13 [1] : vector<32x32xf32> to vector<32xf32>
    %25 = vector.shape_cast %24 : vector<32xf32> to vector<32x1xf32>
    %26 = tpu.reciprocal %25 {approx = true} : vector<32x1xf32> -> vector<32x1xf32>
    %27 = vector.broadcast %26 : vector<32x1xf32> to vector<32x32xf32>
    %28 = arith.mulf %23, %27 : vector<32x32xf32>
    %cst_14 = arith.constant dense<0.000000e+00> : vector<32x128xf32>
    %29 = tpu.matmul %28, %16, %cst_14 {dimension_numbers = #tpu.dot_dimension_numbers<[1], [0], [0], [1], [0, 0, 1, 1], [], []>} : vector<32x32xf32>, vector<32x128xf32>, vector<32x128xf32> -> vector<32x128xf32>
    %30 = arith.truncf %29 : vector<32x128xf32> to vector<32x128xbf16>
    %31 = vector.extract_strided_slice %12 {offsets = [0, 0], sizes = [128, 384], strides = [1, 1]} : vector<512x384xbf16> to vector<128x384xbf16>
    %cst_15 = arith.constant dense<0.000000e+00> : vector<32x384xf32>
    %32 = tpu.matmul %30, %31, %cst_15 {dimension_numbers = #tpu.dot_dimension_numbers<[1], [0], [0], [1], [0, 0, 1, 1], [], []>} : vector<32x128xbf16>, vector<128x384xbf16>, vector<32x384xf32> -> vector<32x384xf32>
    %33 = arith.addf %13, %32 : vector<32x384xf32>
    %34 = vector.extract_strided_slice %3 {offsets = [0, 128], sizes = [32, 128], strides = [1, 1]} : vector<64x1536xf32> to vector<32x128xf32>
    %35 = vector.extract_strided_slice %3 {offsets = [0, 640], sizes = [32, 128], strides = [1, 1]} : vector<64x1536xf32> to vector<32x128xf32>
    %36 = vector.extract_strided_slice %3 {offsets = [0, 1152], sizes = [32, 128], strides = [1, 1]} : vector<64x1536xf32> to vector<32x128xf32>
    %cst_16 = arith.constant dense<0.000000e+00> : vector<32x32xf32>
    %37 = tpu.matmul %34, %35, %cst_16 {dimension_numbers = #tpu.dot_dimension_numbers<[1], [1], [0], [0], [0, 0, 1, 0], [], []>} : vector<32x128xf32>, vector<32x128xf32>, vector<32x32xf32> -> vector<32x32xf32>
    %38 = arith.addf %37, %9 : vector<32x32xf32>
    %cst_17 = arith.constant dense<0xFF800000> : vector<32xf32>
    %39 = vector.multi_reduction <maximumf>, %38, %cst_17 [1] : vector<32x32xf32> to vector<32xf32>
    %40 = vector.shape_cast %39 : vector<32xf32> to vector<32x1xf32>
    %41 = vector.broadcast %40 : vector<32x1xf32> to vector<32x32xf32>
    %42 = arith.subf %38, %41 : vector<32x32xf32>
    %43 = math.exp %42 : vector<32x32xf32>
    %cst_18 = arith.constant dense<0.000000e+00> : vector<32xf32>
    %44 = vector.multi_reduction <add>, %43, %cst_18 [1] : vector<32x32xf32> to vector<32xf32>
    %45 = vector.shape_cast %44 : vector<32xf32> to vector<32x1xf32>
    %46 = tpu.reciprocal %45 {approx = true} : vector<32x1xf32> -> vector<32x1xf32>
    %47 = vector.broadcast %46 : vector<32x1xf32> to vector<32x32xf32>
    %48 = arith.mulf %43, %47 : vector<32x32xf32>
    %cst_19 = arith.constant dense<0.000000e+00> : vector<32x128xf32>
    %49 = tpu.matmul %48, %36, %cst_19 {dimension_numbers = #tpu.dot_dimension_numbers<[1], [0], [0], [1], [0, 0, 1, 1], [], []>} : vector<32x32xf32>, vector<32x128xf32>, vector<32x128xf32> -> vector<32x128xf32>
    %50 = arith.truncf %49 : vector<32x128xf32> to vector<32x128xbf16>
    %51 = vector.extract_strided_slice %12 {offsets = [128, 0], sizes = [128, 384], strides = [1, 1]} : vector<512x384xbf16> to vector<128x384xbf16>
    %cst_20 = arith.constant dense<0.000000e+00> : vector<32x384xf32>
    %52 = tpu.matmul %50, %51, %cst_20 {dimension_numbers = #tpu.dot_dimension_numbers<[1], [0], [0], [1], [0, 0, 1, 1], [], []>} : vector<32x128xbf16>, vector<128x384xbf16>, vector<32x384xf32> -> vector<32x384xf32>
    %53 = arith.addf %33, %52 : vector<32x384xf32>
    %54 = vector.extract_strided_slice %3 {offsets = [0, 256], sizes = [32, 128], strides = [1, 1]} : vector<64x1536xf32> to vector<32x128xf32>
    %55 = vector.extract_strided_slice %3 {offsets = [0, 768], sizes = [32, 128], strides = [1, 1]} : vector<64x1536xf32> to vector<32x128xf32>
    %56 = vector.extract_strided_slice %3 {offsets = [0, 1280], sizes = [32, 128], strides = [1, 1]} : vector<64x1536xf32> to vector<32x128xf32>
    %cst_21 = arith.constant dense<0.000000e+00> : vector<32x32xf32>
    %57 = tpu.matmul %54, %55, %cst_21 {dimension_numbers = #tpu.dot_dimension_numbers<[1], [1], [0], [0], [0, 0, 1, 0], [], []>} : vector<32x128xf32>, vector<32x128xf32>, vector<32x32xf32> -> vector<32x32xf32>
    %58 = arith.addf %57, %9 : vector<32x32xf32>
    %cst_22 = arith.constant dense<0xFF800000> : vector<32xf32>
    %59 = vector.multi_reduction <maximumf>, %58, %cst_22 [1] : vector<32x32xf32> to vector<32xf32>
    %60 = vector.shape_cast %59 : vector<32xf32> to vector<32x1xf32>
    %61 = vector.broadcast %60 : vector<32x1xf32> to vector<32x32xf32>
    %62 = arith.subf %58, %61 : vector<32x32xf32>
    %63 = math.exp %62 : vector<32x32xf32>
    %cst_23 = arith.constant dense<0.000000e+00> : vector<32xf32>
    %64 = vector.multi_reduction <add>, %63, %cst_23 [1] : vector<32x32xf32> to vector<32xf32>
    %65 = vector.shape_cast %64 : vector<32xf32> to vector<32x1xf32>
    %66 = tpu.reciprocal %65 {approx = true} : vector<32x1xf32> -> vector<32x1xf32>
    %67 = vector.broadcast %66 : vector<32x1xf32> to vector<32x32xf32>
    %68 = arith.mulf %63, %67 : vector<32x32xf32>
    %cst_24 = arith.constant dense<0.000000e+00> : vector<32x128xf32>
    %69 = tpu.matmul %68, %56, %cst_24 {dimension_numbers = #tpu.dot_dimension_numbers<[1], [0], [0], [1], [0, 0, 1, 1], [], []>} : vector<32x32xf32>, vector<32x128xf32>, vector<32x128xf32> -> vector<32x128xf32>
    %70 = arith.truncf %69 : vector<32x128xf32> to vector<32x128xbf16>
    %71 = vector.extract_strided_slice %12 {offsets = [256, 0], sizes = [128, 384], strides = [1, 1]} : vector<512x384xbf16> to vector<128x384xbf16>
    %cst_25 = arith.constant dense<0.000000e+00> : vector<32x384xf32>
    %72 = tpu.matmul %70, %71, %cst_25 {dimension_numbers = #tpu.dot_dimension_numbers<[1], [0], [0], [1], [0, 0, 1, 1], [], []>} : vector<32x128xbf16>, vector<128x384xbf16>, vector<32x384xf32> -> vector<32x384xf32>
    %73 = arith.addf %53, %72 : vector<32x384xf32>
    %74 = vector.extract_strided_slice %3 {offsets = [0, 384], sizes = [32, 128], strides = [1, 1]} : vector<64x1536xf32> to vector<32x128xf32>
    %75 = vector.extract_strided_slice %3 {offsets = [0, 896], sizes = [32, 128], strides = [1, 1]} : vector<64x1536xf32> to vector<32x128xf32>
    %76 = vector.extract_strided_slice %3 {offsets = [0, 1408], sizes = [32, 128], strides = [1, 1]} : vector<64x1536xf32> to vector<32x128xf32>
    %cst_26 = arith.constant dense<0.000000e+00> : vector<32x32xf32>
    %77 = tpu.matmul %74, %75, %cst_26 {dimension_numbers = #tpu.dot_dimension_numbers<[1], [1], [0], [0], [0, 0, 1, 0], [], []>} : vector<32x128xf32>, vector<32x128xf32>, vector<32x32xf32> -> vector<32x32xf32>
    %78 = arith.addf %77, %9 : vector<32x32xf32>
    %cst_27 = arith.constant dense<0xFF800000> : vector<32xf32>
    %79 = vector.multi_reduction <maximumf>, %78, %cst_27 [1] : vector<32x32xf32> to vector<32xf32>
    %80 = vector.shape_cast %79 : vector<32xf32> to vector<32x1xf32>
    %81 = vector.broadcast %80 : vector<32x1xf32> to vector<32x32xf32>
    %82 = arith.subf %78, %81 : vector<32x32xf32>
    %83 = math.exp %82 : vector<32x32xf32>
    %cst_28 = arith.constant dense<0.000000e+00> : vector<32xf32>
    %84 = vector.multi_reduction <add>, %83, %cst_28 [1] : vector<32x32xf32> to vector<32xf32>
    %85 = vector.shape_cast %84 : vector<32xf32> to vector<32x1xf32>
    %86 = tpu.reciprocal %85 {approx = true} : vector<32x1xf32> -> vector<32x1xf32>
    %87 = vector.broadcast %86 : vector<32x1xf32> to vector<32x32xf32>
    %88 = arith.mulf %83, %87 : vector<32x32xf32>
    %cst_29 = arith.constant dense<0.000000e+00> : vector<32x128xf32>
    %89 = tpu.matmul %88, %76, %cst_29 {dimension_numbers = #tpu.dot_dimension_numbers<[1], [0], [0], [1], [0, 0, 1, 1], [], []>} : vector<32x32xf32>, vector<32x128xf32>, vector<32x128xf32> -> vector<32x128xf32>
    %90 = arith.truncf %89 : vector<32x128xf32> to vector<32x128xbf16>
    %91 = vector.extract_strided_slice %12 {offsets = [384, 0], sizes = [128, 384], strides = [1, 1]} : vector<512x384xbf16> to vector<128x384xbf16>
    %cst_30 = arith.constant dense<0.000000e+00> : vector<32x384xf32>
    %92 = tpu.matmul %90, %91, %cst_30 {dimension_numbers = #tpu.dot_dimension_numbers<[1], [0], [0], [1], [0, 0, 1, 1], [], []>} : vector<32x128xbf16>, vector<128x384xbf16>, vector<32x384xf32> -> vector<32x384xf32>
    %93 = arith.addf %73, %92 : vector<32x384xf32>
    %94 = vector.shape_cast %11 : vector<384xf32> to vector<1x384xf32>
    %95 = vector.broadcast %94 : vector<1x384xf32> to vector<32x384xf32>
    %96 = arith.addf %93, %95 : vector<32x384xf32>
    %c0_31 = arith.constant 0 : index
    %c0_32 = arith.constant 0 : index
    %c0_33 = arith.constant 0 : index
    %97 = vector.load %arg5[%c0_31, %c0_32, %c0_33] : memref<2x32x384xf32, #tpu.memory_space<vmem>>, vector<1x32x384xf32>
    %98 = vector.shape_cast %97 : vector<1x32x384xf32> to vector<32x384xf32>
    %99 = vector.shape_cast %96 : vector<32x384xf32> to vector<1x32x384xf32>
    tpu.vector_store %arg5[%c0_31, %c0_32, %c0_33], %99 {strides = array<i32>} : memref<2x32x384xf32, #tpu.memory_space<vmem>>, vector<1x32x384xf32>,
    %cst_34 = arith.constant 0.000000e+00 : f32
    %100 = vector.broadcast %cst_34 : f32 to vector<32x384xf32>
    %101 = vector.extract_strided_slice %3 {offsets = [32, 0], sizes = [32, 128], strides = [1, 1]} : vector<64x1536xf32> to vector<32x128xf32>
    %102 = vector.extract_strided_slice %3 {offsets = [32, 512], sizes = [32, 128], strides = [1, 1]} : vector<64x1536xf32> to vector<32x128xf32>
    %103 = vector.extract_strided_slice %3 {offsets = [32, 1024], sizes = [32, 128], strides = [1, 1]} : vector<64x1536xf32> to vector<32x128xf32>
    %cst_35 = arith.constant dense<0.000000e+00> : vector<32x32xf32>
    %104 = tpu.matmul %101, %102, %cst_35 {dimension_numbers = #tpu.dot_dimension_numbers<[1], [1], [0], [0], [0, 0, 1, 0], [], []>} : vector<32x128xf32>, vector<32x128xf32>, vector<32x32xf32> -> vector<32x32xf32>
    %105 = arith.addf %104, %9 : vector<32x32xf32>
    %cst_36 = arith.constant dense<0xFF800000> : vector<32xf32>
    %106 = vector.multi_reduction <maximumf>, %105, %cst_36 [1] : vector<32x32xf32> to vector<32xf32>
    %107 = vector.shape_cast %106 : vector<32xf32> to vector<32x1xf32>
    %108 = vector.broadcast %107 : vector<32x1xf32> to vector<32x32xf32>
    %109 = arith.subf %105, %108 : vector<32x32xf32>
    %110 = math.exp %109 : vector<32x32xf32>
    %cst_37 = arith.constant dense<0.000000e+00> : vector<32xf32>
    %111 = vector.multi_reduction <add>, %110, %cst_37 [1] : vector<32x32xf32> to vector<32xf32>
    %112 = vector.shape_cast %111 : vector<32xf32> to vector<32x1xf32>
    %113 = tpu.reciprocal %112 {approx = true} : vector<32x1xf32> -> vector<32x1xf32>
    %114 = vector.broadcast %113 : vector<32x1xf32> to vector<32x32xf32>
    %115 = arith.mulf %110, %114 : vector<32x32xf32>
    %cst_38 = arith.constant dense<0.000000e+00> : vector<32x128xf32>
    %116 = tpu.matmul %115, %103, %cst_38 {dimension_numbers = #tpu.dot_dimension_numbers<[1], [0], [0], [1], [0, 0, 1, 1], [], []>} : vector<32x32xf32>, vector<32x128xf32>, vector<32x128xf32> -> vector<32x128xf32>
    %117 = arith.truncf %116 : vector<32x128xf32> to vector<32x128xbf16>
    %118 = vector.extract_strided_slice %12 {offsets = [0, 0], sizes = [128, 384], strides = [1, 1]} : vector<512x384xbf16> to vector<128x384xbf16>
    %cst_39 = arith.constant dense<0.000000e+00> : vector<32x384xf32>
    %119 = tpu.matmul %117, %118, %cst_39 {dimension_numbers = #tpu.dot_dimension_numbers<[1], [0], [0], [1], [0, 0, 1, 1], [], []>} : vector<32x128xbf16>, vector<128x384xbf16>, vector<32x384xf32> -> vector<32x384xf32>
    %120 = arith.addf %100, %119 : vector<32x384xf32>
    %121 = vector.extract_strided_slice %3 {offsets = [32, 128], sizes = [32, 128], strides = [1, 1]} : vector<64x1536xf32> to vector<32x128xf32>
    %122 = vector.extract_strided_slice %3 {offsets = [32, 640], sizes = [32, 128], strides = [1, 1]} : vector<64x1536xf32> to vector<32x128xf32>
    %123 = vector.extract_strided_slice %3 {offsets = [32, 1152], sizes = [32, 128], strides = [1, 1]} : vector<64x1536xf32> to vector<32x128xf32>
    %cst_40 = arith.constant dense<0.000000e+00> : vector<32x32xf32>
    %124 = tpu.matmul %121, %122, %cst_40 {dimension_numbers = #tpu.dot_dimension_numbers<[1], [1], [0], [0], [0, 0, 1, 0], [], []>} : vector<32x128xf32>, vector<32x128xf32>, vector<32x32xf32> -> vector<32x32xf32>
    %125 = arith.addf %124, %9 : vector<32x32xf32>
    %cst_41 = arith.constant dense<0xFF800000> : vector<32xf32>
    %126 = vector.multi_reduction <maximumf>, %125, %cst_41 [1] : vector<32x32xf32> to vector<32xf32>
    %127 = vector.shape_cast %126 : vector<32xf32> to vector<32x1xf32>
    %128 = vector.broadcast %127 : vector<32x1xf32> to vector<32x32xf32>
    %129 = arith.subf %125, %128 : vector<32x32xf32>
    %130 = math.exp %129 : vector<32x32xf32>
    %cst_42 = arith.constant dense<0.000000e+00> : vector<32xf32>
    %131 = vector.multi_reduction <add>, %130, %cst_42 [1] : vector<32x32xf32> to vector<32xf32>
    %132 = vector.shape_cast %131 : vector<32xf32> to vector<32x1xf32>
    %133 = tpu.reciprocal %132 {approx = true} : vector<32x1xf32> -> vector<32x1xf32>
    %134 = vector.broadcast %133 : vector<32x1xf32> to vector<32x32xf32>
    %135 = arith.mulf %130, %134 : vector<32x32xf32>
    %cst_43 = arith.constant dense<0.000000e+00> : vector<32x128xf32>
    %136 = tpu.matmul %135, %123, %cst_43 {dimension_numbers = #tpu.dot_dimension_numbers<[1], [0], [0], [1], [0, 0, 1, 1], [], []>} : vector<32x32xf32>, vector<32x128xf32>, vector<32x128xf32> -> vector<32x128xf32>
    %137 = arith.truncf %136 : vector<32x128xf32> to vector<32x128xbf16>
    %138 = vector.extract_strided_slice %12 {offsets = [128, 0], sizes = [128, 384], strides = [1, 1]} : vector<512x384xbf16> to vector<128x384xbf16>
    %cst_44 = arith.constant dense<0.000000e+00> : vector<32x384xf32>
    %139 = tpu.matmul %137, %138, %cst_44 {dimension_numbers = #tpu.dot_dimension_numbers<[1], [0], [0], [1], [0, 0, 1, 1], [], []>} : vector<32x128xbf16>, vector<128x384xbf16>, vector<32x384xf32> -> vector<32x384xf32>
    %140 = arith.addf %120, %139 : vector<32x384xf32>
    %141 = vector.extract_strided_slice %3 {offsets = [32, 256], sizes = [32, 128], strides = [1, 1]} : vector<64x1536xf32> to vector<32x128xf32>
    %142 = vector.extract_strided_slice %3 {offsets = [32, 768], sizes = [32, 128], strides = [1, 1]} : vector<64x1536xf32> to vector<32x128xf32>
    %143 = vector.extract_strided_slice %3 {offsets = [32, 1280], sizes = [32, 128], strides = [1, 1]} : vector<64x1536xf32> to vector<32x128xf32>
    %cst_45 = arith.constant dense<0.000000e+00> : vector<32x32xf32>
    %144 = tpu.matmul %141, %142, %cst_45 {dimension_numbers = #tpu.dot_dimension_numbers<[1], [1], [0], [0], [0, 0, 1, 0], [], []>} : vector<32x128xf32>, vector<32x128xf32>, vector<32x32xf32> -> vector<32x32xf32>
    %145 = arith.addf %144, %9 : vector<32x32xf32>
    %cst_46 = arith.constant dense<0xFF800000> : vector<32xf32>
    %146 = vector.multi_reduction <maximumf>, %145, %cst_46 [1] : vector<32x32xf32> to vector<32xf32>
    %147 = vector.shape_cast %146 : vector<32xf32> to vector<32x1xf32>
    %148 = vector.broadcast %147 : vector<32x1xf32> to vector<32x32xf32>
    %149 = arith.subf %145, %148 : vector<32x32xf32>
    %150 = math.exp %149 : vector<32x32xf32>
    %cst_47 = arith.constant dense<0.000000e+00> : vector<32xf32>
    %151 = vector.multi_reduction <add>, %150, %cst_47 [1] : vector<32x32xf32> to vector<32xf32>
    %152 = vector.shape_cast %151 : vector<32xf32> to vector<32x1xf32>
    %153 = tpu.reciprocal %152 {approx = true} : vector<32x1xf32> -> vector<32x1xf32>
    %154 = vector.broadcast %153 : vector<32x1xf32> to vector<32x32xf32>
    %155 = arith.mulf %150, %154 : vector<32x32xf32>
    %cst_48 = arith.constant dense<0.000000e+00> : vector<32x128xf32>
    %156 = tpu.matmul %155, %143, %cst_48 {dimension_numbers = #tpu.dot_dimension_numbers<[1], [0], [0], [1], [0, 0, 1, 1], [], []>} : vector<32x32xf32>, vector<32x128xf32>, vector<32x128xf32> -> vector<32x128xf32>
    %157 = arith.truncf %156 : vector<32x128xf32> to vector<32x128xbf16>
    %158 = vector.extract_strided_slice %12 {offsets = [256, 0], sizes = [128, 384], strides = [1, 1]} : vector<512x384xbf16> to vector<128x384xbf16>
    %cst_49 = arith.constant dense<0.000000e+00> : vector<32x384xf32>
    %159 = tpu.matmul %157, %158, %cst_49 {dimension_numbers = #tpu.dot_dimension_numbers<[1], [0], [0], [1], [0, 0, 1, 1], [], []>} : vector<32x128xbf16>, vector<128x384xbf16>, vector<32x384xf32> -> vector<32x384xf32>
    %160 = arith.addf %140, %159 : vector<32x384xf32>
    %161 = vector.extract_strided_slice %3 {offsets = [32, 384], sizes = [32, 128], strides = [1, 1]} : vector<64x1536xf32> to vector<32x128xf32>
    %162 = vector.extract_strided_slice %3 {offsets = [32, 896], sizes = [32, 128], strides = [1, 1]} : vector<64x1536xf32> to vector<32x128xf32>
    %163 = vector.extract_strided_slice %3 {offsets = [32, 1408], sizes = [32, 128], strides = [1, 1]} : vector<64x1536xf32> to vector<32x128xf32>
    %cst_50 = arith.constant dense<0.000000e+00> : vector<32x32xf32>
    %164 = tpu.matmul %161, %162, %cst_50 {dimension_numbers = #tpu.dot_dimension_numbers<[1], [1], [0], [0], [0, 0, 1, 0], [], []>} : vector<32x128xf32>, vector<32x128xf32>, vector<32x32xf32> -> vector<32x32xf32>
    %165 = arith.addf %164, %9 : vector<32x32xf32>
    %cst_51 = arith.constant dense<0xFF800000> : vector<32xf32>
    %166 = vector.multi_reduction <maximumf>, %165, %cst_51 [1] : vector<32x32xf32> to vector<32xf32>
    %167 = vector.shape_cast %166 : vector<32xf32> to vector<32x1xf32>
    %168 = vector.broadcast %167 : vector<32x1xf32> to vector<32x32xf32>
    %169 = arith.subf %165, %168 : vector<32x32xf32>
    %170 = math.exp %169 : vector<32x32xf32>
    %cst_52 = arith.constant dense<0.000000e+00> : vector<32xf32>
    %171 = vector.multi_reduction <add>, %170, %cst_52 [1] : vector<32x32xf32> to vector<32xf32>
    %172 = vector.shape_cast %171 : vector<32xf32> to vector<32x1xf32>
    %173 = tpu.reciprocal %172 {approx = true} : vector<32x1xf32> -> vector<32x1xf32>
    %174 = vector.broadcast %173 : vector<32x1xf32> to vector<32x32xf32>
    %175 = arith.mulf %170, %174 : vector<32x32xf32>
    %cst_53 = arith.constant dense<0.000000e+00> : vector<32x128xf32>
    %176 = tpu.matmul %175, %163, %cst_53 {dimension_numbers = #tpu.dot_dimension_numbers<[1], [0], [0], [1], [0, 0, 1, 1], [], []>} : vector<32x32xf32>, vector<32x128xf32>, vector<32x128xf32> -> vector<32x128xf32>
    %177 = arith.truncf %176 : vector<32x128xf32> to vector<32x128xbf16>
    %178 = vector.extract_strided_slice %12 {offsets = [384, 0], sizes = [128, 384], strides = [1, 1]} : vector<512x384xbf16> to vector<128x384xbf16>
    %cst_54 = arith.constant dense<0.000000e+00> : vector<32x384xf32>
    %179 = tpu.matmul %177, %178, %cst_54 {dimension_numbers = #tpu.dot_dimension_numbers<[1], [0], [0], [1], [0, 0, 1, 1], [], []>} : vector<32x128xbf16>, vector<128x384xbf16>, vector<32x384xf32> -> vector<32x384xf32>
    %180 = arith.addf %160, %179 : vector<32x384xf32>
    %181 = vector.shape_cast %11 : vector<384xf32> to vector<1x384xf32>
    %182 = vector.broadcast %181 : vector<1x384xf32> to vector<32x384xf32>
    %183 = arith.addf %180, %182 : vector<32x384xf32>
    %c1 = arith.constant 1 : index
    %c0_55 = arith.constant 0 : index
    %c0_56 = arith.constant 0 : index
    %184 = vector.load %arg5[%c1, %c0_55, %c0_56] : memref<2x32x384xf32, #tpu.memory_space<vmem>>, vector<1x32x384xf32>
    %185 = vector.shape_cast %184 : vector<1x32x384xf32> to vector<32x384xf32>
    %186 = vector.shape_cast %183 : vector<32x384xf32> to vector<1x32x384xf32>
    tpu.vector_store %arg5[%c1, %c0_55, %c0_56], %186 {strides = array<i32>} : memref<2x32x384xf32, #tpu.memory_space<vmem>>, vector<1x32x384xf32>,
    return
  }
  func.func @transform_0(%arg0: i32) -> (i32, i32, i32) {
    %c0_i32 = arith.constant 0 : i32
    %c0_i32_0 = arith.constant 0 : i32
    %c0_i32_1 = arith.constant 0 : i32
    return %arg0, %c0_i32, %c0_i32_0 : i32, i32, i32
  }
  func.func @transform_1(%arg0: i32) -> (i32, i32) {
    %c0_i32 = arith.constant 0 : i32
    %c0_i32_0 = arith.constant 0 : i32
    %c0_i32_1 = arith.constant 0 : i32
    return %c0_i32, %c0_i32_0 : i32, i32
  }
  func.func @transform_2(%arg0: i32) -> (i32, i32) {
    %c0_i32 = arith.constant 0 : i32
    %c0_i32_0 = arith.constant 0 : i32
    %c0_i32_1 = arith.constant 0 : i32
    return %c0_i32, %c0_i32_0 : i32, i32
  }
  func.func @transform_3(%arg0: i32) -> (i32, i32) {
    %c0_i32 = arith.constant 0 : i32
    %c0_i32_0 = arith.constant 0 : i32
    %c0_i32_1 = arith.constant 0 : i32
    return %c0_i32, %c0_i32_0 : i32, i32
  }
  func.func @transform_4(%arg0: i32) -> (i32, i32, i32) {
    %c0_i32 = arith.constant 0 : i32
    %c0_i32_0 = arith.constant 0 : i32
    %c0_i32_1 = arith.constant 0 : i32
    return %arg0, %c0_i32, %c0_i32_0 : i32, i32, i32
  }
}

</mosaic_0001>

<llo_original>
// kernel: tpu_custom_call.1
$region0: #{tpu_custom_call.1}
  #allocation0 [shape = 'u32[]', space=smem, size = 0x4, offset = 0x4, fixed_abs, tag = 'smem constant byte address 0x4 - core index']
  #allocation1 [shape = 'u32[144,128]{1,0:T(1,128)}', space=vmem, size = 0x12000, scoped, tag = 'internal scratch']
  %s0 = inlined_call_operand.hbm [shape: bf16[2,32,384], index: 0, kind: input, shape index: {}]
  %s1 = inlined_call_operand.hbm [shape: bf16[384,1536], index: 1, kind: input, shape index: {}]
  %s2 = inlined_call_operand.hbm [shape: bf16[512,384], index: 2, kind: input, shape index: {}]
  %s3 = inlined_call_operand.hbm [shape: f32[1,384], index: 3, kind: input, shape index: {}]
  %s4 = inlined_call_operand.hbm [shape: f32[2,32,384], index: 4, kind: output, shape index: {}]
  %s5 = sld [smem:[#allocation0]]
  $region42: #{tpu_custom_call.1} parent=0
    _
  %s7 = ssub.s32 1, %s5
  %s8 = scalar_select 0, %s7, %s5
  $region1: #{tpu_custom_call.1} parent=0
    #allocation2 [shape = 'u8[49152]{0}', space=vmem, size = 0xc000, scoped, tag = 'input window, operand 0, single buffered']
    #allocation3 [shape = 's32[1]{0}', space=sflag, size = 0x4, scoped, tag = 'scoped memory for tpu_custom_call.1']
    #allocation4 [shape = 's32[1]{0}', space=sflag, size = 0x4, scoped, tag = 'scoped memory for tpu_custom_call.1']
    #allocation5 [shape = 'u8[1179648]{0}', space=vmem, size = 0x120000, scoped, tag = 'input window, operand 1, single buffered']
    #allocation6 [shape = 's32[1]{0}', space=sflag, size = 0x4, scoped, tag = 'scoped memory for tpu_custom_call.1']
    #allocation7 [shape = 'u8[393216]{0}', space=vmem, size = 0x60000, scoped, tag = 'input window, operand 2, single buffered']
    #allocation8 [shape = 'u8[1536]{0}', space=vmem, size = 0x800, scoped, tag = 'input window, operand 3, single buffered']
    #allocation9 [shape = 's32[1]{0}', space=sflag, size = 0x4, scoped, tag = 'scoped memory for tpu_custom_call.1']
    #allocation10 [shape = 'u8[98304]{0}', space=vmem, size = 0x18000, scoped, tag = 'output window, operand 0, single buffered']
    %9 = vsyncpa [#allocation3], 0
    %10 = vsyncpa [#allocation6], 0
    %11 = vsyncpa [#allocation9], 0
    %12 = vsyncpa [#allocation4], 0
    // Predicated region
    $region2: #{tpu_custom_call.1} parent=1 // pred_check
      _
    $region3: #{tpu_custom_call.1} parent=1 // pred_check_branch
      %14 = sbr.rel (0) target = $region5
    $region4: #{tpu_custom_call.1} parent=1 // pred_region
      %s16 = ssub.s32 1536, 1536
      %17 = vsyncadd [#allocation3], %s16
      %s18 = sshll.u32 [#allocation2], 4
      %s19 = int_to_ptr.vmem [resolvable:$true] %s18
      %24 = dma.hbm_to_vmem [thread:$0]  %s0, 1536, %s19, [#allocation3], 192, 192, 12
    $region5: #{tpu_custom_call.1} parent=1 // pred_fallthru
      _
    // Predicated region
    $region6: #{tpu_custom_call.1} parent=1 // pred_check
      _
    $region7: #{tpu_custom_call.1} parent=1 // pred_check_branch
      %26 = sbr.rel (0) target = $region9
    $region8: #{tpu_custom_call.1} parent=1 // pred_region
      %s28 = ssub.s32 36864, 36864
      %29 = vsyncadd [#allocation6], %s28
      %s30 = sshll.u32 [#allocation5], 4
      %s31 = int_to_ptr.vmem [resolvable:$true] %s30
      %36 = dma.hbm_to_vmem [thread:$0]  %s1, 36864, %s31, [#allocation6], 768, 768, 48
    $region9: #{tpu_custom_call.1} parent=1 // pred_fallthru
      _
    // Predicated region
    $region10: #{tpu_custom_call.1} parent=1 // pred_check
      _
    $region11: #{tpu_custom_call.1} parent=1 // pred_check_branch
      %38 = sbr.rel (0) target = $region13
    $region12: #{tpu_custom_call.1} parent=1 // pred_region
      %s40 = ssub.s32 12288, 12288
      %41 = vsyncadd [#allocation6], %s40
      %s42 = sshll.u32 [#allocation7], 4
      %s43 = int_to_ptr.vmem [resolvable:$true] %s42
      %48 = dma.hbm_to_vmem [thread:$0]  %s2, 12288, %s43, [#allocation6], 192, 192, 12
    $region13: #{tpu_custom_call.1} parent=1 // pred_fallthru
      _
    // Predicated region
    $region14: #{tpu_custom_call.1} parent=1 // pred_check
      _
    $region15: #{tpu_custom_call.1} parent=1 // pred_check_branch
      %50 = sbr.rel (0) target = $region17
    $region16: #{tpu_custom_call.1} parent=1 // pred_region
      %s52 = ssub.s32 48, 48
      %53 = vsyncadd [#allocation9], %s52
      %s55 = sshll.u32 [#allocation8], 4
      %s56 = int_to_ptr.vmem [resolvable:$true] %s55
      %58 = dma.hbm_to_vmem [thread:$0]  %s3, 48, %s56, [#allocation9]
    $region17: #{tpu_custom_call.1} parent=1 // pred_fallthru
      _
    // Predicated region
    $region18: #{tpu_custom_call.1} parent=1 // pred_check
      _
    $region19: #{tpu_custom_call.1} parent=1 // pred_check_branch
      %60 = sbr.rel (0) target = $region21
    $region20: #{tpu_custom_call.1} parent=1 // pred_region
      %61 = dma.done [#allocation3], 1536
    $region21: #{tpu_custom_call.1} parent=1 // pred_fallthru
      _
    // Predicated region
    $region22: #{tpu_custom_call.1} parent=1 // pred_check
      _
    $region23: #{tpu_custom_call.1} parent=1 // pred_check_branch
      %63 = sbr.rel (0) target = $region25
    $region24: #{tpu_custom_call.1} parent=1 // pred_region
      %64 = dma.done [#allocation6], 36864
    $region25: #{tpu_custom_call.1} parent=1 // pred_fallthru
      _
    // Predicated region
    $region26: #{tpu_custom_call.1} parent=1 // pred_check
      _
    $region27: #{tpu_custom_call.1} parent=1 // pred_check_branch
      %66 = sbr.rel (0) target = $region29
    $region28: #{tpu_custom_call.1} parent=1 // pred_region
      %67 = dma.done [#allocation6], 12288
    $region29: #{tpu_custom_call.1} parent=1 // pred_fallthru
      _
    // Predicated region
    $region30: #{tpu_custom_call.1} parent=1 // pred_check
      _
    $region31: #{tpu_custom_call.1} parent=1 // pred_check_branch
      %69 = sbr.rel (0) target = $region33
    $region32: #{tpu_custom_call.1} parent=1 // pred_region
      %70 = dma.done [#allocation9], 48
    $region33: #{tpu_custom_call.1} parent=1 // pred_fallthru
      _
    %v72 = vld [vmem:[#allocation2] sm:$0xff]
    %v73 = vld [vmem:[#allocation2 + $0x8] sm:$0xf]
    %v74 = vld [vmem:[#allocation2 + $0xc] sm:$0xff]
    %v75 = vld [vmem:[#allocation2 + $0x14] sm:$0xf]
    %v76 = vld [vmem:[#allocation2 + $0x18] sm:$0xff]
    %v77 = vld [vmem:[#allocation2 + $0x20] sm:$0xf]
    %v78 = vld [vmem:[#allocation2 + $0x24] sm:$0xff]
    %v79 = vld [vmem:[#allocation2 + $0x2c] sm:$0xf]
    %v80 = vld [vmem:[#allocation2 + $0x30] sm:$0xff]
    %v81 = vld [vmem:[#allocation2 + $0x38] sm:$0xf]
    %v82 = vld [vmem:[#allocation2 + $0x3c] sm:$0xff]
    %v83 = vld [vmem:[#allocation2 + $0x44] sm:$0xf]
    %v84 = vld [vmem:[#allocation2 + $0x48] sm:$0xff]
    %v85 = vld [vmem:[#allocation2 + $0x50] sm:$0xf]
    %v86 = vld [vmem:[#allocation2 + $0x54] sm:$0xff]
    %v87 = vld [vmem:[#allocation2 + $0x5c] sm:$0xf]
    %v88 = vld [vmem:[#allocation5] sm:$0xff]
    %v89 = vld [vmem:[#allocation5 + $0x8] sm:$0xff]
    %v90 = vld [vmem:[#allocation5 + $0x10] sm:$0xff]
    %v91 = vld [vmem:[#allocation5 + $0x18] sm:$0xff]
    %v92 = vld [vmem:[#allocation5 + $0x20] sm:$0xff]
    %v93 = vld [vmem:[#allocation5 + $0x28] sm:$0xff]
    %v94 = vld [vmem:[#allocation5 + $0x30] sm:$0xff]
    %v95 = vld [vmem:[#allocation5 + $0x38] sm:$0xff]
    %v96 = vld [vmem:[#allocation5 + $0x40] sm:$0xff]
    %v97 = vld [vmem:[#allocation5 + $0x48] sm:$0xff]
    %v98 = vld [vmem:[#allocation5 + $0x50] sm:$0xff]
    %v99 = vld [vmem:[#allocation5 + $0x58] sm:$0xff]
    %v100 = vld [vmem:[#allocation5 + $0x60] sm:$0xff]
    %v101 = vld [vmem:[#allocation5 + $0x68] sm:$0xff]
    %v102 = vld [vmem:[#allocation5 + $0x70] sm:$0xff]
    %v103 = vld [vmem:[#allocation5 + $0x78] sm:$0xff]
    %v104 = vld [vmem:[#allocation5 + $0x80] sm:$0xff]
    %v105 = vld [vmem:[#allocation5 + $0x88] sm:$0xff]
    %v106 = vld [vmem:[#allocation5 + $0x90] sm:$0xff]
    %v107 = vld [vmem:[#allocation5 + $0x98] sm:$0xff]
    %v108 = vld [vmem:[#allocation5 + $0xa0] sm:$0xff]
    %v109 = vld [vmem:[#allocation5 + $0xa8] sm:$0xff]
    %v110 = vld [vmem:[#allocation5 + $0xb0] sm:$0xff]
    %v111 = vld [vmem:[#allocation5 + $0xb8] sm:$0xff]
    %v112 = vld [vmem:[#allocation5 + $0xc0] sm:$0xff]
    %v113 = vld [vmem:[#allocation5 + $0xc8] sm:$0xff]
    %v114 = vld [vmem:[#allocation5 + $0xd0] sm:$0xff]
    %v115 = vld [vmem:[#allocation5 + $0xd8] sm:$0xff]
    %v116 = vld [vmem:[#allocation5 + $0xe0] sm:$0xff]
    %v117 = vld [vmem:[#allocation5 + $0xe8] sm:$0xff]
    %v118 = vld [vmem:[#allocation5 + $0xf0] sm:$0xff]
    %v119 = vld [vmem:[#allocation5 + $0xf8] sm:$0xff]
    %v120 = vld [vmem:[#allocation5 + $0x100] sm:$0xff]
    %v121 = vld [vmem:[#allocation5 + $0x108] sm:$0xff]
    %v122 = vld [vmem:[#allocation5 + $0x110] sm:$0xff]
    %v123 = vld [vmem:[#allocation5 + $0x118] sm:$0xff]
    %v124 = vld [vmem:[#allocation5 + $0x120] sm:$0xff]
    %v125 = vld [vmem:[#allocation5 + $0x128] sm:$0xff]
    %v126 = vld [vmem:[#allocation5 + $0x130] sm:$0xff]
    %v127 = vld [vmem:[#allocation5 + $0x138] sm:$0xff]
    %v128 = vld [vmem:[#allocation5 + $0x140] sm:$0xff]
    %v129 = vld [vmem:[#allocation5 + $0x148] sm:$0xff]
    %v130 = vld [vmem:[#allocation5 + $0x150] sm:$0xff]
    %v131 = vld [vmem:[#allocation5 + $0x158] sm:$0xff]
    %v132 = vld [vmem:[#allocation5 + $0x160] sm:$0xff]
    %v133 = vld [vmem:[#allocation5 + $0x168] sm:$0xff]
    %v134 = vld [vmem:[#allocation5 + $0x170] sm:$0xff]
    %v135 = vld [vmem:[#allocation5 + $0x178] sm:$0xff]
    %v136 = vld [vmem:[#allocation5 + $0x180] sm:$0xff]
    %v137 = vld [vmem:[#allocation5 + $0x188] sm:$0xff]
    %v138 = vld [vmem:[#allocation5 + $0x190] sm:$0xff]
    %v139 = vld [vmem:[#allocation5 + $0x198] sm:$0xff]
    %v140 = vld [vmem:[#allocation5 + $0x1a0] sm:$0xff]
    %v141 = vld [vmem:[#allocation5 + $0x1a8] sm:$0xff]
    %v142 = vld [vmem:[#allocation5 + $0x1b0] sm:$0xff]
    %v143 = vld [vmem:[#allocation5 + $0x1b8] sm:$0xff]
    %v144 = vld [vmem:[#allocation5 + $0x1c0] sm:$0xff]
    %v145 = vld [vmem:[#allocation5 + $0x1c8] sm:$0xff]
    %v146 = vld [vmem:[#allocation5 + $0x1d0] sm:$0xff]
    %v147 = vld [vmem:[#allocation5 + $0x1d8] sm:$0xff]
    %v148 = vld [vmem:[#allocation5 + $0x1e0] sm:$0xff]
    %v149 = vld [vmem:[#allocation5 + $0x1e8] sm:$0xff]
    %v150 = vld [vmem:[#allocation5 + $0x1f0] sm:$0xff]
    %v151 = vld [vmem:[#allocation5 + $0x1f8] sm:$0xff]
    %v152 = vld [vmem:[#allocation5 + $0x200] sm:$0xff]
    %v153 = vld [vmem:[#allocation5 + $0x208] sm:$0xff]
    %v154 = vld [vmem:[#allocation5 + $0x210] sm:$0xff]
    %v155 = vld [vmem:[#allocation5 + $0x218] sm:$0xff]
    %v156 = vld [vmem:[#allocation5 + $0x220] sm:$0xff]
    %v157 = vld [vmem:[#allocation5 + $0x228] sm:$0xff]
    %v158 = vld [vmem:[#allocation5 + $0x230] sm:$0xff]
    %v159 = vld [vmem:[#allocation5 + $0x238] sm:$0xff]
    %v160 = vld [vmem:[#allocation5 + $0x240] sm:$0xff]
    %v161 = vld [vmem:[#allocation5 + $0x248] sm:$0xff]
    %v162 = vld [vmem:[#allocation5 + $0x250] sm:$0xff]
    %v163 = vld [vmem:[#allocation5 + $0x258] sm:$0xff]
    %v164 = vld [vmem:[#allocation5 + $0x260] sm:$0xff]
    %v165 = vld [vmem:[#allocation5 + $0x268] sm:$0xff]
    %v166 = vld [vmem:[#allocation5 + $0x270] sm:$0xff]
    %v167 = vld [vmem:[#allocation5 + $0x278] sm:$0xff]
    %v168 = vld [vmem:[#allocation5 + $0x280] sm:$0xff]
    %v169 = vld [vmem:[#allocation5 + $0x288] sm:$0xff]
    %v170 = vld [vmem:[#allocation5 + $0x290] sm:$0xff]
    %v171 = vld [vmem:[#allocation5 + $0x298] sm:$0xff]
    %v172 = vld [vmem:[#allocation5 + $0x2a0] sm:$0xff]
    %v173 = vld [vmem:[#allocation5 + $0x2a8] sm:$0xff]
    %v174 = vld [vmem:[#allocation5 + $0x2b0] sm:$0xff]
    %v175 = vld [vmem:[#allocation5 + $0x2b8] sm:$0xff]
    %v176 = vld [vmem:[#allocation5 + $0x2c0] sm:$0xff]
    %v177 = vld [vmem:[#allocation5 + $0x2c8] sm:$0xff]
    %v178 = vld [vmem:[#allocation5 + $0x2d0] sm:$0xff]
    %v179 = vld [vmem:[#allocation5 + $0x2d8] sm:$0xff]
    %v180 = vld [vmem:[#allocation5 + $0x2e0] sm:$0xff]
    %v181 = vld [vmem:[#allocation5 + $0x2e8] sm:$0xff]
    %v182 = vld [vmem:[#allocation5 + $0x2f0] sm:$0xff]
    %v183 = vld [vmem:[#allocation5 + $0x2f8] sm:$0xff]
    %v184 = vld [vmem:[#allocation5 + $0x300] sm:$0xff]
    %v185 = vld [vmem:[#allocation5 + $0x308] sm:$0xff]
    %v186 = vld [vmem:[#allocation5 + $0x310] sm:$0xff]
    %v187 = vld [vmem:[#allocation5 + $0x318] sm:$0xff]
    %v188 = vld [vmem:[#allocation5 + $0x320] sm:$0xff]
    %v189 = vld [vmem:[#allocation5 + $0x328] sm:$0xff]
    %v190 = vld [vmem:[#allocation5 + $0x330] sm:$0xff]
    %v191 = vld [vmem:[#allocation5 + $0x338] sm:$0xff]
    %v192 = vld [vmem:[#allocation5 + $0x340] sm:$0xff]
    %v193 = vld [vmem:[#allocation5 + $0x348] sm:$0xff]
    %v194 = vld [vmem:[#allocation5 + $0x350] sm:$0xff]
    %v195 = vld [vmem:[#allocation5 + $0x358] sm:$0xff]
    %v196 = vld [vmem:[#allocation5 + $0x360] sm:$0xff]
    %v197 = vld [vmem:[#allocation5 + $0x368] sm:$0xff]
    %v198 = vld [vmem:[#allocation5 + $0x370] sm:$0xff]
    %v199 = vld [vmem:[#allocation5 + $0x378] sm:$0xff]
    %v200 = vld [vmem:[#allocation5 + $0x380] sm:$0xff]
    %v201 = vld [vmem:[#allocation5 + $0x388] sm:$0xff]
    %v202 = vld [vmem:[#allocation5 + $0x390] sm:$0xff]
    %v203 = vld [vmem:[#allocation5 + $0x398] sm:$0xff]
    %v204 = vld [vmem:[#allocation5 + $0x3a0] sm:$0xff]
    %v205 = vld [vmem:[#allocation5 + $0x3a8] sm:$0xff]
    %v206 = vld [vmem:[#allocation5 + $0x3b0] sm:$0xff]
    %v207 = vld [vmem:[#allocation5 + $0x3b8] sm:$0xff]
    %v208 = vld [vmem:[#allocation5 + $0x3c0] sm:$0xff]
    %v209 = vld [vmem:[#allocation5 + $0x3c8] sm:$0xff]
    %v210 = vld [vmem:[#allocation5 + $0x3d0] sm:$0xff]
    %v211 = vld [vmem:[#allocation5 + $0x3d8] sm:$0xff]
    %v212 = vld [vmem:[#allocation5 + $0x3e0] sm:$0xff]
    %v213 = vld [vmem:[#allocation5 + $0x3e8] sm:$0xff]
    %v214 = vld [vmem:[#allocation5 + $0x3f0] sm:$0xff]
    %v215 = vld [vmem:[#allocation5 + $0x3f8] sm:$0xff]
    %v216 = vld [vmem:[#allocation5 + $0x400] sm:$0xff]
    %v217 = vld [vmem:[#allocation5 + $0x408] sm:$0xff]
    %v218 = vld [vmem:[#allocation5 + $0x410] sm:$0xff]
    %v219 = vld [vmem:[#allocation5 + $0x418] sm:$0xff]
    %v220 = vld [vmem:[#allocation5 + $0x420] sm:$0xff]
    %v221 = vld [vmem:[#allocation5 + $0x428] sm:$0xff]
    %v222 = vld [vmem:[#allocation5 + $0x430] sm:$0xff]
    %v223 = vld [vmem:[#allocation5 + $0x438] sm:$0xff]
    %v224 = vld [vmem:[#allocation5 + $0x440] sm:$0xff]
    %v225 = vld [vmem:[#allocation5 + $0x448] sm:$0xff]
    %v226 = vld [vmem:[#allocation5 + $0x450] sm:$0xff]
    %v227 = vld [vmem:[#allocation5 + $0x458] sm:$0xff]
    %v228 = vld [vmem:[#allocation5 + $0x460] sm:$0xff]
    %v229 = vld [vmem:[#allocation5 + $0x468] sm:$0xff]
    %v230 = vld [vmem:[#allocation5 + $0x470] sm:$0xff]
    %v231 = vld [vmem:[#allocation5 + $0x478] sm:$0xff]
    %v232 = vld [vmem:[#allocation5 + $0x480] sm:$0xff]
    %v233 = vld [vmem:[#allocation5 + $0x488] sm:$0xff]
    %v234 = vld [vmem:[#allocation5 + $0x490] sm:$0xff]
    %v235 = vld [vmem:[#allocation5 + $0x498] sm:$0xff]
    %v236 = vld [vmem:[#allocation5 + $0x4a0] sm:$0xff]
    %v237 = vld [vmem:[#allocation5 + $0x4a8] sm:$0xff]
    %v238 = vld [vmem:[#allocation5 + $0x4b0] sm:$0xff]
    %v239 = vld [vmem:[#allocation5 + $0x4b8] sm:$0xff]
    %v240 = vld [vmem:[#allocation5 + $0x4c0] sm:$0xff]
    %v241 = vld [vmem:[#allocation5 + $0x4c8] sm:$0xff]
    %v242 = vld [vmem:[#allocation5 + $0x4d0] sm:$0xff]
    %v243 = vld [vmem:[#allocation5 + $0x4d8] sm:$0xff]
    %v244 = vld [vmem:[#allocation5 + $0x4e0] sm:$0xff]
    %v245 = vld [vmem:[#allocation5 + $0x4e8] sm:$0xff]
    %v246 = vld [vmem:[#allocation5 + $0x4f0] sm:$0xff]
    %v247 = vld [vmem:[#allocation5 + $0x4f8] sm:$0xff]
    %v248 = vld [vmem:[#allocation5 + $0x500] sm:$0xff]
    %v249 = vld [vmem:[#allocation5 + $0x508] sm:$0xff]
    %v250 = vld [vmem:[#allocation5 + $0x510] sm:$0xff]
    %v251 = vld [vmem:[#allocation5 + $0x518] sm:$0xff]
    %v252 = vld [vmem:[#allocation5 + $0x520] sm:$0xff]
    %v253 = vld [vmem:[#allocation5 + $0x528] sm:$0xff]
    %v254 = vld [vmem:[#allocation5 + $0x530] sm:$0xff]
    %v255 = vld [vmem:[#allocation5 + $0x538] sm:$0xff]
    %v256 = vld [vmem:[#allocation5 + $0x540] sm:$0xff]
    %v257 = vld [vmem:[#allocation5 + $0x548] sm:$0xff]
    %v258 = vld [vmem:[#allocation5 + $0x550] sm:$0xff]
    %v259 = vld [vmem:[#allocation5 + $0x558] sm:$0xff]
    %v260 = vld [vmem:[#allocation5 + $0x560] sm:$0xff]
    %v261 = vld [vmem:[#allocation5 + $0x568] sm:$0xff]
    %v262 = vld [vmem:[#allocation5 + $0x570] sm:$0xff]
    %v263 = vld [vmem:[#allocation5 + $0x578] sm:$0xff]
    %v264 = vld [vmem:[#allocation5 + $0x580] sm:$0xff]
    %v265 = vld [vmem:[#allocation5 + $0x588] sm:$0xff]
    %v266 = vld [vmem:[#allocation5 + $0x590] sm:$0xff]
    %v267 = vld [vmem:[#allocation5 + $0x598] sm:$0xff]
    %v268 = vld [vmem:[#allocation5 + $0x5a0] sm:$0xff]
    %v269 = vld [vmem:[#allocation5 + $0x5a8] sm:$0xff]
    %v270 = vld [vmem:[#allocation5 + $0x5b0] sm:$0xff]
    %v271 = vld [vmem:[#allocation5 + $0x5b8] sm:$0xff]
    %v272 = vld [vmem:[#allocation5 + $0x5c0] sm:$0xff]
    %v273 = vld [vmem:[#allocation5 + $0x5c8] sm:$0xff]
    %v274 = vld [vmem:[#allocation5 + $0x5d0] sm:$0xff]
    %v275 = vld [vmem:[#allocation5 + $0x5d8] sm:$0xff]
    %v276 = vld [vmem:[#allocation5 + $0x5e0] sm:$0xff]
    %v277 = vld [vmem:[#allocation5 + $0x5e8] sm:$0xff]
    %v278 = vld [vmem:[#allocation5 + $0x5f0] sm:$0xff]
    %v279 = vld [vmem:[#allocation5 + $0x5f8] sm:$0xff]
    %v280 = vld [vmem:[#allocation5 + $0x600] sm:$0xff]
    %v281 = vld [vmem:[#allocation5 + $0x608] sm:$0xff]
    %v282 = vld [vmem:[#allocation5 + $0x610] sm:$0xff]
    %v283 = vld [vmem:[#allocation5 + $0x618] sm:$0xff]
    %v284 = vld [vmem:[#allocation5 + $0x620] sm:$0xff]
    %v285 = vld [vmem:[#allocation5 + $0x628] sm:$0xff]
    %v286 = vld [vmem:[#allocation5 + $0x630] sm:$0xff]
    %v287 = vld [vmem:[#allocation5 + $0x638] sm:$0xff]
    %v288 = vld [vmem:[#allocation5 + $0x640] sm:$0xff]
    %v289 = vld [vmem:[#allocation5 + $0x648] sm:$0xff]
    %v290 = vld [vmem:[#allocation5 + $0x650] sm:$0xff]
    %v291 = vld [vmem:[#allocation5 + $0x658] sm:$0xff]
    %v292 = vld [vmem:[#allocation5 + $0x660] sm:$0xff]
    %v293 = vld [vmem:[#allocation5 + $0x668] sm:$0xff]
    %v294 = vld [vmem:[#allocation5 + $0x670] sm:$0xff]
    %v295 = vld [vmem:[#allocation5 + $0x678] sm:$0xff]
    %v296 = vld [vmem:[#allocation5 + $0x680] sm:$0xff]
    %v297 = vld [vmem:[#allocation5 + $0x688] sm:$0xff]
    %v298 = vld [vmem:[#allocation5 + $0x690] sm:$0xff]
    %v299 = vld [vmem:[#allocation5 + $0x698] sm:$0xff]
    %v300 = vld [vmem:[#allocation5 + $0x6a0] sm:$0xff]
    %v301 = vld [vmem:[#allocation5 + $0x6a8] sm:$0xff]
    %v302 = vld [vmem:[#allocation5 + $0x6b0] sm:$0xff]
    %v303 = vld [vmem:[#allocation5 + $0x6b8] sm:$0xff]
    %v304 = vld [vmem:[#allocation5 + $0x6c0] sm:$0xff]
    %v305 = vld [vmem:[#allocation5 + $0x6c8] sm:$0xff]
    %v306 = vld [vmem:[#allocation5 + $0x6d0] sm:$0xff]
    %v307 = vld [vmem:[#allocation5 + $0x6d8] sm:$0xff]
    %v308 = vld [vmem:[#allocation5 + $0x6e0] sm:$0xff]
    %v309 = vld [vmem:[#allocation5 + $0x6e8] sm:$0xff]
    %v310 = vld [vmem:[#allocation5 + $0x6f0] sm:$0xff]
    %v311 = vld [vmem:[#allocation5 + $0x6f8] sm:$0xff]
    %v312 = vld [vmem:[#allocation5 + $0x700] sm:$0xff]
    %v313 = vld [vmem:[#allocation5 + $0x708] sm:$0xff]
    %v314 = vld [vmem:[#allocation5 + $0x710] sm:$0xff]
    %v315 = vld [vmem:[#allocation5 + $0x718] sm:$0xff]
    %v316 = vld [vmem:[#allocation5 + $0x720] sm:$0xff]
    %v317 = vld [vmem:[#allocation5 + $0x728] sm:$0xff]
    %v318 = vld [vmem:[#allocation5 + $0x730] sm:$0xff]
    %v319 = vld [vmem:[#allocation5 + $0x738] sm:$0xff]
    %v320 = vld [vmem:[#allocation5 + $0x740] sm:$0xff]
    %v321 = vld [vmem:[#allocation5 + $0x748] sm:$0xff]
    %v322 = vld [vmem:[#allocation5 + $0x750] sm:$0xff]
    %v323 = vld [vmem:[#allocation5 + $0x758] sm:$0xff]
    %v324 = vld [vmem:[#allocation5 + $0x760] sm:$0xff]
    %v325 = vld [vmem:[#allocation5 + $0x768] sm:$0xff]
    %v326 = vld [vmem:[#allocation5 + $0x770] sm:$0xff]
    %v327 = vld [vmem:[#allocation5 + $0x778] sm:$0xff]
    %v328 = vld [vmem:[#allocation5 + $0x780] sm:$0xff]
    %v329 = vld [vmem:[#allocation5 + $0x788] sm:$0xff]
    %v330 = vld [vmem:[#allocation5 + $0x790] sm:$0xff]
    %v331 = vld [vmem:[#allocation5 + $0x798] sm:$0xff]
    %v332 = vld [vmem:[#allocation5 + $0x7a0] sm:$0xff]
    %v333 = vld [vmem:[#allocation5 + $0x7a8] sm:$0xff]
    %v334 = vld [vmem:[#allocation5 + $0x7b0] sm:$0xff]
    %v335 = vld [vmem:[#allocation5 + $0x7b8] sm:$0xff]
    %v336 = vld [vmem:[#allocation5 + $0x7c0] sm:$0xff]
    %v337 = vld [vmem:[#allocation5 + $0x7c8] sm:$0xff]
    %v338 = vld [vmem:[#allocation5 + $0x7d0] sm:$0xff]
    %v339 = vld [vmem:[#allocation5 + $0x7d8] sm:$0xff]
    %v340 = vld [vmem:[#allocation5 + $0x7e0] sm:$0xff]
    %v341 = vld [vmem:[#allocation5 + $0x7e8] sm:$0xff]
    %v342 = vld [vmem:[#allocation5 + $0x7f0] sm:$0xff]
    %v343 = vld [vmem:[#allocation5 + $0x7f8] sm:$0xff]
    %v344 = vld [vmem:[#allocation5 + $0x800] sm:$0xff]
    %v345 = vld [vmem:[#allocation5 + $0x808] sm:$0xff]
    %v346 = vld [vmem:[#allocation5 + $0x810] sm:$0xff]
    %v347 = vld [vmem:[#allocation5 + $0x818] sm:$0xff]
    %v348 = vld [vmem:[#allocation5 + $0x820] sm:$0xff]
    %v349 = vld [vmem:[#allocation5 + $0x828] sm:$0xff]
    %v350 = vld [vmem:[#allocation5 + $0x830] sm:$0xff]
    %v351 = vld [vmem:[#allocation5 + $0x838] sm:$0xff]
    %v352 = vld [vmem:[#allocation5 + $0x840] sm:$0xff]
    %v353 = vld [vmem:[#allocation5 + $0x848] sm:$0xff]
    %v354 = vld [vmem:[#allocation5 + $0x850] sm:$0xff]
    %v355 = vld [vmem:[#allocation5 + $0x858] sm:$0xff]
    %v356 = vld [vmem:[#allocation5 + $0x860] sm:$0xff]
    %v357 = vld [vmem:[#allocation5 + $0x868] sm:$0xff]
    %v358 = vld [vmem:[#allocation5 + $0x870] sm:$0xff]
    %v359 = vld [vmem:[#allocation5 + $0x878] sm:$0xff]
    %v360 = vld [vmem:[#allocation5 + $0x880] sm:$0xff]
    %v361 = vld [vmem:[#allocation5 + $0x888] sm:$0xff]
    %v362 = vld [vmem:[#allocation5 + $0x890] sm:$0xff]
    %v363 = vld [vmem:[#allocation5 + $0x898] sm:$0xff]
    %v364 = vld [vmem:[#allocation5 + $0x8a0] sm:$0xff]
    %v365 = vld [vmem:[#allocation5 + $0x8a8] sm:$0xff]
    %v366 = vld [vmem:[#allocation5 + $0x8b0] sm:$0xff]
    %v367 = vld [vmem:[#allocation5 + $0x8b8] sm:$0xff]
    %v368 = vld [vmem:[#allocation5 + $0x8c0] sm:$0xff]
    %v369 = vld [vmem:[#allocation5 + $0x8c8] sm:$0xff]
    %v370 = vld [vmem:[#allocation5 + $0x8d0] sm:$0xff]
    %v371 = vld [vmem:[#allocation5 + $0x8d8] sm:$0xff]
    %v372 = vld [vmem:[#allocation5 + $0x8e0] sm:$0xff]
    %v373 = vld [vmem:[#allocation5 + $0x8e8] sm:$0xff]
    %v374 = vld [vmem:[#allocation5 + $0x8f0] sm:$0xff]
    %v375 = vld [vmem:[#allocation5 + $0x8f8] sm:$0xff]
    %v392 = vunpack.c.l.b16 %v72
    %v393 = vunpack.c.h.b16 %v72
    %v394 = vunpack.c.l.b16 %v73
    %v395 = vunpack.c.l.b16 %v74
    %v396 = vunpack.c.h.b16 %v74
    %v397 = vunpack.c.l.b16 %v75
    %v398 = vunpack.c.l.b16 %v76
    %v399 = vunpack.c.h.b16 %v76
    %v400 = vunpack.c.l.b16 %v77
    %v401 = vunpack.c.l.b16 %v78
    %v402 = vunpack.c.h.b16 %v78
    %v403 = vunpack.c.l.b16 %v79
    %v404 = vunpack.c.l.b16 %v80
    %v405 = vunpack.c.h.b16 %v80
    %v406 = vunpack.c.l.b16 %v81
    %v407 = vunpack.c.l.b16 %v82
    %v408 = vunpack.c.h.b16 %v82
    %v409 = vunpack.c.l.b16 %v83
    %v410 = vunpack.c.l.b16 %v84
    %v411 = vunpack.c.h.b16 %v84
    %v412 = vunpack.c.l.b16 %v85
    %v413 = vunpack.c.l.b16 %v86
    %v414 = vunpack.c.h.b16 %v86
    %v415 = vunpack.c.l.b16 %v87
    %v416 = vpack.c.b16 %v395, %v392
    %v417 = vpack.c.b16 %v396, %v393
    %v418 = vpack.c.b16 %v397, %v394
    %v419 = vpack.c.b16 %v401, %v398
    %v420 = vpack.c.b16 %v402, %v399
    %v421 = vpack.c.b16 %v403, %v400
    %v422 = vpack.c.b16 %v407, %v404
    %v423 = vpack.c.b16 %v408, %v405
    %v424 = vpack.c.b16 %v409, %v406
    %v425 = vpack.c.b16 %v413, %v410
    %v426 = vpack.c.b16 %v414, %v411
    %v427 = vpack.c.b16 %v415, %v412
    %v728 = vunpack.c.l.b16 %v88
    %v729 = vunpack.c.h.b16 %v88
    %v730 = vunpack.c.l.b16 %v89
    %v731 = vunpack.c.h.b16 %v89
    %v732 = vunpack.c.l.b16 %v90
    %v733 = vunpack.c.h.b16 %v90
    %v734 = vunpack.c.l.b16 %v91
    %v735 = vunpack.c.h.b16 %v91
    %v736 = vunpack.c.l.b16 %v92
    %v737 = vunpack.c.h.b16 %v92
    %v738 = vunpack.c.l.b16 %v93
    %v739 = vunpack.c.h.b16 %v93
    %v740 = vunpack.c.l.b16 %v94
    %v741 = vunpack.c.h.b16 %v94
    %v742 = vunpack.c.l.b16 %v95
    %v743 = vunpack.c.h.b16 %v95
    %v744 = vunpack.c.l.b16 %v96
    %v745 = vunpack.c.h.b16 %v96
    %v746 = vunpack.c.l.b16 %v97
    %v747 = vunpack.c.h.b16 %v97
    %v748 = vunpack.c.l.b16 %v98
    %v749 = vunpack.c.h.b16 %v98
    %v750 = vunpack.c.l.b16 %v99
    %v751 = vunpack.c.h.b16 %v99
    %v752 = vunpack.c.l.b16 %v100
    %v753 = vunpack.c.h.b16 %v100
    %v754 = vunpack.c.l.b16 %v101
    %v755 = vunpack.c.h.b16 %v101
    %v756 = vunpack.c.l.b16 %v102
    %v757 = vunpack.c.h.b16 %v102
    %v758 = vunpack.c.l.b16 %v103
    %v759 = vunpack.c.h.b16 %v103
    %v760 = vunpack.c.l.b16 %v104
    %v761 = vunpack.c.h.b16 %v104
    %v762 = vunpack.c.l.b16 %v105
    %v763 = vunpack.c.h.b16 %v105
    %v764 = vunpack.c.l.b16 %v106
    %v765 = vunpack.c.h.b16 %v106
    %v766 = vunpack.c.l.b16 %v107
    %v767 = vunpack.c.h.b16 %v107
    %v768 = vunpack.c.l.b16 %v108
    %v769 = vunpack.c.h.b16 %v108
    %v770 = vunpack.c.l.b16 %v109
    %v771 = vunpack.c.h.b16 %v109
    %v772 = vunpack.c.l.b16 %v110
    %v773 = vunpack.c.h.b16 %v110
    %v774 = vunpack.c.l.b16 %v111
    %v775 = vunpack.c.h.b16 %v111
    %v776 = vunpack.c.l.b16 %v112
    %v777 = vunpack.c.h.b16 %v112
    %v778 = vunpack.c.l.b16 %v113
    %v779 = vunpack.c.h.b16 %v113
    %v780 = vunpack.c.l.b16 %v114
    %v781 = vunpack.c.h.b16 %v114
    %v782 = vunpack.c.l.b16 %v115
    %v783 = vunpack.c.h.b16 %v115
    %v784 = vunpack.c.l.b16 %v116
    %v785 = vunpack.c.h.b16 %v116
    %v786 = vunpack.c.l.b16 %v117
    %v787 = vunpack.c.h.b16 %v117
    %v788 = vunpack.c.l.b16 %v118
    %v789 = vunpack.c.h.b16 %v118
    %v790 = vunpack.c.l.b16 %v119
    %v791 = vunpack.c.h.b16 %v119
    %v792 = vunpack.c.l.b16 %v120
    %v793 = vunpack.c.h.b16 %v120
    %v794 = vunpack.c.l.b16 %v121
    %v795 = vunpack.c.h.b16 %v121
    %v796 = vunpack.c.l.b16 %v122
    %v797 = vunpack.c.h.b16 %v122
    %v798 = vunpack.c.l.b16 %v123
    %v799 = vunpack.c.h.b16 %v123
    %v800 = vunpack.c.l.b16 %v124
    %v801 = vunpack.c.h.b16 %v124
    %v802 = vunpack.c.l.b16 %v125
    %v803 = vunpack.c.h.b16 %v125
    %v804 = vunpack.c.l.b16 %v126
    %v805 = vunpack.c.h.b16 %v126
    %v806 = vunpack.c.l.b16 %v127
    %v807 = vunpack.c.h.b16 %v127
    %v808 = vunpack.c.l.b16 %v128
    %v809 = vunpack.c.h.b16 %v128
    %v810 = vunpack.c.l.b16 %v129
    %v811 = vunpack.c.h.b16 %v129
    %v812 = vunpack.c.l.b16 %v130
    %v813 = vunpack.c.h.b16 %v130
    %v814 = vunpack.c.l.b16 %v131
    %v815 = vunpack.c.h.b16 %v131
    %v816 = vunpack.c.l.b16 %v132
    %v817 = vunpack.c.h.b16 %v132
    %v818 = vunpack.c.l.b16 %v133
    %v819 = vunpack.c.h.b16 %v133
    %v820 = vunpack.c.l.b16 %v134
    %v821 = vunpack.c.h.b16 %v134
    %v822 = vunpack.c.l.b16 %v135
    %v823 = vunpack.c.h.b16 %v135
    %v824 = vunpack.c.l.b16 %v136
    %v825 = vunpack.c.h.b16 %v136
    %v826 = vunpack.c.l.b16 %v137
    %v827 = vunpack.c.h.b16 %v137
    %v828 = vunpack.c.l.b16 %v138
    %v829 = vunpack.c.h.b16 %v138
    %v830 = vunpack.c.l.b16 %v139
    %v831 = vunpack.c.h.b16 %v139
    %v832 = vunpack.c.l.b16 %v140
    %v833 = vunpack.c.h.b16 %v140
    %v834 = vunpack.c.l.b16 %v141
    %v835 = vunpack.c.h.b16 %v141
    %v836 = vunpack.c.l.b16 %v142
    %v837 = vunpack.c.h.b16 %v142
    %v838 = vunpack.c.l.b16 %v143
    %v839 = vunpack.c.h.b16 %v143
    %v840 = vunpack.c.l.b16 %v144
    %v841 = vunpack.c.h.b16 %v144
    %v842 = vunpack.c.l.b16 %v145
    %v843 = vunpack.c.h.b16 %v145
    %v844 = vunpack.c.l.b16 %v146
    %v845 = vunpack.c.h.b16 %v146
    %v846 = vunpack.c.l.b16 %v147
    %v847 = vunpack.c.h.b16 %v147
    %v848 = vunpack.c.l.b16 %v148
    %v849 = vunpack.c.h.b16 %v148
    %v850 = vunpack.c.l.b16 %v149
    %v851 = vunpack.c.h.b16 %v149
    %v852 = vunpack.c.l.b16 %v150
    %v853 = vunpack.c.h.b16 %v150
    %v854 = vunpack.c.l.b16 %v151
    %v855 = vunpack.c.h.b16 %v151
    %v856 = vunpack.c.l.b16 %v152
    %v857 = vunpack.c.h.b16 %v152
    %v858 = vunpack.c.l.b16 %v153
    %v859 = vunpack.c.h.b16 %v153
    %v860 = vunpack.c.l.b16 %v154
    %v861 = vunpack.c.h.b16 %v154
    %v862 = vunpack.c.l.b16 %v155
    %v863 = vunpack.c.h.b16 %v155
    %v864 = vunpack.c.l.b16 %v156
    %v865 = vunpack.c.h.b16 %v156
    %v866 = vunpack.c.l.b16 %v157
    %v867 = vunpack.c.h.b16 %v157
    %v868 = vunpack.c.l.b16 %v158
    %v869 = vunpack.c.h.b16 %v158
    %v870 = vunpack.c.l.b16 %v159
    %v871 = vunpack.c.h.b16 %v159
    %v872 = vunpack.c.l.b16 %v160
    %v873 = vunpack.c.h.b16 %v160
    %v874 = vunpack.c.l.b16 %v161
    %v875 = vunpack.c.h.b16 %v161
    %v876 = vunpack.c.l.b16 %v162
    %v877 = vunpack.c.h.b16 %v162
    %v878 = vunpack.c.l.b16 %v163
    %v879 = vunpack.c.h.b16 %v163
    %v880 = vunpack.c.l.b16 %v164
    %v881 = vunpack.c.h.b16 %v164
    %v882 = vunpack.c.l.b16 %v165
    %v883 = vunpack.c.h.b16 %v165
    %v884 = vunpack.c.l.b16 %v166
    %v885 = vunpack.c.h.b16 %v166
    %v886 = vunpack.c.l.b16 %v167
    %v887 = vunpack.c.h.b16 %v167
    %v888 = vunpack.c.l.b16 %v168
    %v889 = vunpack.c.h.b16 %v168
    %v890 = vunpack.c.l.b16 %v169
    %v891 = vunpack.c.h.b16 %v169
    %v892 = vunpack.c.l.b16 %v170
    %v893 = vunpack.c.h.b16 %v170
    %v894 = vunpack.c.l.b16 %v171
    %v895 = vunpack.c.h.b16 %v171
    %v896 = vunpack.c.l.b16 %v172
    %v897 = vunpack.c.h.b16 %v172
    %v898 = vunpack.c.l.b16 %v173
    %v899 = vunpack.c.h.b16 %v173
    %v900 = vunpack.c.l.b16 %v174
    %v901 = vunpack.c.h.b16 %v174
    %v902 = vunpack.c.l.b16 %v175
    %v903 = vunpack.c.h.b16 %v175
    %v904 = vunpack.c.l.b16 %v176
    %v905 = vunpack.c.h.b16 %v176
    %v906 = vunpack.c.l.b16 %v177
    %v907 = vunpack.c.h.b16 %v177
    %v908 = vunpack.c.l.b16 %v178
    %v909 = vunpack.c.h.b16 %v178
    %v910 = vunpack.c.l.b16 %v179
    %v911 = vunpack.c.h.b16 %v179
    %v912 = vunpack.c.l.b16 %v180
    %v913 = vunpack.c.h.b16 %v180
    %v914 = vunpack.c.l.b16 %v181
    %v915 = vunpack.c.h.b16 %v181
    %v916 = vunpack.c.l.b16 %v182
    %v917 = vunpack.c.h.b16 %v182
    %v918 = vunpack.c.l.b16 %v183
    %v919 = vunpack.c.h.b16 %v183
    %v920 = vunpack.c.l.b16 %v184
    %v921 = vunpack.c.h.b16 %v184
    %v922 = vunpack.c.l.b16 %v185
    %v923 = vunpack.c.h.b16 %v185
    %v924 = vunpack.c.l.b16 %v186
    %v925 = vunpack.c.h.b16 %v186
    %v926 = vunpack.c.l.b16 %v187
    %v927 = vunpack.c.h.b16 %v187
    %v928 = vunpack.c.l.b16 %v188
    %v929 = vunpack.c.h.b16 %v188
    %v930 = vunpack.c.l.b16 %v189
    %v931 = vunpack.c.h.b16 %v189
    %v932 = vunpack.c.l.b16 %v190
    %v933 = vunpack.c.h.b16 %v190
    %v934 = vunpack.c.l.b16 %v191
    %v935 = vunpack.c.h.b16 %v191
    %v936 = vunpack.c.l.b16 %v192
    %v937 = vunpack.c.h.b16 %v192
    %v938 = vunpack.c.l.b16 %v193
    %v939 = vunpack.c.h.b16 %v193
    %v940 = vunpack.c.l.b16 %v194
    %v941 = vunpack.c.h.b16 %v194
    %v942 = vunpack.c.l.b16 %v195
    %v943 = vunpack.c.h.b16 %v195
    %v944 = vunpack.c.l.b16 %v196
    %v945 = vunpack.c.h.b16 %v196
    %v946 = vunpack.c.l.b16 %v197
    %v947 = vunpack.c.h.b16 %v197
    %v948 = vunpack.c.l.b16 %v198
    %v949 = vunpack.c.h.b16 %v198
    %v950 = vunpack.c.l.b16 %v199
    %v951 = vunpack.c.h.b16 %v199
    %v952 = vunpack.c.l.b16 %v200
    %v953 = vunpack.c.h.b16 %v200
    %v954 = vunpack.c.l.b16 %v201
    %v955 = vunpack.c.h.b16 %v201
    %v956 = vunpack.c.l.b16 %v202
    %v957 = vunpack.c.h.b16 %v202
    %v958 = vunpack.c.l.b16 %v203
    %v959 = vunpack.c.h.b16 %v203
    %v960 = vunpack.c.l.b16 %v204
    %v961 = vunpack.c.h.b16 %v204
    %v962 = vunpack.c.l.b16 %v205
    %v963 = vunpack.c.h.b16 %v205
    %v964 = vunpack.c.l.b16 %v206
    %v965 = vunpack.c.h.b16 %v206
    %v966 = vunpack.c.l.b16 %v207
    %v967 = vunpack.c.h.b16 %v207
    %v968 = vunpack.c.l.b16 %v208
    %v969 = vunpack.c.h.b16 %v208
    %v970 = vunpack.c.l.b16 %v209
    %v971 = vunpack.c.h.b16 %v209
    %v972 = vunpack.c.l.b16 %v210
    %v973 = vunpack.c.h.b16 %v210
    %v974 = vunpack.c.l.b16 %v211
    %v975 = vunpack.c.h.b16 %v211
    %v976 = vunpack.c.l.b16 %v212
    %v977 = vunpack.c.h.b16 %v212
    %v978 = vunpack.c.l.b16 %v213
    %v979 = vunpack.c.h.b16 %v213
    %v980 = vunpack.c.l.b16 %v214
    %v981 = vunpack.c.h.b16 %v214
    %v982 = vunpack.c.l.b16 %v215
    %v983 = vunpack.c.h.b16 %v215
    %v984 = vunpack.c.l.b16 %v216
    %v985 = vunpack.c.h.b16 %v216
    %v986 = vunpack.c.l.b16 %v217
    %v987 = vunpack.c.h.b16 %v217
    %v988 = vunpack.c.l.b16 %v218
    %v989 = vunpack.c.h.b16 %v218
    %v990 = vunpack.c.l.b16 %v219
    %v991 = vunpack.c.h.b16 %v219
    %v992 = vunpack.c.l.b16 %v220
    %v993 = vunpack.c.h.b16 %v220
    %v994 = vunpack.c.l.b16 %v221
    %v995 = vunpack.c.h.b16 %v221
    %v996 = vunpack.c.l.b16 %v222
    %v997 = vunpack.c.h.b16 %v222
    %v998 = vunpack.c.l.b16 %v223
    %v999 = vunpack.c.h.b16 %v223
    %v1000 = vunpack.c.l.b16 %v224
    %v1001 = vunpack.c.h.b16 %v224
    %v1002 = vunpack.c.l.b16 %v225
    %v1003 = vunpack.c.h.b16 %v225
    %v1004 = vunpack.c.l.b16 %v226
    %v1005 = vunpack.c.h.b16 %v226
    %v1006 = vunpack.c.l.b16 %v227
    %v1007 = vunpack.c.h.b16 %v227
    %v1008 = vunpack.c.l.b16 %v228
    %v1009 = vunpack.c.h.b16 %v228
    %v1010 = vunpack.c.l.b16 %v229
    %v1011 = vunpack.c.h.b16 %v229
    %v1012 = vunpack.c.l.b16 %v230
    %v1013 = vunpack.c.h.b16 %v230
    %v1014 = vunpack.c.l.b16 %v231
    %v1015 = vunpack.c.h.b16 %v231
    %v1016 = vunpack.c.l.b16 %v232
    %v1017 = vunpack.c.h.b16 %v232
    %v1018 = vunpack.c.l.b16 %v233
    %v1019 = vunpack.c.h.b16 %v233
    %v1020 = vunpack.c.l.b16 %v234
    %v1021 = vunpack.c.h.b16 %v234
    %v1022 = vunpack.c.l.b16 %v235
    %v1023 = vunpack.c.h.b16 %v235
    %v1024 = vunpack.c.l.b16 %v236
    %v1025 = vunpack.c.h.b16 %v236
    %v1026 = vunpack.c.l.b16 %v237
    %v1027 = vunpack.c.h.b16 %v237
    %v1028 = vunpack.c.l.b16 %v238
    %v1029 = vunpack.c.h.b16 %v238
    %v1030 = vunpack.c.l.b16 %v239
    %v1031 = vunpack.c.h.b16 %v239
    %v1032 = vunpack.c.l.b16 %v240
    %v1033 = vunpack.c.h.b16 %v240
    %v1034 = vunpack.c.l.b16 %v241
    %v1035 = vunpack.c.h.b16 %v241
    %v1036 = vunpack.c.l.b16 %v242
    %v1037 = vunpack.c.h.b16 %v242
    %v1038 = vunpack.c.l.b16 %v243
    %v1039 = vunpack.c.h.b16 %v243
    %v1040 = vunpack.c.l.b16 %v244
    %v1041 = vunpack.c.h.b16 %v244
    %v1042 = vunpack.c.l.b16 %v245
    %v1043 = vunpack.c.h.b16 %v245
    %v1044 = vunpack.c.l.b16 %v246
    %v1045 = vunpack.c.h.b16 %v246
    %v1046 = vunpack.c.l.b16 %v247
    %v1047 = vunpack.c.h.b16 %v247
    %v1048 = vunpack.c.l.b16 %v248
    %v1049 = vunpack.c.h.b16 %v248
    %v1050 = vunpack.c.l.b16 %v249
    %v1051 = vunpack.c.h.b16 %v249
    %v1052 = vunpack.c.l.b16 %v250
    %v1053 = vunpack.c.h.b16 %v250
    %v1054 = vunpack.c.l.b16 %v251
    %v1055 = vunpack.c.h.b16 %v251
    %v1056 = vunpack.c.l.b16 %v252
    %v1057 = vunpack.c.h.b16 %v252
    %v1058 = vunpack.c.l.b16 %v253
    %v1059 = vunpack.c.h.b16 %v253
    %v1060 = vunpack.c.l.b16 %v254
    %v1061 = vunpack.c.h.b16 %v254
    %v1062 = vunpack.c.l.b16 %v255
    %v1063 = vunpack.c.h.b16 %v255
    %v1064 = vunpack.c.l.b16 %v256
    %v1065 = vunpack.c.h.b16 %v256
    %v1066 = vunpack.c.l.b16 %v257
    %v1067 = vunpack.c.h.b16 %v257
    %v1068 = vunpack.c.l.b16 %v258
    %v1069 = vunpack.c.h.b16 %v258
    %v1070 = vunpack.c.l.b16 %v259
    %v1071 = vunpack.c.h.b16 %v259
    %v1072 = vunpack.c.l.b16 %v260
    %v1073 = vunpack.c.h.b16 %v260
    %v1074 = vunpack.c.l.b16 %v261
    %v1075 = vunpack.c.h.b16 %v261
    %v1076 = vunpack.c.l.b16 %v262
    %v1077 = vunpack.c.h.b16 %v262
    %v1078 = vunpack.c.l.b16 %v263
    %v1079 = vunpack.c.h.b16 %v263
    %v1080 = vunpack.c.l.b16 %v264
    %v1081 = vunpack.c.h.b16 %v264
    %v1082 = vunpack.c.l.b16 %v265
    %v1083 = vunpack.c.h.b16 %v265
    %v1084 = vunpack.c.l.b16 %v266
    %v1085 = vunpack.c.h.b16 %v266
    %v1086 = vunpack.c.l.b16 %v267
    %v1087 = vunpack.c.h.b16 %v267
    %v1088 = vunpack.c.l.b16 %v268
    %v1089 = vunpack.c.h.b16 %v268
    %v1090 = vunpack.c.l.b16 %v269
    %v1091 = vunpack.c.h.b16 %v269
    %v1092 = vunpack.c.l.b16 %v270
    %v1093 = vunpack.c.h.b16 %v270
    %v1094 = vunpack.c.l.b16 %v271
    %v1095 = vunpack.c.h.b16 %v271
    %v1096 = vunpack.c.l.b16 %v272
    %v1097 = vunpack.c.h.b16 %v272
    %v1098 = vunpack.c.l.b16 %v273
    %v1099 = vunpack.c.h.b16 %v273
    %v1100 = vunpack.c.l.b16 %v274
    %v1101 = vunpack.c.h.b16 %v274
    %v1102 = vunpack.c.l.b16 %v275
    %v1103 = vunpack.c.h.b16 %v275
    %v1104 = vunpack.c.l.b16 %v276
    %v1105 = vunpack.c.h.b16 %v276
    %v1106 = vunpack.c.l.b16 %v277
    %v1107 = vunpack.c.h.b16 %v277
    %v1108 = vunpack.c.l.b16 %v278
    %v1109 = vunpack.c.h.b16 %v278
    %v1110 = vunpack.c.l.b16 %v279
    %v1111 = vunpack.c.h.b16 %v279
    %v1112 = vunpack.c.l.b16 %v280
    %v1113 = vunpack.c.h.b16 %v280
    %v1114 = vunpack.c.l.b16 %v281
    %v1115 = vunpack.c.h.b16 %v281
    %v1116 = vunpack.c.l.b16 %v282
    %v1117 = vunpack.c.h.b16 %v282
    %v1118 = vunpack.c.l.b16 %v283
    %v1119 = vunpack.c.h.b16 %v283
    %v1120 = vunpack.c.l.b16 %v284
    %v1121 = vunpack.c.h.b16 %v284
    %v1122 = vunpack.c.l.b16 %v285
    %v1123 = vunpack.c.h.b16 %v285
    %v1124 = vunpack.c.l.b16 %v286
    %v1125 = vunpack.c.h.b16 %v286
    %v1126 = vunpack.c.l.b16 %v287
    %v1127 = vunpack.c.h.b16 %v287
    %v1128 = vunpack.c.l.b16 %v288
    %v1129 = vunpack.c.h.b16 %v288
    %v1130 = vunpack.c.l.b16 %v289
    %v1131 = vunpack.c.h.b16 %v289
    %v1132 = vunpack.c.l.b16 %v290
    %v1133 = vunpack.c.h.b16 %v290
    %v1134 = vunpack.c.l.b16 %v291
    %v1135 = vunpack.c.h.b16 %v291
    %v1136 = vunpack.c.l.b16 %v292
    %v1137 = vunpack.c.h.b16 %v292
    %v1138 = vunpack.c.l.b16 %v293
    %v1139 = vunpack.c.h.b16 %v293
    %v1140 = vunpack.c.l.b16 %v294
    %v1141 = vunpack.c.h.b16 %v294
    %v1142 = vunpack.c.l.b16 %v295
    %v1143 = vunpack.c.h.b16 %v295
    %v1144 = vunpack.c.l.b16 %v296
    %v1145 = vunpack.c.h.b16 %v296
    %v1146 = vunpack.c.l.b16 %v297
    %v1147 = vunpack.c.h.b16 %v297
    %v1148 = vunpack.c.l.b16 %v298
    %v1149 = vunpack.c.h.b16 %v298
    %v1150 = vunpack.c.l.b16 %v299
    %v1151 = vunpack.c.h.b16 %v299
    %v1152 = vunpack.c.l.b16 %v300
    %v1153 = vunpack.c.h.b16 %v300
    %v1154 = vunpack.c.l.b16 %v301
    %v1155 = vunpack.c.h.b16 %v301
    %v1156 = vunpack.c.l.b16 %v302
    %v1157 = vunpack.c.h.b16 %v302
    %v1158 = vunpack.c.l.b16 %v303
    %v1159 = vunpack.c.h.b16 %v303
    %v1160 = vunpack.c.l.b16 %v304
    %v1161 = vunpack.c.h.b16 %v304
    %v1162 = vunpack.c.l.b16 %v305
    %v1163 = vunpack.c.h.b16 %v305
    %v1164 = vunpack.c.l.b16 %v306
    %v1165 = vunpack.c.h.b16 %v306
    %v1166 = vunpack.c.l.b16 %v307
    %v1167 = vunpack.c.h.b16 %v307
    %v1168 = vunpack.c.l.b16 %v308
    %v1169 = vunpack.c.h.b16 %v308
    %v1170 = vunpack.c.l.b16 %v309
    %v1171 = vunpack.c.h.b16 %v309
    %v1172 = vunpack.c.l.b16 %v310
    %v1173 = vunpack.c.h.b16 %v310
    %v1174 = vunpack.c.l.b16 %v311
    %v1175 = vunpack.c.h.b16 %v311
    %v1176 = vunpack.c.l.b16 %v312
    %v1177 = vunpack.c.h.b16 %v312
    %v1178 = vunpack.c.l.b16 %v313
    %v1179 = vunpack.c.h.b16 %v313
    %v1180 = vunpack.c.l.b16 %v314
    %v1181 = vunpack.c.h.b16 %v314
    %v1182 = vunpack.c.l.b16 %v315
    %v1183 = vunpack.c.h.b16 %v315
    %v1184 = vunpack.c.l.b16 %v316
    %v1185 = vunpack.c.h.b16 %v316
    %v1186 = vunpack.c.l.b16 %v317
    %v1187 = vunpack.c.h.b16 %v317
    %v1188 = vunpack.c.l.b16 %v318
    %v1189 = vunpack.c.h.b16 %v318
    %v1190 = vunpack.c.l.b16 %v319
    %v1191 = vunpack.c.h.b16 %v319
    %v1192 = vunpack.c.l.b16 %v320
    %v1193 = vunpack.c.h.b16 %v320
    %v1194 = vunpack.c.l.b16 %v321
    %v1195 = vunpack.c.h.b16 %v321
    %v1196 = vunpack.c.l.b16 %v322
    %v1197 = vunpack.c.h.b16 %v322
    %v1198 = vunpack.c.l.b16 %v323
    %v1199 = vunpack.c.h.b16 %v323
    %v1200 = vunpack.c.l.b16 %v324
    %v1201 = vunpack.c.h.b16 %v324
    %v1202 = vunpack.c.l.b16 %v325
    %v1203 = vunpack.c.h.b16 %v325
    %v1204 = vunpack.c.l.b16 %v326
    %v1205 = vunpack.c.h.b16 %v326
    %v1206 = vunpack.c.l.b16 %v327
    %v1207 = vunpack.c.h.b16 %v327
    %v1208 = vunpack.c.l.b16 %v328
    %v1209 = vunpack.c.h.b16 %v328
    %v1210 = vunpack.c.l.b16 %v329
    %v1211 = vunpack.c.h.b16 %v329
    %v1212 = vunpack.c.l.b16 %v330
    %v1213 = vunpack.c.h.b16 %v330
    %v1214 = vunpack.c.l.b16 %v331
    %v1215 = vunpack.c.h.b16 %v331
    %v1216 = vunpack.c.l.b16 %v332
    %v1217 = vunpack.c.h.b16 %v332
    %v1218 = vunpack.c.l.b16 %v333
    %v1219 = vunpack.c.h.b16 %v333
    %v1220 = vunpack.c.l.b16 %v334
    %v1221 = vunpack.c.h.b16 %v334
    %v1222 = vunpack.c.l.b16 %v335
    %v1223 = vunpack.c.h.b16 %v335
    %v1224 = vunpack.c.l.b16 %v336
    %v1225 = vunpack.c.h.b16 %v336
    %v1226 = vunpack.c.l.b16 %v337
    %v1227 = vunpack.c.h.b16 %v337
    %v1228 = vunpack.c.l.b16 %v338
    %v1229 = vunpack.c.h.b16 %v338
    %v1230 = vunpack.c.l.b16 %v339
    %v1231 = vunpack.c.h.b16 %v339
    %v1232 = vunpack.c.l.b16 %v340
    %v1233 = vunpack.c.h.b16 %v340
    %v1234 = vunpack.c.l.b16 %v341
    %v1235 = vunpack.c.h.b16 %v341
    %v1236 = vunpack.c.l.b16 %v342
    %v1237 = vunpack.c.h.b16 %v342
    %v1238 = vunpack.c.l.b16 %v343
    %v1239 = vunpack.c.h.b16 %v343
    %v1240 = vunpack.c.l.b16 %v344
    %v1241 = vunpack.c.h.b16 %v344
    %v1242 = vunpack.c.l.b16 %v345
    %v1243 = vunpack.c.h.b16 %v345
    %v1244 = vunpack.c.l.b16 %v346
    %v1245 = vunpack.c.h.b16 %v346
    %v1246 = vunpack.c.l.b16 %v347
    %v1247 = vunpack.c.h.b16 %v347
    %v1248 = vunpack.c.l.b16 %v348
    %v1249 = vunpack.c.h.b16 %v348
    %v1250 = vunpack.c.l.b16 %v349
    %v1251 = vunpack.c.h.b16 %v349
    %v1252 = vunpack.c.l.b16 %v350
    %v1253 = vunpack.c.h.b16 %v350
    %v1254 = vunpack.c.l.b16 %v351
    %v1255 = vunpack.c.h.b16 %v351
    %v1256 = vunpack.c.l.b16 %v352
    %v1257 = vunpack.c.h.b16 %v352
    %v1258 = vunpack.c.l.b16 %v353
    %v1259 = vunpack.c.h.b16 %v353
    %v1260 = vunpack.c.l.b16 %v354
    %v1261 = vunpack.c.h.b16 %v354
    %v1262 = vunpack.c.l.b16 %v355
    %v1263 = vunpack.c.h.b16 %v355
    %v1264 = vunpack.c.l.b16 %v356
    %v1265 = vunpack.c.h.b16 %v356
    %v1266 = vunpack.c.l.b16 %v357
    %v1267 = vunpack.c.h.b16 %v357
    %v1268 = vunpack.c.l.b16 %v358
    %v1269 = vunpack.c.h.b16 %v358
    %v1270 = vunpack.c.l.b16 %v359
    %v1271 = vunpack.c.h.b16 %v359
    %v1272 = vunpack.c.l.b16 %v360
    %v1273 = vunpack.c.h.b16 %v360
    %v1274 = vunpack.c.l.b16 %v361
    %v1275 = vunpack.c.h.b16 %v361
    %v1276 = vunpack.c.l.b16 %v362
    %v1277 = vunpack.c.h.b16 %v362
    %v1278 = vunpack.c.l.b16 %v363
    %v1279 = vunpack.c.h.b16 %v363
    %v1280 = vunpack.c.l.b16 %v364
    %v1281 = vunpack.c.h.b16 %v364
    %v1282 = vunpack.c.l.b16 %v365
    %v1283 = vunpack.c.h.b16 %v365
    %v1284 = vunpack.c.l.b16 %v366
    %v1285 = vunpack.c.h.b16 %v366
    %v1286 = vunpack.c.l.b16 %v367
    %v1287 = vunpack.c.h.b16 %v367
    %v1288 = vunpack.c.l.b16 %v368
    %v1289 = vunpack.c.h.b16 %v368
    %v1290 = vunpack.c.l.b16 %v369
    %v1291 = vunpack.c.h.b16 %v369
    %v1292 = vunpack.c.l.b16 %v370
    %v1293 = vunpack.c.h.b16 %v370
    %v1294 = vunpack.c.l.b16 %v371
    %v1295 = vunpack.c.h.b16 %v371
    %v1296 = vunpack.c.l.b16 %v372
    %v1297 = vunpack.c.h.b16 %v372
    %v1298 = vunpack.c.l.b16 %v373
    %v1299 = vunpack.c.h.b16 %v373
    %v1300 = vunpack.c.l.b16 %v374
    %v1301 = vunpack.c.h.b16 %v374
    %v1302 = vunpack.c.l.b16 %v375
    %v1303 = vunpack.c.h.b16 %v375
    %v1304 = vpack.c.b16 %v740, %v728
    %v1305 = vpack.c.b16 %v741, %v729
    %v1306 = vpack.c.b16 %v742, %v730
    %v1307 = vpack.c.b16 %v743, %v731
    %v1308 = vpack.c.b16 %v744, %v732
    %v1309 = vpack.c.b16 %v745, %v733
    %v1310 = vpack.c.b16 %v746, %v734
    %v1311 = vpack.c.b16 %v747, %v735
    %v1312 = vpack.c.b16 %v748, %v736
    %v1313 = vpack.c.b16 %v749, %v737
    %v1314 = vpack.c.b16 %v750, %v738
    %v1315 = vpack.c.b16 %v751, %v739
    %v1316 = vpack.c.b16 %v764, %v752
    %v1317 = vpack.c.b16 %v765, %v753
    %v1318 = vpack.c.b16 %v766, %v754
    %v1319 = vpack.c.b16 %v767, %v755
    %v1320 = vpack.c.b16 %v768, %v756
    %v1321 = vpack.c.b16 %v769, %v757
    %v1322 = vpack.c.b16 %v770, %v758
    %v1323 = vpack.c.b16 %v771, %v759
    %v1324 = vpack.c.b16 %v772, %v760
    %v1325 = vpack.c.b16 %v773, %v761
    %v1326 = vpack.c.b16 %v774, %v762
    %v1327 = vpack.c.b16 %v775, %v763
    %v1328 = vpack.c.b16 %v788, %v776
    %v1329 = vpack.c.b16 %v789, %v777
    %v1330 = vpack.c.b16 %v790, %v778
    %v1331 = vpack.c.b16 %v791, %v779
    %v1332 = vpack.c.b16 %v792, %v780
    %v1333 = vpack.c.b16 %v793, %v781
    %v1334 = vpack.c.b16 %v794, %v782
    %v1335 = vpack.c.b16 %v795, %v783
    %v1336 = vpack.c.b16 %v796, %v784
    %v1337 = vpack.c.b16 %v797, %v785
    %v1338 = vpack.c.b16 %v798, %v786
    %v1339 = vpack.c.b16 %v799, %v787
    %v1340 = vpack.c.b16 %v812, %v800
    %v1341 = vpack.c.b16 %v813, %v801
    %v1342 = vpack.c.b16 %v814, %v802
    %v1343 = vpack.c.b16 %v815, %v803
    %v1344 = vpack.c.b16 %v816, %v804
    %v1345 = vpack.c.b16 %v817, %v805
    %v1346 = vpack.c.b16 %v818, %v806
    %v1347 = vpack.c.b16 %v819, %v807
    %v1348 = vpack.c.b16 %v820, %v808
    %v1349 = vpack.c.b16 %v821, %v809
    %v1350 = vpack.c.b16 %v822, %v810
    %v1351 = vpack.c.b16 %v823, %v811
    %v1352 = vpack.c.b16 %v836, %v824
    %v1353 = vpack.c.b16 %v837, %v825
    %v1354 = vpack.c.b16 %v838, %v826
    %v1355 = vpack.c.b16 %v839, %v827
    %v1356 = vpack.c.b16 %v840, %v828
    %v1357 = vpack.c.b16 %v841, %v829
    %v1358 = vpack.c.b16 %v842, %v830
    %v1359 = vpack.c.b16 %v843, %v831
    %v1360 = vpack.c.b16 %v844, %v832
    %v1361 = vpack.c.b16 %v845, %v833
    %v1362 = vpack.c.b16 %v846, %v834
    %v1363 = vpack.c.b16 %v847, %v835
    %v1364 = vpack.c.b16 %v860, %v848
    %v1365 = vpack.c.b16 %v861, %v849
    %v1366 = vpack.c.b16 %v862, %v850
    %v1367 = vpack.c.b16 %v863, %v851
    %v1368 = vpack.c.b16 %v864, %v852
    %v1369 = vpack.c.b16 %v865, %v853
    %v1370 = vpack.c.b16 %v866, %v854
    %v1371 = vpack.c.b16 %v867, %v855
    %v1372 = vpack.c.b16 %v868, %v856
    %v1373 = vpack.c.b16 %v869, %v857
    %v1374 = vpack.c.b16 %v870, %v858
    %v1375 = vpack.c.b16 %v871, %v859
    %v1376 = vpack.c.b16 %v884, %v872
    %v1377 = vpack.c.b16 %v885, %v873
    %v1378 = vpack.c.b16 %v886, %v874
    %v1379 = vpack.c.b16 %v887, %v875
    %v1380 = vpack.c.b16 %v888, %v876
    %v1381 = vpack.c.b16 %v889, %v877
    %v1382 = vpack.c.b16 %v890, %v878
    %v1383 = vpack.c.b16 %v891, %v879
    %v1384 = vpack.c.b16 %v892, %v880
    %v1385 = vpack.c.b16 %v893, %v881
    %v1386 = vpack.c.b16 %v894, %v882
    %v1387 = vpack.c.b16 %v895, %v883
    %v1388 = vpack.c.b16 %v908, %v896
    %v1389 = vpack.c.b16 %v909, %v897
    %v1390 = vpack.c.b16 %v910, %v898
    %v1391 = vpack.c.b16 %v911, %v899
    %v1392 = vpack.c.b16 %v912, %v900
    %v1393 = vpack.c.b16 %v913, %v901
    %v1394 = vpack.c.b16 %v914, %v902
    %v1395 = vpack.c.b16 %v915, %v903
    %v1396 = vpack.c.b16 %v916, %v904
    %v1397 = vpack.c.b16 %v917, %v905
    %v1398 = vpack.c.b16 %v918, %v906
    %v1399 = vpack.c.b16 %v919, %v907
    %v1400 = vpack.c.b16 %v932, %v920
    %v1401 = vpack.c.b16 %v933, %v921
    %v1402 = vpack.c.b16 %v934, %v922
    %v1403 = vpack.c.b16 %v935, %v923
    %v1404 = vpack.c.b16 %v936, %v924
    %v1405 = vpack.c.b16 %v937, %v925
    %v1406 = vpack.c.b16 %v938, %v926
    %v1407 = vpack.c.b16 %v939, %v927
    %v1408 = vpack.c.b16 %v940, %v928
    %v1409 = vpack.c.b16 %v941, %v929
    %v1410 = vpack.c.b16 %v942, %v930
    %v1411 = vpack.c.b16 %v943, %v931
    %v1412 = vpack.c.b16 %v956, %v944
    %v1413 = vpack.c.b16 %v957, %v945
    %v1414 = vpack.c.b16 %v958, %v946
    %v1415 = vpack.c.b16 %v959, %v947
    %v1416 = vpack.c.b16 %v960, %v948
    %v1417 = vpack.c.b16 %v961, %v949
    %v1418 = vpack.c.b16 %v962, %v950
    %v1419 = vpack.c.b16 %v963, %v951
    %v1420 = vpack.c.b16 %v964, %v952
    %v1421 = vpack.c.b16 %v965, %v953
    %v1422 = vpack.c.b16 %v966, %v954
    %v1423 = vpack.c.b16 %v967, %v955
    %v1424 = vpack.c.b16 %v980, %v968
    %v1425 = vpack.c.b16 %v981, %v969
    %v1426 = vpack.c.b16 %v982, %v970
    %v1427 = vpack.c.b16 %v983, %v971
    %v1428 = vpack.c.b16 %v984, %v972
    %v1429 = vpack.c.b16 %v985, %v973
    %v1430 = vpack.c.b16 %v986, %v974
    %v1431 = vpack.c.b16 %v987, %v975
    %v1432 = vpack.c.b16 %v988, %v976
    %v1433 = vpack.c.b16 %v989, %v977
    %v1434 = vpack.c.b16 %v990, %v978
    %v1435 = vpack.c.b16 %v991, %v979
    %v1436 = vpack.c.b16 %v1004, %v992
    %v1437 = vpack.c.b16 %v1005, %v993
    %v1438 = vpack.c.b16 %v1006, %v994
    %v1439 = vpack.c.b16 %v1007, %v995
    %v1440 = vpack.c.b16 %v1008, %v996
    %v1441 = vpack.c.b16 %v1009, %v997
    %v1442 = vpack.c.b16 %v1010, %v998
    %v1443 = vpack.c.b16 %v1011, %v999
    %v1444 = vpack.c.b16 %v1012, %v1000
    %v1445 = vpack.c.b16 %v1013, %v1001
    %v1446 = vpack.c.b16 %v1014, %v1002
    %v1447 = vpack.c.b16 %v1015, %v1003
    %v1448 = vpack.c.b16 %v1028, %v1016
    %v1449 = vpack.c.b16 %v1029, %v1017
    %v1450 = vpack.c.b16 %v1030, %v1018
    %v1451 = vpack.c.b16 %v1031, %v1019
    %v1452 = vpack.c.b16 %v1032, %v1020
    %v1453 = vpack.c.b16 %v1033, %v1021
    %v1454 = vpack.c.b16 %v1034, %v1022
    %v1455 = vpack.c.b16 %v1035, %v1023
    %v1456 = vpack.c.b16 %v1036, %v1024
    %v1457 = vpack.c.b16 %v1037, %v1025
    %v1458 = vpack.c.b16 %v1038, %v1026
    %v1459 = vpack.c.b16 %v1039, %v1027
    %v1460 = vpack.c.b16 %v1052, %v1040
    %v1461 = vpack.c.b16 %v1053, %v1041
    %v1462 = vpack.c.b16 %v1054, %v1042
    %v1463 = vpack.c.b16 %v1055, %v1043
    %v1464 = vpack.c.b16 %v1056, %v1044
    %v1465 = vpack.c.b16 %v1057, %v1045
    %v1466 = vpack.c.b16 %v1058, %v1046
    %v1467 = vpack.c.b16 %v1059, %v1047
    %v1468 = vpack.c.b16 %v1060, %v1048
    %v1469 = vpack.c.b16 %v1061, %v1049
    %v1470 = vpack.c.b16 %v1062, %v1050
    %v1471 = vpack.c.b16 %v1063, %v1051
    %v1472 = vpack.c.b16 %v1076, %v1064
    %v1473 = vpack.c.b16 %v1077, %v1065
    %v1474 = vpack.c.b16 %v1078, %v1066
    %v1475 = vpack.c.b16 %v1079, %v1067
    %v1476 = vpack.c.b16 %v1080, %v1068
    %v1477 = vpack.c.b16 %v1081, %v1069
    %v1478 = vpack.c.b16 %v1082, %v1070
    %v1479 = vpack.c.b16 %v1083, %v1071
    %v1480 = vpack.c.b16 %v1084, %v1072
    %v1481 = vpack.c.b16 %v1085, %v1073
    %v1482 = vpack.c.b16 %v1086, %v1074
    %v1483 = vpack.c.b16 %v1087, %v1075
    %v1484 = vpack.c.b16 %v1100, %v1088
    %v1485 = vpack.c.b16 %v1101, %v1089
    %v1486 = vpack.c.b16 %v1102, %v1090
    %v1487 = vpack.c.b16 %v1103, %v1091
    %v1488 = vpack.c.b16 %v1104, %v1092
    %v1489 = vpack.c.b16 %v1105, %v1093
    %v1490 = vpack.c.b16 %v1106, %v1094
    %v1491 = vpack.c.b16 %v1107, %v1095
    %v1492 = vpack.c.b16 %v1108, %v1096
    %v1493 = vpack.c.b16 %v1109, %v1097
    %v1494 = vpack.c.b16 %v1110, %v1098
    %v1495 = vpack.c.b16 %v1111, %v1099
    %v1496 = vpack.c.b16 %v1124, %v1112
    %v1497 = vpack.c.b16 %v1125, %v1113
    %v1498 = vpack.c.b16 %v1126, %v1114
    %v1499 = vpack.c.b16 %v1127, %v1115
    %v1500 = vpack.c.b16 %v1128, %v1116
    %v1501 = vpack.c.b16 %v1129, %v1117
    %v1502 = vpack.c.b16 %v1130, %v1118
    %v1503 = vpack.c.b16 %v1131, %v1119
    %v1504 = vpack.c.b16 %v1132, %v1120
    %v1505 = vpack.c.b16 %v1133, %v1121
    %v1506 = vpack.c.b16 %v1134, %v1122
    %v1507 = vpack.c.b16 %v1135, %v1123
    %v1508 = vpack.c.b16 %v1148, %v1136
    %v1509 = vpack.c.b16 %v1149, %v1137
    %v1510 = vpack.c.b16 %v1150, %v1138
    %v1511 = vpack.c.b16 %v1151, %v1139
    %v1512 = vpack.c.b16 %v1152, %v1140
    %v1513 = vpack.c.b16 %v1153, %v1141
    %v1514 = vpack.c.b16 %v1154, %v1142
    %v1515 = vpack.c.b16 %v1155, %v1143
    %v1516 = vpack.c.b16 %v1156, %v1144
    %v1517 = vpack.c.b16 %v1157, %v1145
    %v1518 = vpack.c.b16 %v1158, %v1146
    %v1519 = vpack.c.b16 %v1159, %v1147
    %v1520 = vpack.c.b16 %v1172, %v1160
    %v1521 = vpack.c.b16 %v1173, %v1161
    %v1522 = vpack.c.b16 %v1174, %v1162
    %v1523 = vpack.c.b16 %v1175, %v1163
    %v1524 = vpack.c.b16 %v1176, %v1164
    %v1525 = vpack.c.b16 %v1177, %v1165
    %v1526 = vpack.c.b16 %v1178, %v1166
    %v1527 = vpack.c.b16 %v1179, %v1167
    %v1528 = vpack.c.b16 %v1180, %v1168
    %v1529 = vpack.c.b16 %v1181, %v1169
    %v1530 = vpack.c.b16 %v1182, %v1170
    %v1531 = vpack.c.b16 %v1183, %v1171
    %v1532 = vpack.c.b16 %v1196, %v1184
    %v1533 = vpack.c.b16 %v1197, %v1185
    %v1534 = vpack.c.b16 %v1198, %v1186
    %v1535 = vpack.c.b16 %v1199, %v1187
    %v1536 = vpack.c.b16 %v1200, %v1188
    %v1537 = vpack.c.b16 %v1201, %v1189
    %v1538 = vpack.c.b16 %v1202, %v1190
    %v1539 = vpack.c.b16 %v1203, %v1191
    %v1540 = vpack.c.b16 %v1204, %v1192
    %v1541 = vpack.c.b16 %v1205, %v1193
    %v1542 = vpack.c.b16 %v1206, %v1194
    %v1543 = vpack.c.b16 %v1207, %v1195
    %v1544 = vpack.c.b16 %v1220, %v1208
    %v1545 = vpack.c.b16 %v1221, %v1209
    %v1546 = vpack.c.b16 %v1222, %v1210
    %v1547 = vpack.c.b16 %v1223, %v1211
    %v1548 = vpack.c.b16 %v1224, %v1212
    %v1549 = vpack.c.b16 %v1225, %v1213
    %v1550 = vpack.c.b16 %v1226, %v1214
    %v1551 = vpack.c.b16 %v1227, %v1215
    %v1552 = vpack.c.b16 %v1228, %v1216
    %v1553 = vpack.c.b16 %v1229, %v1217
    %v1554 = vpack.c.b16 %v1230, %v1218
    %v1555 = vpack.c.b16 %v1231, %v1219
    %v1556 = vpack.c.b16 %v1244, %v1232
    %v1557 = vpack.c.b16 %v1245, %v1233
    %v1558 = vpack.c.b16 %v1246, %v1234
    %v1559 = vpack.c.b16 %v1247, %v1235
    %v1560 = vpack.c.b16 %v1248, %v1236
    %v1561 = vpack.c.b16 %v1249, %v1237
    %v1562 = vpack.c.b16 %v1250, %v1238
    %v1563 = vpack.c.b16 %v1251, %v1239
    %v1564 = vpack.c.b16 %v1252, %v1240
    %v1565 = vpack.c.b16 %v1253, %v1241
    %v1566 = vpack.c.b16 %v1254, %v1242
    %v1567 = vpack.c.b16 %v1255, %v1243
    %v1568 = vpack.c.b16 %v1268, %v1256
    %v1569 = vpack.c.b16 %v1269, %v1257
    %v1570 = vpack.c.b16 %v1270, %v1258
    %v1571 = vpack.c.b16 %v1271, %v1259
    %v1572 = vpack.c.b16 %v1272, %v1260
    %v1573 = vpack.c.b16 %v1273, %v1261
    %v1574 = vpack.c.b16 %v1274, %v1262
    %v1575 = vpack.c.b16 %v1275, %v1263
    %v1576 = vpack.c.b16 %v1276, %v1264
    %v1577 = vpack.c.b16 %v1277, %v1265
    %v1578 = vpack.c.b16 %v1278, %v1266
    %v1579 = vpack.c.b16 %v1279, %v1267
    %v1580 = vpack.c.b16 %v1292, %v1280
    %v1581 = vpack.c.b16 %v1293, %v1281
    %v1582 = vpack.c.b16 %v1294, %v1282
    %v1583 = vpack.c.b16 %v1295, %v1283
    %v1584 = vpack.c.b16 %v1296, %v1284
    %v1585 = vpack.c.b16 %v1297, %v1285
    %v1586 = vpack.c.b16 %v1298, %v1286
    %v1587 = vpack.c.b16 %v1299, %v1287
    %v1588 = vpack.c.b16 %v1300, %v1288
    %v1589 = vpack.c.b16 %v1301, %v1289
    %v1590 = vpack.c.b16 %v1302, %v1290
    %v1591 = vpack.c.b16 %v1303, %v1291
    %1880 = vmatprep.subr.bf16.mxu0 %v1389
    %1881 = vmatpush1.bf16.msra.mxu0 %v1388
    %1882 = vmatprep.subr.bf16.mxu0 %v1377
    %1883 = vmatpush1.bf16.msra.mxu0 %v1376
    %1884 = vmatprep.subr.bf16.mxu0 %v1365
    %1885 = vmatpush1.bf16.msra.mxu0 %v1364
    %1886 = vmatprep.subr.bf16.mxu0 %v1353
    %1887 = vmatpush1.bf16.msra.mxu0 %v1352
    %1888 = vmatprep.subr.bf16.mxu0 %v1341
    %1889 = vmatpush1.bf16.msra.mxu0 %v1340
    %1890 = vmatprep.subr.bf16.mxu0 %v1329
    %1891 = vmatpush1.bf16.msra.mxu0 %v1328
    %1892 = vmatprep.subr.bf16.mxu0 %v1317
    %1893 = vmatpush1.bf16.msra.mxu0 %v1316
    %1894 = vmatprep.subr.bf16.mxu0 %v1305
    %1895 = vmatpush1.bf16.msra.mxu0 %v1304
    %1896 = vmatprep.subr.bf16.mxu0 %v1485
    %1897 = vmatpush2.bf16.msra.mxu0 %v1484
    %1898 = vmatprep.subr.bf16.mxu0 %v1473
    %1899 = vmatpush2.bf16.msra.mxu0 %v1472
    %1900 = vmatprep.subr.bf16.mxu0 %v1461
    %1901 = vmatpush2.bf16.msra.mxu0 %v1460
    %1902 = vmatprep.subr.bf16.mxu0 %v1449
    %1903 = vmatpush2.bf16.msra.mxu0 %v1448
    %1904 = vmatprep.subr.bf16.mxu0 %v1437
    %1905 = vmatpush2.bf16.msra.mxu0 %v1436
    %1906 = vmatprep.subr.bf16.mxu0 %v1425
    %1907 = vmatpush2.bf16.msra.mxu0 %v1424
    %1908 = vmatprep.subr.bf16.mxu0 %v1413
    %1909 = vmatpush2.bf16.msra.mxu0 %v1412
    %1910 = vmatprep.subr.bf16.mxu0 %v1401
    %1911 = vmatpush2.bf16.msra.mxu0 %v1400
    %1912 = vmatprep.mubr.bf16.mxu0 %v417
    %1913 = vmatmul.mubr.bf16.gmra.mxu0 %v416
    %v1914 = vpop.f32.mrf.mxu0
    %v1915 = vadd.f32 0.0, %v1914
    %v1916 = vpop.f32.mrf.mxu0
    %v1917 = vadd.f32 0.0, %v1916
    %v1918 = vpop.f32.mrf.mxu0
    %v1919 = vadd.f32 0.0, %v1918
    %v1920 = vpop.f32.mrf.mxu0
    %v1921 = vadd.f32 0.0, %v1920
    %1922 = vmatprep.mubr.bf16.mxu0 %v420
    %1923 = vmatmul.mubr.bf16.gmra.mxu0 %v419
    %v1924 = vpop.f32.mrf.mxu0
    %v1925 = vadd.f32 0.0, %v1924
    %v1926 = vpop.f32.mrf.mxu0
    %v1927 = vadd.f32 0.0, %v1926
    %v1928 = vpop.f32.mrf.mxu0
    %v1929 = vadd.f32 0.0, %v1928
    %v1930 = vpop.f32.mrf.mxu0
    %v1931 = vadd.f32 0.0, %v1930
    %1932 = vmatprep.mubr.bf16.mxu0 %v423
    %1933 = vmatmul.mubr.bf16.gmra.mxu0 %v422
    %v1934 = vpop.f32.mrf.mxu0
    %v1935 = vadd.f32 0.0, %v1934
    %v1936 = vpop.f32.mrf.mxu0
    %v1937 = vadd.f32 0.0, %v1936
    %v1938 = vpop.f32.mrf.mxu0
    %v1939 = vadd.f32 0.0, %v1938
    %v1940 = vpop.f32.mrf.mxu0
    %v1941 = vadd.f32 0.0, %v1940
    %1942 = vmatprep.mubr.bf16.mxu0 %v426
    %1943 = vmatmul.mubr.bf16.gmra.mxu0 %v425
    %v1944 = vpop.f32.mrf.mxu0
    %v1945 = vadd.f32 0.0, %v1944
    %v1946 = vpop.f32.mrf.mxu0
    %v1947 = vadd.f32 0.0, %v1946
    %v1948 = vpop.f32.mrf.mxu0
    %v1949 = vadd.f32 0.0, %v1948
    %v1950 = vpop.f32.mrf.mxu0
    %v1951 = vadd.f32 0.0, %v1950
    %1952 = vdwg.mxu0
    %1953 = vmatprep.subr.bf16.mxu0 %v1581
    %1954 = vmatpush1.bf16.msra.mxu0 %v1580
    %1955 = vmatprep.subr.bf16.mxu0 %v1569
    %1956 = vmatpush1.bf16.msra.mxu0 %v1568
    %1957 = vmatprep.subr.bf16.mxu0 %v1557
    %1958 = vmatpush1.bf16.msra.mxu0 %v1556
    %1959 = vmatprep.subr.bf16.mxu0 %v1545
    %1960 = vmatpush1.bf16.msra.mxu0 %v1544
    %1961 = vmatprep.subr.bf16.mxu0 %v1533
    %1962 = vmatpush1.bf16.msra.mxu0 %v1532
    %1963 = vmatprep.subr.bf16.mxu0 %v1521
    %1964 = vmatpush1.bf16.msra.mxu0 %v1520
    %1965 = vmatprep.subr.bf16.mxu0 %v1509
    %1966 = vmatpush1.bf16.msra.mxu0 %v1508
    %1967 = vmatprep.subr.bf16.mxu0 %v1497
    %1968 = vmatpush1.bf16.msra.mxu0 %v1496
    %1969 = vmatprep.subr.bf16.mxu0 0
    %1970 = vmatpush2.bf16.msra.mxu0 0
    %1971 = vmatprep.subr.bf16.mxu0 0
    %1972 = vmatpush2.bf16.msra.mxu0 0
    %1973 = vmatprep.subr.bf16.mxu0 0
    %1974 = vmatpush2.bf16.msra.mxu0 0
    %1975 = vmatprep.subr.bf16.mxu0 0
    %1976 = vmatpush2.bf16.msra.mxu0 0
    %1977 = vmatprep.subr.bf16.mxu0 0
    %1978 = vmatpush2.bf16.msra.mxu0 0
    %1979 = vmatprep.subr.bf16.mxu0 0
    %1980 = vmatpush2.bf16.msra.mxu0 0
    %1981 = vmatprep.subr.bf16.mxu0 0
    %1982 = vmatpush2.bf16.msra.mxu0 0
    %1983 = vmatprep.subr.bf16.mxu0 0
    %1984 = vmatpush2.bf16.msra.mxu0 0
    %1985 = vmatprep.mubr.bf16.mxu0 0
    %1986 = vmatmul.mubr.bf16.gmra.mxu0 %v418
    %v1987 = vpop.f32.mrf.mxu0
    %v1988 = vadd.f32 %v1915, %v1987
    %v1989 = vpop.f32.mrf.mxu0
    %v1990 = vadd.f32 %v1917, %v1989
    %v1991 = vpop.f32.mrf.mxu0
    %v1992 = vadd.f32 %v1919, %v1991
    %v1993 = vpop.f32.mrf.mxu0
    %v1994 = vadd.f32 %v1921, %v1993
    %1995 = vmatprep.mubr.bf16.mxu0 0
    %1996 = vmatmul.mubr.bf16.gmra.mxu0 %v421
    %v1997 = vpop.f32.mrf.mxu0
    %v1998 = vadd.f32 %v1925, %v1997
    %v1999 = vpop.f32.mrf.mxu0
    %v2000 = vadd.f32 %v1927, %v1999
    %v2001 = vpop.f32.mrf.mxu0
    %v2002 = vadd.f32 %v1929, %v2001
    %v2003 = vpop.f32.mrf.mxu0
    %v2004 = vadd.f32 %v1931, %v2003
    %2005 = vmatprep.mubr.bf16.mxu0 0
    %2006 = vmatmul.mubr.bf16.gmra.mxu0 %v424
    %v2007 = vpop.f32.mrf.mxu0
    %v2008 = vadd.f32 %v1935, %v2007
    %v2009 = vpop.f32.mrf.mxu0
    %v2010 = vadd.f32 %v1937, %v2009
    %v2011 = vpop.f32.mrf.mxu0
    %v2012 = vadd.f32 %v1939, %v2011
    %v2013 = vpop.f32.mrf.mxu0
    %v2014 = vadd.f32 %v1941, %v2013
    %2015 = vmatprep.mubr.bf16.mxu0 0
    %2016 = vmatmul.mubr.bf16.gmra.mxu0 %v427
    %v2017 = vpop.f32.mrf.mxu0
    %v2018 = vadd.f32 %v1945, %v2017
    %v2019 = vpop.f32.mrf.mxu0
    %v2020 = vadd.f32 %v1947, %v2019
    %v2021 = vpop.f32.mrf.mxu0
    %v2022 = vadd.f32 %v1949, %v2021
    %v2023 = vpop.f32.mrf.mxu0
    %v2024 = vadd.f32 %v1951, %v2023
    %2025 = vdwg.mxu0
    %2026 = vmatprep.subr.bf16.mxu0 %v1391
    %2027 = vmatpush1.bf16.msra.mxu0 %v1390
    %2028 = vmatprep.subr.bf16.mxu0 %v1379
    %2029 = vmatpush1.bf16.msra.mxu0 %v1378
    %2030 = vmatprep.subr.bf16.mxu0 %v1367
    %2031 = vmatpush1.bf16.msra.mxu0 %v1366
    %2032 = vmatprep.subr.bf16.mxu0 %v1355
    %2033 = vmatpush1.bf16.msra.mxu0 %v1354
    %2034 = vmatprep.subr.bf16.mxu0 %v1343
    %2035 = vmatpush1.bf16.msra.mxu0 %v1342
    %2036 = vmatprep.subr.bf16.mxu0 %v1331
    %2037 = vmatpush1.bf16.msra.mxu0 %v1330
    %2038 = vmatprep.subr.bf16.mxu0 %v1319
    %2039 = vmatpush1.bf16.msra.mxu0 %v1318
    %2040 = vmatprep.subr.bf16.mxu0 %v1307
    %2041 = vmatpush1.bf16.msra.mxu0 %v1306
    %2042 = vmatprep.subr.bf16.mxu0 %v1487
    %2043 = vmatpush2.bf16.msra.mxu0 %v1486
    %2044 = vmatprep.subr.bf16.mxu0 %v1475
    %2045 = vmatpush2.bf16.msra.mxu0 %v1474
    %2046 = vmatprep.subr.bf16.mxu0 %v1463
    %2047 = vmatpush2.bf16.msra.mxu0 %v1462
    %2048 = vmatprep.subr.bf16.mxu0 %v1451
    %2049 = vmatpush2.bf16.msra.mxu0 %v1450
    %2050 = vmatprep.subr.bf16.mxu0 %v1439
    %2051 = vmatpush2.bf16.msra.mxu0 %v1438
    %2052 = vmatprep.subr.bf16.mxu0 %v1427
    %2053 = vmatpush2.bf16.msra.mxu0 %v1426
    %2054 = vmatprep.subr.bf16.mxu0 %v1415
    %2055 = vmatpush2.bf16.msra.mxu0 %v1414
    %2056 = vmatprep.subr.bf16.mxu0 %v1403
    %2057 = vmatpush2.bf16.msra.mxu0 %v1402
    %2058 = vmatprep.mubr.bf16.mxu0 %v417
    %2059 = vmatmul.mubr.bf16.gmra.mxu0 %v416
    %v2060 = vpop.f32.mrf.mxu0
    %v2061 = vadd.f32 0.0, %v2060
    %v2062 = vpop.f32.mrf.mxu0
    %v2063 = vadd.f32 0.0, %v2062
    %v2064 = vpop.f32.mrf.mxu0
    %v2065 = vadd.f32 0.0, %v2064
    %v2066 = vpop.f32.mrf.mxu0
    %v2067 = vadd.f32 0.0, %v2066
    %2068 = vmatprep.mubr.bf16.mxu0 %v420
    %2069 = vmatmul.mubr.bf16.gmra.mxu0 %v419
    %v2070 = vpop.f32.mrf.mxu0
    %v2071 = vadd.f32 0.0, %v2070
    %v2072 = vpop.f32.mrf.mxu0
    %v2073 = vadd.f32 0.0, %v2072
    %v2074 = vpop.f32.mrf.mxu0
    %v2075 = vadd.f32 0.0, %v2074
    %v2076 = vpop.f32.mrf.mxu0
    %v2077 = vadd.f32 0.0, %v2076
    %2078 = vmatprep.mubr.bf16.mxu0 %v423
    %2079 = vmatmul.mubr.bf16.gmra.mxu0 %v422
    %v2080 = vpop.f32.mrf.mxu0
    %v2081 = vadd.f32 0.0, %v2080
    %v2082 = vpop.f32.mrf.mxu0
    %v2083 = vadd.f32 0.0, %v2082
    %v2084 = vpop.f32.mrf.mxu0
    %v2085 = vadd.f32 0.0, %v2084
    %v2086 = vpop.f32.mrf.mxu0
    %v2087 = vadd.f32 0.0, %v2086
    %2088 = vmatprep.mubr.bf16.mxu0 %v426
    %2089 = vmatmul.mubr.bf16.gmra.mxu0 %v425
    %v2090 = vpop.f32.mrf.mxu0
    %v2091 = vadd.f32 0.0, %v2090
    %v2092 = vpop.f32.mrf.mxu0
    %v2093 = vadd.f32 0.0, %v2092
    %v2094 = vpop.f32.mrf.mxu0
    %v2095 = vadd.f32 0.0, %v2094
    %v2096 = vpop.f32.mrf.mxu0
    %v2097 = vadd.f32 0.0, %v2096
    %2098 = vdwg.mxu0
    %2099 = vmatprep.subr.bf16.mxu0 %v1583
    %2100 = vmatpush1.bf16.msra.mxu0 %v1582
    %2101 = vmatprep.subr.bf16.mxu0 %v1571
    %2102 = vmatpush1.bf16.msra.mxu0 %v1570
    %2103 = vmatprep.subr.bf16.mxu0 %v1559
    %2104 = vmatpush1.bf16.msra.mxu0 %v1558
    %2105 = vmatprep.subr.bf16.mxu0 %v1547
    %2106 = vmatpush1.bf16.msra.mxu0 %v1546
    %2107 = vmatprep.subr.bf16.mxu0 %v1535
    %2108 = vmatpush1.bf16.msra.mxu0 %v1534
    %2109 = vmatprep.subr.bf16.mxu0 %v1523
    %2110 = vmatpush1.bf16.msra.mxu0 %v1522
    %2111 = vmatprep.subr.bf16.mxu0 %v1511
    %2112 = vmatpush1.bf16.msra.mxu0 %v1510
    %2113 = vmatprep.subr.bf16.mxu0 %v1499
    %2114 = vmatpush1.bf16.msra.mxu0 %v1498
    %2115 = vmatprep.subr.bf16.mxu0 0
    %2116 = vmatpush2.bf16.msra.mxu0 0
    %2117 = vmatprep.subr.bf16.mxu0 0
    %2118 = vmatpush2.bf16.msra.mxu0 0
    %2119 = vmatprep.subr.bf16.mxu0 0
    %2120 = vmatpush2.bf16.msra.mxu0 0
    %2121 = vmatprep.subr.bf16.mxu0 0
    %2122 = vmatpush2.bf16.msra.mxu0 0
    %2123 = vmatprep.subr.bf16.mxu0 0
    %2124 = vmatpush2.bf16.msra.mxu0 0
    %2125 = vmatprep.subr.bf16.mxu0 0
    %2126 = vmatpush2.bf16.msra.mxu0 0
    %2127 = vmatprep.subr.bf16.mxu0 0
    %2128 = vmatpush2.bf16.msra.mxu0 0
    %2129 = vmatprep.subr.bf16.mxu0 0
    %2130 = vmatpush2.bf16.msra.mxu0 0
    %2131 = vmatprep.mubr.bf16.mxu0 0
    %2132 = vmatmul.mubr.bf16.gmra.mxu0 %v418
    %v2133 = vpop.f32.mrf.mxu0
    %v2134 = vadd.f32 %v2061, %v2133
    %v2135 = vpop.f32.mrf.mxu0
    %v2136 = vadd.f32 %v2063, %v2135
    %v2137 = vpop.f32.mrf.mxu0
    %v2138 = vadd.f32 %v2065, %v2137
    %v2139 = vpop.f32.mrf.mxu0
    %v2140 = vadd.f32 %v2067, %v2139
    %2141 = vmatprep.mubr.bf16.mxu0 0
    %2142 = vmatmul.mubr.bf16.gmra.mxu0 %v421
    %v2143 = vpop.f32.mrf.mxu0
    %v2144 = vadd.f32 %v2071, %v2143
    %v2145 = vpop.f32.mrf.mxu0
    %v2146 = vadd.f32 %v2073, %v2145
    %v2147 = vpop.f32.mrf.mxu0
    %v2148 = vadd.f32 %v2075, %v2147
    %v2149 = vpop.f32.mrf.mxu0
    %v2150 = vadd.f32 %v2077, %v2149
    %2151 = vmatprep.mubr.bf16.mxu0 0
    %2152 = vmatmul.mubr.bf16.gmra.mxu0 %v424
    %v2153 = vpop.f32.mrf.mxu0
    %v2154 = vadd.f32 %v2081, %v2153
    %v2155 = vpop.f32.mrf.mxu0
    %v2156 = vadd.f32 %v2083, %v2155
    %v2157 = vpop.f32.mrf.mxu0
    %v2158 = vadd.f32 %v2085, %v2157
    %v2159 = vpop.f32.mrf.mxu0
    %v2160 = vadd.f32 %v2087, %v2159
    %2161 = vmatprep.mubr.bf16.mxu0 0
    %2162 = vmatmul.mubr.bf16.gmra.mxu0 %v427
    %v2163 = vpop.f32.mrf.mxu0
    %v2164 = vadd.f32 %v2091, %v2163
    %v2165 = vpop.f32.mrf.mxu0
    %v2166 = vadd.f32 %v2093, %v2165
    %v2167 = vpop.f32.mrf.mxu0
    %v2168 = vadd.f32 %v2095, %v2167
    %v2169 = vpop.f32.mrf.mxu0
    %v2170 = vadd.f32 %v2097, %v2169
    %2171 = vdwg.mxu0
    %2172 = vmatprep.subr.bf16.mxu0 %v1393
    %2173 = vmatpush1.bf16.msra.mxu0 %v1392
    %2174 = vmatprep.subr.bf16.mxu0 %v1381
    %2175 = vmatpush1.bf16.msra.mxu0 %v1380
    %2176 = vmatprep.subr.bf16.mxu0 %v1369
    %2177 = vmatpush1.bf16.msra.mxu0 %v1368
    %2178 = vmatprep.subr.bf16.mxu0 %v1357
    %2179 = vmatpush1.bf16.msra.mxu0 %v1356
    %2180 = vmatprep.subr.bf16.mxu0 %v1345
    %2181 = vmatpush1.bf16.msra.mxu0 %v1344
    %2182 = vmatprep.subr.bf16.mxu0 %v1333
    %2183 = vmatpush1.bf16.msra.mxu0 %v1332
    %2184 = vmatprep.subr.bf16.mxu0 %v1321
    %2185 = vmatpush1.bf16.msra.mxu0 %v1320
    %2186 = vmatprep.subr.bf16.mxu0 %v1309
    %2187 = vmatpush1.bf16.msra.mxu0 %v1308
    %2188 = vmatprep.subr.bf16.mxu0 %v1489
    %2189 = vmatpush2.bf16.msra.mxu0 %v1488
    %2190 = vmatprep.subr.bf16.mxu0 %v1477
    %2191 = vmatpush2.bf16.msra.mxu0 %v1476
    %2192 = vmatprep.subr.bf16.mxu0 %v1465
    %2193 = vmatpush2.bf16.msra.mxu0 %v1464
    %2194 = vmatprep.subr.bf16.mxu0 %v1453
    %2195 = vmatpush2.bf16.msra.mxu0 %v1452
    %2196 = vmatprep.subr.bf16.mxu0 %v1441
    %2197 = vmatpush2.bf16.msra.mxu0 %v1440
    %2198 = vmatprep.subr.bf16.mxu0 %v1429
    %2199 = vmatpush2.bf16.msra.mxu0 %v1428
    %2200 = vmatprep.subr.bf16.mxu0 %v1417
    %2201 = vmatpush2.bf16.msra.mxu0 %v1416
    %2202 = vmatprep.subr.bf16.mxu0 %v1405
    %2203 = vmatpush2.bf16.msra.mxu0 %v1404
    %2204 = vmatprep.mubr.bf16.mxu0 %v417
    %2205 = vmatmul.mubr.bf16.gmra.mxu0 %v416
    %v2206 = vpop.f32.mrf.mxu0
    %v2207 = vadd.f32 0.0, %v2206
    %v2208 = vpop.f32.mrf.mxu0
    %v2209 = vadd.f32 0.0, %v2208
    %v2210 = vpop.f32.mrf.mxu0
    %v2211 = vadd.f32 0.0, %v2210
    %v2212 = vpop.f32.mrf.mxu0
    %v2213 = vadd.f32 0.0, %v2212
    %2214 = vmatprep.mubr.bf16.mxu0 %v420
    %2215 = vmatmul.mubr.bf16.gmra.mxu0 %v419
    %v2216 = vpop.f32.mrf.mxu0
    %v2217 = vadd.f32 0.0, %v2216
    %v2218 = vpop.f32.mrf.mxu0
    %v2219 = vadd.f32 0.0, %v2218
    %v2220 = vpop.f32.mrf.mxu0
    %v2221 = vadd.f32 0.0, %v2220
    %v2222 = vpop.f32.mrf.mxu0
    %v2223 = vadd.f32 0.0, %v2222
    %2224 = vmatprep.mubr.bf16.mxu0 %v423
    %2225 = vmatmul.mubr.bf16.gmra.mxu0 %v422
    %v2226 = vpop.f32.mrf.mxu0
    %v2227 = vadd.f32 0.0, %v2226
    %v2228 = vpop.f32.mrf.mxu0
    %v2229 = vadd.f32 0.0, %v2228
    %v2230 = vpop.f32.mrf.mxu0
    %v2231 = vadd.f32 0.0, %v2230
    %v2232 = vpop.f32.mrf.mxu0
    %v2233 = vadd.f32 0.0, %v2232
    %2234 = vmatprep.mubr.bf16.mxu0 %v426
    %2235 = vmatmul.mubr.bf16.gmra.mxu0 %v425
    %v2236 = vpop.f32.mrf.mxu0
    %v2237 = vadd.f32 0.0, %v2236
    %v2238 = vpop.f32.mrf.mxu0
    %v2239 = vadd.f32 0.0, %v2238
    %v2240 = vpop.f32.mrf.mxu0
    %v2241 = vadd.f32 0.0, %v2240
    %v2242 = vpop.f32.mrf.mxu0
    %v2243 = vadd.f32 0.0, %v2242
    %2244 = vdwg.mxu0
    %2245 = vmatprep.subr.bf16.mxu0 %v1585
    %2246 = vmatpush1.bf16.msra.mxu0 %v1584
    %2247 = vmatprep.subr.bf16.mxu0 %v1573
    %2248 = vmatpush1.bf16.msra.mxu0 %v1572
    %2249 = vmatprep.subr.bf16.mxu0 %v1561
    %2250 = vmatpush1.bf16.msra.mxu0 %v1560
    %2251 = vmatprep.subr.bf16.mxu0 %v1549
    %2252 = vmatpush1.bf16.msra.mxu0 %v1548
    %2253 = vmatprep.subr.bf16.mxu0 %v1537
    %2254 = vmatpush1.bf16.msra.mxu0 %v1536
    %2255 = vmatprep.subr.bf16.mxu0 %v1525
    %2256 = vmatpush1.bf16.msra.mxu0 %v1524
    %2257 = vmatprep.subr.bf16.mxu0 %v1513
    %2258 = vmatpush1.bf16.msra.mxu0 %v1512
    %2259 = vmatprep.subr.bf16.mxu0 %v1501
    %2260 = vmatpush1.bf16.msra.mxu0 %v1500
    %2261 = vmatprep.subr.bf16.mxu0 0
    %2262 = vmatpush2.bf16.msra.mxu0 0
    %2263 = vmatprep.subr.bf16.mxu0 0
    %2264 = vmatpush2.bf16.msra.mxu0 0
    %2265 = vmatprep.subr.bf16.mxu0 0
    %2266 = vmatpush2.bf16.msra.mxu0 0
    %2267 = vmatprep.subr.bf16.mxu0 0
    %2268 = vmatpush2.bf16.msra.mxu0 0
    %2269 = vmatprep.subr.bf16.mxu0 0
    %2270 = vmatpush2.bf16.msra.mxu0 0
    %2271 = vmatprep.subr.bf16.mxu0 0
    %2272 = vmatpush2.bf16.msra.mxu0 0
    %2273 = vmatprep.subr.bf16.mxu0 0
    %2274 = vmatpush2.bf16.msra.mxu0 0
    %2275 = vmatprep.subr.bf16.mxu0 0
    %2276 = vmatpush2.bf16.msra.mxu0 0
    %2277 = vmatprep.mubr.bf16.mxu0 0
    %2278 = vmatmul.mubr.bf16.gmra.mxu0 %v418
    %v2279 = vpop.f32.mrf.mxu0
    %v2280 = vadd.f32 %v2207, %v2279
    %v2281 = vpop.f32.mrf.mxu0
    %v2282 = vadd.f32 %v2209, %v2281
    %v2283 = vpop.f32.mrf.mxu0
    %v2284 = vadd.f32 %v2211, %v2283
    %v2285 = vpop.f32.mrf.mxu0
    %v2286 = vadd.f32 %v2213, %v2285
    %2287 = vmatprep.mubr.bf16.mxu0 0
    %2288 = vmatmul.mubr.bf16.gmra.mxu0 %v421
    %v2289 = vpop.f32.mrf.mxu0
    %v2290 = vadd.f32 %v2217, %v2289
    %v2291 = vpop.f32.mrf.mxu0
    %v2292 = vadd.f32 %v2219, %v2291
    %v2293 = vpop.f32.mrf.mxu0
    %v2294 = vadd.f32 %v2221, %v2293
    %v2295 = vpop.f32.mrf.mxu0
    %v2296 = vadd.f32 %v2223, %v2295
    %2297 = vmatprep.mubr.bf16.mxu0 0
    %2298 = vmatmul.mubr.bf16.gmra.mxu0 %v424
    %v2299 = vpop.f32.mrf.mxu0
    %v2300 = vadd.f32 %v2227, %v2299
    %v2301 = vpop.f32.mrf.mxu0
    %v2302 = vadd.f32 %v2229, %v2301
    %v2303 = vpop.f32.mrf.mxu0
    %v2304 = vadd.f32 %v2231, %v2303
    %v2305 = vpop.f32.mrf.mxu0
    %v2306 = vadd.f32 %v2233, %v2305
    %2307 = vmatprep.mubr.bf16.mxu0 0
    %2308 = vmatmul.mubr.bf16.gmra.mxu0 %v427
    %v2309 = vpop.f32.mrf.mxu0
    %v2310 = vadd.f32 %v2237, %v2309
    %v2311 = vpop.f32.mrf.mxu0
    %v2312 = vadd.f32 %v2239, %v2311
    %v2313 = vpop.f32.mrf.mxu0
    %v2314 = vadd.f32 %v2241, %v2313
    %v2315 = vpop.f32.mrf.mxu0
    %v2316 = vadd.f32 %v2243, %v2315
    %2317 = vdwg.mxu0
    %2318 = vmatprep.subr.bf16.mxu0 %v1395
    %2319 = vmatpush1.bf16.msra.mxu0 %v1394
    %2320 = vmatprep.subr.bf16.mxu0 %v1383
    %2321 = vmatpush1.bf16.msra.mxu0 %v1382
    %2322 = vmatprep.subr.bf16.mxu0 %v1371
    %2323 = vmatpush1.bf16.msra.mxu0 %v1370
    %2324 = vmatprep.subr.bf16.mxu0 %v1359
    %2325 = vmatpush1.bf16.msra.mxu0 %v1358
    %2326 = vmatprep.subr.bf16.mxu0 %v1347
    %2327 = vmatpush1.bf16.msra.mxu0 %v1346
    %2328 = vmatprep.subr.bf16.mxu0 %v1335
    %2329 = vmatpush1.bf16.msra.mxu0 %v1334
    %2330 = vmatprep.subr.bf16.mxu0 %v1323
    %2331 = vmatpush1.bf16.msra.mxu0 %v1322
    %2332 = vmatprep.subr.bf16.mxu0 %v1311
    %2333 = vmatpush1.bf16.msra.mxu0 %v1310
    %2334 = vmatprep.subr.bf16.mxu0 %v1491
    %2335 = vmatpush2.bf16.msra.mxu0 %v1490
    %2336 = vmatprep.subr.bf16.mxu0 %v1479
    %2337 = vmatpush2.bf16.msra.mxu0 %v1478
    %2338 = vmatprep.subr.bf16.mxu0 %v1467
    %2339 = vmatpush2.bf16.msra.mxu0 %v1466
    %2340 = vmatprep.subr.bf16.mxu0 %v1455
    %2341 = vmatpush2.bf16.msra.mxu0 %v1454
    %2342 = vmatprep.subr.bf16.mxu0 %v1443
    %2343 = vmatpush2.bf16.msra.mxu0 %v1442
    %2344 = vmatprep.subr.bf16.mxu0 %v1431
    %2345 = vmatpush2.bf16.msra.mxu0 %v1430
    %2346 = vmatprep.subr.bf16.mxu0 %v1419
    %2347 = vmatpush2.bf16.msra.mxu0 %v1418
    %2348 = vmatprep.subr.bf16.mxu0 %v1407
    %2349 = vmatpush2.bf16.msra.mxu0 %v1406
    %2350 = vmatprep.mubr.bf16.mxu0 %v417
    %2351 = vmatmul.mubr.bf16.gmra.mxu0 %v416
    %v2352 = vpop.f32.mrf.mxu0
    %v2353 = vadd.f32 0.0, %v2352
    %v2354 = vpop.f32.mrf.mxu0
    %v2355 = vadd.f32 0.0, %v2354
    %v2356 = vpop.f32.mrf.mxu0
    %v2357 = vadd.f32 0.0, %v2356
    %v2358 = vpop.f32.mrf.mxu0
    %v2359 = vadd.f32 0.0, %v2358
    %2360 = vmatprep.mubr.bf16.mxu0 %v420
    %2361 = vmatmul.mubr.bf16.gmra.mxu0 %v419
    %v2362 = vpop.f32.mrf.mxu0
    %v2363 = vadd.f32 0.0, %v2362
    %v2364 = vpop.f32.mrf.mxu0
    %v2365 = vadd.f32 0.0, %v2364
    %v2366 = vpop.f32.mrf.mxu0
    %v2367 = vadd.f32 0.0, %v2366
    %v2368 = vpop.f32.mrf.mxu0
    %v2369 = vadd.f32 0.0, %v2368
    %2370 = vmatprep.mubr.bf16.mxu0 %v423
    %2371 = vmatmul.mubr.bf16.gmra.mxu0 %v422
    %v2372 = vpop.f32.mrf.mxu0
    %v2373 = vadd.f32 0.0, %v2372
    %v2374 = vpop.f32.mrf.mxu0
    %v2375 = vadd.f32 0.0, %v2374
    %v2376 = vpop.f32.mrf.mxu0
    %v2377 = vadd.f32 0.0, %v2376
    %v2378 = vpop.f32.mrf.mxu0
    %v2379 = vadd.f32 0.0, %v2378
    %2380 = vmatprep.mubr.bf16.mxu0 %v426
    %2381 = vmatmul.mubr.bf16.gmra.mxu0 %v425
    %v2382 = vpop.f32.mrf.mxu0
    %v2383 = vadd.f32 0.0, %v2382
    %v2384 = vpop.f32.mrf.mxu0
    %v2385 = vadd.f32 0.0, %v2384
    %v2386 = vpop.f32.mrf.mxu0
    %v2387 = vadd.f32 0.0, %v2386
    %v2388 = vpop.f32.mrf.mxu0
    %v2389 = vadd.f32 0.0, %v2388
    %2390 = vdwg.mxu0
    %2391 = vmatprep.subr.bf16.mxu0 %v1587
    %2392 = vmatpush1.bf16.msra.mxu0 %v1586
    %2393 = vmatprep.subr.bf16.mxu0 %v1575
    %2394 = vmatpush1.bf16.msra.mxu0 %v1574
    %2395 = vmatprep.subr.bf16.mxu0 %v1563
    %2396 = vmatpush1.bf16.msra.mxu0 %v1562
    %2397 = vmatprep.subr.bf16.mxu0 %v1551
    %2398 = vmatpush1.bf16.msra.mxu0 %v1550
    %2399 = vmatprep.subr.bf16.mxu0 %v1539
    %2400 = vmatpush1.bf16.msra.mxu0 %v1538
    %2401 = vmatprep.subr.bf16.mxu0 %v1527
    %2402 = vmatpush1.bf16.msra.mxu0 %v1526
    %2403 = vmatprep.subr.bf16.mxu0 %v1515
    %2404 = vmatpush1.bf16.msra.mxu0 %v1514
    %2405 = vmatprep.subr.bf16.mxu0 %v1503
    %2406 = vmatpush1.bf16.msra.mxu0 %v1502
    %2407 = vmatprep.subr.bf16.mxu0 0
    %2408 = vmatpush2.bf16.msra.mxu0 0
    %2409 = vmatprep.subr.bf16.mxu0 0
    %2410 = vmatpush2.bf16.msra.mxu0 0
    %2411 = vmatprep.subr.bf16.mxu0 0
    %2412 = vmatpush2.bf16.msra.mxu0 0
    %2413 = vmatprep.subr.bf16.mxu0 0
    %2414 = vmatpush2.bf16.msra.mxu0 0
    %2415 = vmatprep.subr.bf16.mxu0 0
    %2416 = vmatpush2.bf16.msra.mxu0 0
    %2417 = vmatprep.subr.bf16.mxu0 0
    %2418 = vmatpush2.bf16.msra.mxu0 0
    %2419 = vmatprep.subr.bf16.mxu0 0
    %2420 = vmatpush2.bf16.msra.mxu0 0
    %2421 = vmatprep.subr.bf16.mxu0 0
    %2422 = vmatpush2.bf16.msra.mxu0 0
    %2423 = vmatprep.mubr.bf16.mxu0 0
    %2424 = vmatmul.mubr.bf16.gmra.mxu0 %v418
    %v2425 = vpop.f32.mrf.mxu0
    %v2426 = vadd.f32 %v2353, %v2425
    %v2427 = vpop.f32.mrf.mxu0
    %v2428 = vadd.f32 %v2355, %v2427
    %v2429 = vpop.f32.mrf.mxu0
    %v2430 = vadd.f32 %v2357, %v2429
    %v2431 = vpop.f32.mrf.mxu0
    %v2432 = vadd.f32 %v2359, %v2431
    %2433 = vmatprep.mubr.bf16.mxu0 0
    %2434 = vmatmul.mubr.bf16.gmra.mxu0 %v421
    %v2435 = vpop.f32.mrf.mxu0
    %v2436 = vadd.f32 %v2363, %v2435
    %v2437 = vpop.f32.mrf.mxu0
    %v2438 = vadd.f32 %v2365, %v2437
    %v2439 = vpop.f32.mrf.mxu0
    %v2440 = vadd.f32 %v2367, %v2439
    %v2441 = vpop.f32.mrf.mxu0
    %v2442 = vadd.f32 %v2369, %v2441
    %2443 = vmatprep.mubr.bf16.mxu0 0
    %2444 = vmatmul.mubr.bf16.gmra.mxu0 %v424
    %v2445 = vpop.f32.mrf.mxu0
    %v2446 = vadd.f32 %v2373, %v2445
    %v2447 = vpop.f32.mrf.mxu0
    %v2448 = vadd.f32 %v2375, %v2447
    %v2449 = vpop.f32.mrf.mxu0
    %v2450 = vadd.f32 %v2377, %v2449
    %v2451 = vpop.f32.mrf.mxu0
    %v2452 = vadd.f32 %v2379, %v2451
    %2453 = vmatprep.mubr.bf16.mxu0 0
    %2454 = vmatmul.mubr.bf16.gmra.mxu0 %v427
    %v2455 = vpop.f32.mrf.mxu0
    %v2456 = vadd.f32 %v2383, %v2455
    %v2457 = vpop.f32.mrf.mxu0
    %v2458 = vadd.f32 %v2385, %v2457
    %v2459 = vpop.f32.mrf.mxu0
    %v2460 = vadd.f32 %v2387, %v2459
    %v2461 = vpop.f32.mrf.mxu0
    %v2462 = vadd.f32 %v2389, %v2461
    %2463 = vdwg.mxu0
    %2464 = vmatprep.subr.bf16.mxu0 %v1397
    %2465 = vmatpush1.bf16.msra.mxu0 %v1396
    %2466 = vmatprep.subr.bf16.mxu0 %v1385
    %2467 = vmatpush1.bf16.msra.mxu0 %v1384
    %2468 = vmatprep.subr.bf16.mxu0 %v1373
    %2469 = vmatpush1.bf16.msra.mxu0 %v1372
    %2470 = vmatprep.subr.bf16.mxu0 %v1361
    %2471 = vmatpush1.bf16.msra.mxu0 %v1360
    %2472 = vmatprep.subr.bf16.mxu0 %v1349
    %2473 = vmatpush1.bf16.msra.mxu0 %v1348
    %2474 = vmatprep.subr.bf16.mxu0 %v1337
    %2475 = vmatpush1.bf16.msra.mxu0 %v1336
    %2476 = vmatprep.subr.bf16.mxu0 %v1325
    %2477 = vmatpush1.bf16.msra.mxu0 %v1324
    %2478 = vmatprep.subr.bf16.mxu0 %v1313
    %2479 = vmatpush1.bf16.msra.mxu0 %v1312
    %2480 = vmatprep.subr.bf16.mxu0 %v1493
    %2481 = vmatpush2.bf16.msra.mxu0 %v1492
    %2482 = vmatprep.subr.bf16.mxu0 %v1481
    %2483 = vmatpush2.bf16.msra.mxu0 %v1480
    %2484 = vmatprep.subr.bf16.mxu0 %v1469
    %2485 = vmatpush2.bf16.msra.mxu0 %v1468
    %2486 = vmatprep.subr.bf16.mxu0 %v1457
    %2487 = vmatpush2.bf16.msra.mxu0 %v1456
    %2488 = vmatprep.subr.bf16.mxu0 %v1445
    %2489 = vmatpush2.bf16.msra.mxu0 %v1444
    %2490 = vmatprep.subr.bf16.mxu0 %v1433
    %2491 = vmatpush2.bf16.msra.mxu0 %v1432
    %2492 = vmatprep.subr.bf16.mxu0 %v1421
    %2493 = vmatpush2.bf16.msra.mxu0 %v1420
    %2494 = vmatprep.subr.bf16.mxu0 %v1409
    %2495 = vmatpush2.bf16.msra.mxu0 %v1408
    %2496 = vmatprep.mubr.bf16.mxu0 %v417
    %2497 = vmatmul.mubr.bf16.gmra.mxu0 %v416
    %v2498 = vpop.f32.mrf.mxu0
    %v2499 = vadd.f32 0.0, %v2498
    %v2500 = vpop.f32.mrf.mxu0
    %v2501 = vadd.f32 0.0, %v2500
    %v2502 = vpop.f32.mrf.mxu0
    %v2503 = vadd.f32 0.0, %v2502
    %v2504 = vpop.f32.mrf.mxu0
    %v2505 = vadd.f32 0.0, %v2504
    %2506 = vmatprep.mubr.bf16.mxu0 %v420
    %2507 = vmatmul.mubr.bf16.gmra.mxu0 %v419
    %v2508 = vpop.f32.mrf.mxu0
    %v2509 = vadd.f32 0.0, %v2508
    %v2510 = vpop.f32.mrf.mxu0
    %v2511 = vadd.f32 0.0, %v2510
    %v2512 = vpop.f32.mrf.mxu0
    %v2513 = vadd.f32 0.0, %v2512
    %v2514 = vpop.f32.mrf.mxu0
    %v2515 = vadd.f32 0.0, %v2514
    %2516 = vmatprep.mubr.bf16.mxu0 %v423
    %2517 = vmatmul.mubr.bf16.gmra.mxu0 %v422
    %v2518 = vpop.f32.mrf.mxu0
    %v2519 = vadd.f32 0.0, %v2518
    %v2520 = vpop.f32.mrf.mxu0
    %v2521 = vadd.f32 0.0, %v2520
    %v2522 = vpop.f32.mrf.mxu0
    %v2523 = vadd.f32 0.0, %v2522
    %v2524 = vpop.f32.mrf.mxu0
    %v2525 = vadd.f32 0.0, %v2524
    %2526 = vmatprep.mubr.bf16.mxu0 %v426
    %2527 = vmatmul.mubr.bf16.gmra.mxu0 %v425
    %v2528 = vpop.f32.mrf.mxu0
    %v2529 = vadd.f32 0.0, %v2528
    %v2530 = vpop.f32.mrf.mxu0
    %v2531 = vadd.f32 0.0, %v2530
    %v2532 = vpop.f32.mrf.mxu0
    %v2533 = vadd.f32 0.0, %v2532
    %v2534 = vpop.f32.mrf.mxu0
    %v2535 = vadd.f32 0.0, %v2534
    %2536 = vdwg.mxu0
    %2537 = vmatprep.subr.bf16.mxu0 %v1589
    %2538 = vmatpush1.bf16.msra.mxu0 %v1588
    %2539 = vmatprep.subr.bf16.mxu0 %v1577
    %2540 = vmatpush1.bf16.msra.mxu0 %v1576
    %2541 = vmatprep.subr.bf16.mxu0 %v1565
    %2542 = vmatpush1.bf16.msra.mxu0 %v1564
    %2543 = vmatprep.subr.bf16.mxu0 %v1553
    %2544 = vmatpush1.bf16.msra.mxu0 %v1552
    %2545 = vmatprep.subr.bf16.mxu0 %v1541
    %2546 = vmatpush1.bf16.msra.mxu0 %v1540
    %2547 = vmatprep.subr.bf16.mxu0 %v1529
    %2548 = vmatpush1.bf16.msra.mxu0 %v1528
    %2549 = vmatprep.subr.bf16.mxu0 %v1517
    %2550 = vmatpush1.bf16.msra.mxu0 %v1516
    %2551 = vmatprep.subr.bf16.mxu0 %v1505
    %2552 = vmatpush1.bf16.msra.mxu0 %v1504
    %2553 = vmatprep.subr.bf16.mxu0 0
    %2554 = vmatpush2.bf16.msra.mxu0 0
    %2555 = vmatprep.subr.bf16.mxu0 0
    %2556 = vmatpush2.bf16.msra.mxu0 0
    %2557 = vmatprep.subr.bf16.mxu0 0
    %2558 = vmatpush2.bf16.msra.mxu0 0
    %2559 = vmatprep.subr.bf16.mxu0 0
    %2560 = vmatpush2.bf16.msra.mxu0 0
    %2561 = vmatprep.subr.bf16.mxu0 0
    %2562 = vmatpush2.bf16.msra.mxu0 0
    %2563 = vmatprep.subr.bf16.mxu0 0
    %2564 = vmatpush2.bf16.msra.mxu0 0
    %2565 = vmatprep.subr.bf16.mxu0 0
    %2566 = vmatpush2.bf16.msra.mxu0 0
    %2567 = vmatprep.subr.bf16.mxu0 0
    %2568 = vmatpush2.bf16.msra.mxu0 0
    %2569 = vmatprep.mubr.bf16.mxu0 0
    %2570 = vmatmul.mubr.bf16.gmra.mxu0 %v418
    %v2571 = vpop.f32.mrf.mxu0
    %v2572 = vadd.f32 %v2499, %v2571
    %v2573 = vpop.f32.mrf.mxu0
    %v2574 = vadd.f32 %v2501, %v2573
    %v2575 = vpop.f32.mrf.mxu0
    %v2576 = vadd.f32 %v2503, %v2575
    %v2577 = vpop.f32.mrf.mxu0
    %v2578 = vadd.f32 %v2505, %v2577
    %2579 = vmatprep.mubr.bf16.mxu0 0
    %2580 = vmatmul.mubr.bf16.gmra.mxu0 %v421
    %v2581 = vpop.f32.mrf.mxu0
    %v2582 = vadd.f32 %v2509, %v2581
    %v2583 = vpop.f32.mrf.mxu0
    %v2584 = vadd.f32 %v2511, %v2583
    %v2585 = vpop.f32.mrf.mxu0
    %v2586 = vadd.f32 %v2513, %v2585
    %v2587 = vpop.f32.mrf.mxu0
    %v2588 = vadd.f32 %v2515, %v2587
    %2589 = vmatprep.mubr.bf16.mxu0 0
    %2590 = vmatmul.mubr.bf16.gmra.mxu0 %v424
    %v2591 = vpop.f32.mrf.mxu0
    %v2592 = vadd.f32 %v2519, %v2591
    %v2593 = vpop.f32.mrf.mxu0
    %v2594 = vadd.f32 %v2521, %v2593
    %v2595 = vpop.f32.mrf.mxu0
    %v2596 = vadd.f32 %v2523, %v2595
    %v2597 = vpop.f32.mrf.mxu0
    %v2598 = vadd.f32 %v2525, %v2597
    %2599 = vmatprep.mubr.bf16.mxu0 0
    %2600 = vmatmul.mubr.bf16.gmra.mxu0 %v427
    %v2601 = vpop.f32.mrf.mxu0
    %v2602 = vadd.f32 %v2529, %v2601
    %v2603 = vpop.f32.mrf.mxu0
    %v2604 = vadd.f32 %v2531, %v2603
    %v2605 = vpop.f32.mrf.mxu0
    %v2606 = vadd.f32 %v2533, %v2605
    %v2607 = vpop.f32.mrf.mxu0
    %v2608 = vadd.f32 %v2535, %v2607
    %2609 = vdwg.mxu0
    %2610 = vmatprep.subr.bf16.mxu0 %v1399
    %2611 = vmatpush1.bf16.msra.mxu0 %v1398
    %2612 = vmatprep.subr.bf16.mxu0 %v1387
    %2613 = vmatpush1.bf16.msra.mxu0 %v1386
    %2614 = vmatprep.subr.bf16.mxu0 %v1375
    %2615 = vmatpush1.bf16.msra.mxu0 %v1374
    %2616 = vmatprep.subr.bf16.mxu0 %v1363
    %2617 = vmatpush1.bf16.msra.mxu0 %v1362
    %2618 = vmatprep.subr.bf16.mxu0 %v1351
    %2619 = vmatpush1.bf16.msra.mxu0 %v1350
    %2620 = vmatprep.subr.bf16.mxu0 %v1339
    %2621 = vmatpush1.bf16.msra.mxu0 %v1338
    %2622 = vmatprep.subr.bf16.mxu0 %v1327
    %2623 = vmatpush1.bf16.msra.mxu0 %v1326
    %2624 = vmatprep.subr.bf16.mxu0 %v1315
    %2625 = vmatpush1.bf16.msra.mxu0 %v1314
    %2626 = vmatprep.subr.bf16.mxu0 %v1495
    %2627 = vmatpush2.bf16.msra.mxu0 %v1494
    %2628 = vmatprep.subr.bf16.mxu0 %v1483
    %2629 = vmatpush2.bf16.msra.mxu0 %v1482
    %2630 = vmatprep.subr.bf16.mxu0 %v1471
    %2631 = vmatpush2.bf16.msra.mxu0 %v1470
    %2632 = vmatprep.subr.bf16.mxu0 %v1459
    %2633 = vmatpush2.bf16.msra.mxu0 %v1458
    %2634 = vmatprep.subr.bf16.mxu0 %v1447
    %2635 = vmatpush2.bf16.msra.mxu0 %v1446
    %2636 = vmatprep.subr.bf16.mxu0 %v1435
    %2637 = vmatpush2.bf16.msra.mxu0 %v1434
    %2638 = vmatprep.subr.bf16.mxu0 %v1423
    %2639 = vmatpush2.bf16.msra.mxu0 %v1422
    %2640 = vmatprep.subr.bf16.mxu0 %v1411
    %2641 = vmatpush2.bf16.msra.mxu0 %v1410
    %2642 = vmatprep.mubr.bf16.mxu0 %v417
    %2643 = vmatmul.mubr.bf16.gmra.mxu0 %v416
    %v2644 = vpop.f32.mrf.mxu0
    %v2645 = vadd.f32 0.0, %v2644
    %v2646 = vpop.f32.mrf.mxu0
    %v2647 = vadd.f32 0.0, %v2646
    %v2648 = vpop.f32.mrf.mxu0
    %v2649 = vadd.f32 0.0, %v2648
    %v2650 = vpop.f32.mrf.mxu0
    %v2651 = vadd.f32 0.0, %v2650
    %2652 = vmatprep.mubr.bf16.mxu0 %v420
    %2653 = vmatmul.mubr.bf16.gmra.mxu0 %v419
    %v2654 = vpop.f32.mrf.mxu0
    %v2655 = vadd.f32 0.0, %v2654
    %v2656 = vpop.f32.mrf.mxu0
    %v2657 = vadd.f32 0.0, %v2656
    %v2658 = vpop.f32.mrf.mxu0
    %v2659 = vadd.f32 0.0, %v2658
    %v2660 = vpop.f32.mrf.mxu0
    %v2661 = vadd.f32 0.0, %v2660
    %2662 = vmatprep.mubr.bf16.mxu0 %v423
    %2663 = vmatmul.mubr.bf16.gmra.mxu0 %v422
    %v2664 = vpop.f32.mrf.mxu0
    %v2665 = vadd.f32 0.0, %v2664
    %v2666 = vpop.f32.mrf.mxu0
    %v2667 = vadd.f32 0.0, %v2666
    %v2668 = vpop.f32.mrf.mxu0
    %v2669 = vadd.f32 0.0, %v2668
    %v2670 = vpop.f32.mrf.mxu0
    %v2671 = vadd.f32 0.0, %v2670
    %2672 = vmatprep.mubr.bf16.mxu0 %v426
    %2673 = vmatmul.mubr.bf16.gmra.mxu0 %v425
    %v2674 = vpop.f32.mrf.mxu0
    %v2675 = vadd.f32 0.0, %v2674
    %v2676 = vpop.f32.mrf.mxu0
    %v2677 = vadd.f32 0.0, %v2676
    %v2678 = vpop.f32.mrf.mxu0
    %v2679 = vadd.f32 0.0, %v2678
    %v2680 = vpop.f32.mrf.mxu0
    %v2681 = vadd.f32 0.0, %v2680
    %2682 = vdwg.mxu0
    %2683 = vmatprep.subr.bf16.mxu0 %v1591
    %2684 = vmatpush1.bf16.msra.mxu0 %v1590
    %2685 = vmatprep.subr.bf16.mxu0 %v1579
    %2686 = vmatpush1.bf16.msra.mxu0 %v1578
    %2687 = vmatprep.subr.bf16.mxu0 %v1567
    %2688 = vmatpush1.bf16.msra.mxu0 %v1566
    %2689 = vmatprep.subr.bf16.mxu0 %v1555
    %2690 = vmatpush1.bf16.msra.mxu0 %v1554
    %2691 = vmatprep.subr.bf16.mxu0 %v1543
    %2692 = vmatpush1.bf16.msra.mxu0 %v1542
    %2693 = vmatprep.subr.bf16.mxu0 %v1531
    %2694 = vmatpush1.bf16.msra.mxu0 %v1530
    %2695 = vmatprep.subr.bf16.mxu0 %v1519
    %2696 = vmatpush1.bf16.msra.mxu0 %v1518
    %2697 = vmatprep.subr.bf16.mxu0 %v1507
    %2698 = vmatpush1.bf16.msra.mxu0 %v1506
    %2699 = vmatprep.subr.bf16.mxu0 0
    %2700 = vmatpush2.bf16.msra.mxu0 0
    %2701 = vmatprep.subr.bf16.mxu0 0
    %2702 = vmatpush2.bf16.msra.mxu0 0
    %2703 = vmatprep.subr.bf16.mxu0 0
    %2704 = vmatpush2.bf16.msra.mxu0 0
    %2705 = vmatprep.subr.bf16.mxu0 0
    %2706 = vmatpush2.bf16.msra.mxu0 0
    %2707 = vmatprep.subr.bf16.mxu0 0
    %2708 = vmatpush2.bf16.msra.mxu0 0
    %2709 = vmatprep.subr.bf16.mxu0 0
    %2710 = vmatpush2.bf16.msra.mxu0 0
    %2711 = vmatprep.subr.bf16.mxu0 0
    %2712 = vmatpush2.bf16.msra.mxu0 0
    %2713 = vmatprep.subr.bf16.mxu0 0
    %2714 = vmatpush2.bf16.msra.mxu0 0
    %2715 = vmatprep.mubr.bf16.mxu0 0
    %2716 = vmatmul.mubr.bf16.gmra.mxu0 %v418
    %v2717 = vpop.f32.mrf.mxu0
    %v2718 = vadd.f32 %v2645, %v2717
    %v2719 = vpop.f32.mrf.mxu0
    %v2720 = vadd.f32 %v2647, %v2719
    %v2721 = vpop.f32.mrf.mxu0
    %v2722 = vadd.f32 %v2649, %v2721
    %v2723 = vpop.f32.mrf.mxu0
    %v2724 = vadd.f32 %v2651, %v2723
    %2725 = vmatprep.mubr.bf16.mxu0 0
    %2726 = vmatmul.mubr.bf16.gmra.mxu0 %v421
    %v2727 = vpop.f32.mrf.mxu0
    %v2728 = vadd.f32 %v2655, %v2727
    %v2729 = vpop.f32.mrf.mxu0
    %v2730 = vadd.f32 %v2657, %v2729
    %v2731 = vpop.f32.mrf.mxu0
    %v2732 = vadd.f32 %v2659, %v2731
    %v2733 = vpop.f32.mrf.mxu0
    %v2734 = vadd.f32 %v2661, %v2733
    %2735 = vmatprep.mubr.bf16.mxu0 0
    %2736 = vmatmul.mubr.bf16.gmra.mxu0 %v424
    %v2737 = vpop.f32.mrf.mxu0
    %v2738 = vadd.f32 %v2665, %v2737
    %v2739 = vpop.f32.mrf.mxu0
    %v2740 = vadd.f32 %v2667, %v2739
    %v2741 = vpop.f32.mrf.mxu0
    %v2742 = vadd.f32 %v2669, %v2741
    %v2743 = vpop.f32.mrf.mxu0
    %v2744 = vadd.f32 %v2671, %v2743
    %2745 = vmatprep.mubr.bf16.mxu0 0
    %2746 = vmatmul.mubr.bf16.gmra.mxu0 %v427
    %v2747 = vpop.f32.mrf.mxu0
    %v2748 = vadd.f32 %v2675, %v2747
    %v2749 = vpop.f32.mrf.mxu0
    %v2750 = vadd.f32 %v2677, %v2749
    %v2751 = vpop.f32.mrf.mxu0
    %v2752 = vadd.f32 %v2679, %v2751
    %v2753 = vpop.f32.mrf.mxu0
    %v2754 = vadd.f32 %v2681, %v2753
    %2755 = vdwg.mxu0
    %v2756 = vlaneseq
    %v2757 = vshrl.u32 %v2756, 7
    %v2758 = vadd.s32 %v2757, 8
    %v2759 = vadd.s32 %v2757, 16
    %v2760 = vadd.s32 %v2757, 24
    %v2761 = vlaneseq
    %v2762 = vand.u32 %v2761, 127
    %vm2763 = vcmp.ge.s32.totalorder %v2757, %v2762
    %vm2764 = vcmp.ge.s32.totalorder %v2758, %v2762
    %vm2765 = vcmp.ge.s32.totalorder %v2759, %v2762
    %vm2766 = vcmp.ge.s32.totalorder %v2760, %v2762
    %v2767 = vsel %vm2763, 0.0, -1e+30
    %v2768 = vsel %vm2764, 0.0, -1e+30
    %v2769 = vsel %vm2765, 0.0, -1e+30
    %v2770 = vsel %vm2766, 0.0, -1e+30
    %v2771 = vld [vmem:[#allocation8] sm:$0x7]
    %v2772 = vld [vmem:[#allocation7] sm:$0xff]
    %v2773 = vld [vmem:[#allocation7 + $0x8] sm:$0xf]
    %v2774 = vld [vmem:[#allocation7 + $0xc] sm:$0xff]
    %v2775 = vld [vmem:[#allocation7 + $0x14] sm:$0xf]
    %v2776 = vld [vmem:[#allocation7 + $0x18] sm:$0xff]
    %v2777 = vld [vmem:[#allocation7 + $0x20] sm:$0xf]
    %v2778 = vld [vmem:[#allocation7 + $0x24] sm:$0xff]
    %v2779 = vld [vmem:[#allocation7 + $0x2c] sm:$0xf]
    %v2780 = vld [vmem:[#allocation7 + $0x30] sm:$0xff]
    %v2781 = vld [vmem:[#allocation7 + $0x38] sm:$0xf]
    %v2782 = vld [vmem:[#allocation7 + $0x3c] sm:$0xff]
    %v2783 = vld [vmem:[#allocation7 + $0x44] sm:$0xf]
    %v2784 = vld [vmem:[#allocation7 + $0x48] sm:$0xff]
    %v2785 = vld [vmem:[#allocation7 + $0x50] sm:$0xf]
    %v2786 = vld [vmem:[#allocation7 + $0x54] sm:$0xff]
    %v2787 = vld [vmem:[#allocation7 + $0x5c] sm:$0xf]
    %v2788 = vld [vmem:[#allocation7 + $0x60] sm:$0xff]
    %v2789 = vld [vmem:[#allocation7 + $0x68] sm:$0xf]
    %v2790 = vld [vmem:[#allocation7 + $0x6c] sm:$0xff]
    %v2791 = vld [vmem:[#allocation7 + $0x74] sm:$0xf]
    %v2792 = vld [vmem:[#allocation7 + $0x78] sm:$0xff]
    %v2793 = vld [vmem:[#allocation7 + $0x80] sm:$0xf]
    %v2794 = vld [vmem:[#allocation7 + $0x84] sm:$0xff]
    %v2795 = vld [vmem:[#allocation7 + $0x8c] sm:$0xf]
    %v2796 = vld [vmem:[#allocation7 + $0x90] sm:$0xff]
    %v2797 = vld [vmem:[#allocation7 + $0x98] sm:$0xf]
    %v2798 = vld [vmem:[#allocation7 + $0x9c] sm:$0xff]
    %v2799 = vld [vmem:[#allocation7 + $0xa4] sm:$0xf]
    %v2800 = vld [vmem:[#allocation7 + $0xa8] sm:$0xff]
    %v2801 = vld [vmem:[#allocation7 + $0xb0] sm:$0xf]
    %v2802 = vld [vmem:[#allocation7 + $0xb4] sm:$0xff]
    %v2803 = vld [vmem:[#allocation7 + $0xbc] sm:$0xf]
    %v2804 = vld [vmem:[#allocation7 + $0xc0] sm:$0xff]
    %v2805 = vld [vmem:[#allocation7 + $0xc8] sm:$0xf]
    %v2806 = vld [vmem:[#allocation7 + $0xcc] sm:$0xff]
    %v2807 = vld [vmem:[#allocation7 + $0xd4] sm:$0xf]
    %v2808 = vld [vmem:[#allocation7 + $0xd8] sm:$0xff]
    %v2809 = vld [vmem:[#allocation7 + $0xe0] sm:$0xf]
    %v2810 = vld [vmem:[#allocation7 + $0xe4] sm:$0xff]
    %v2811 = vld [vmem:[#allocation7 + $0xec] sm:$0xf]
    %v2812 = vld [vmem:[#allocation7 + $0xf0] sm:$0xff]
    %v2813 = vld [vmem:[#allocation7 + $0xf8] sm:$0xf]
    %v2814 = vld [vmem:[#allocation7 + $0xfc] sm:$0xff]
    %v2815 = vld [vmem:[#allocation7 + $0x104] sm:$0xf]
    %v2816 = vld [vmem:[#allocation7 + $0x108] sm:$0xff]
    %v2817 = vld [vmem:[#allocation7 + $0x110] sm:$0xf]
    %v2818 = vld [vmem:[#allocation7 + $0x114] sm:$0xff]
    %v2819 = vld [vmem:[#allocation7 + $0x11c] sm:$0xf]
    %v2820 = vld [vmem:[#allocation7 + $0x120] sm:$0xff]
    %v2821 = vld [vmem:[#allocation7 + $0x128] sm:$0xf]
    %v2822 = vld [vmem:[#allocation7 + $0x12c] sm:$0xff]
    %v2823 = vld [vmem:[#allocation7 + $0x134] sm:$0xf]
    %v2824 = vld [vmem:[#allocation7 + $0x138] sm:$0xff]
    %v2825 = vld [vmem:[#allocation7 + $0x140] sm:$0xf]
    %v2826 = vld [vmem:[#allocation7 + $0x144] sm:$0xff]
    %v2827 = vld [vmem:[#allocation7 + $0x14c] sm:$0xf]
    %v2828 = vld [vmem:[#allocation7 + $0x150] sm:$0xff]
    %v2829 = vld [vmem:[#allocation7 + $0x158] sm:$0xf]
    %v2830 = vld [vmem:[#allocation7 + $0x15c] sm:$0xff]
    %v2831 = vld [vmem:[#allocation7 + $0x164] sm:$0xf]
    %v2832 = vld [vmem:[#allocation7 + $0x168] sm:$0xff]
    %v2833 = vld [vmem:[#allocation7 + $0x170] sm:$0xf]
    %v2834 = vld [vmem:[#allocation7 + $0x174] sm:$0xff]
    %v2835 = vld [vmem:[#allocation7 + $0x17c] sm:$0xf]
    %v2836 = vld [vmem:[#allocation7 + $0x180] sm:$0xff]
    %v2837 = vld [vmem:[#allocation7 + $0x188] sm:$0xf]
    %v2838 = vld [vmem:[#allocation7 + $0x18c] sm:$0xff]
    %v2839 = vld [vmem:[#allocation7 + $0x194] sm:$0xf]
    %v2840 = vld [vmem:[#allocation7 + $0x198] sm:$0xff]
    %v2841 = vld [vmem:[#allocation7 + $0x1a0] sm:$0xf]
    %v2842 = vld [vmem:[#allocation7 + $0x1a4] sm:$0xff]
    %v2843 = vld [vmem:[#allocation7 + $0x1ac] sm:$0xf]
    %v2844 = vld [vmem:[#allocation7 + $0x1b0] sm:$0xff]
    %v2845 = vld [vmem:[#allocation7 + $0x1b8] sm:$0xf]
    %v2846 = vld [vmem:[#allocation7 + $0x1bc] sm:$0xff]
    %v2847 = vld [vmem:[#allocation7 + $0x1c4] sm:$0xf]
    %v2848 = vld [vmem:[#allocation7 + $0x1c8] sm:$0xff]
    %v2849 = vld [vmem:[#allocation7 + $0x1d0] sm:$0xf]
    %v2850 = vld [vmem:[#allocation7 + $0x1d4] sm:$0xff]
    %v2851 = vld [vmem:[#allocation7 + $0x1dc] sm:$0xf]
    %v2852 = vld [vmem:[#allocation7 + $0x1e0] sm:$0xff]
    %v2853 = vld [vmem:[#allocation7 + $0x1e8] sm:$0xf]
    %v2854 = vld [vmem:[#allocation7 + $0x1ec] sm:$0xff]
    %v2855 = vld [vmem:[#allocation7 + $0x1f4] sm:$0xf]
    %v2856 = vld [vmem:[#allocation7 + $0x1f8] sm:$0xff]
    %v2857 = vld [vmem:[#allocation7 + $0x200] sm:$0xf]
    %v2858 = vld [vmem:[#allocation7 + $0x204] sm:$0xff]
    %v2859 = vld [vmem:[#allocation7 + $0x20c] sm:$0xf]
    %v2860 = vld [vmem:[#allocation7 + $0x210] sm:$0xff]
    %v2861 = vld [vmem:[#allocation7 + $0x218] sm:$0xf]
    %v2862 = vld [vmem:[#allocation7 + $0x21c] sm:$0xff]
    %v2863 = vld [vmem:[#allocation7 + $0x224] sm:$0xf]
    %v2864 = vld [vmem:[#allocation7 + $0x228] sm:$0xff]
    %v2865 = vld [vmem:[#allocation7 + $0x230] sm:$0xf]
    %v2866 = vld [vmem:[#allocation7 + $0x234] sm:$0xff]
    %v2867 = vld [vmem:[#allocation7 + $0x23c] sm:$0xf]
    %v2868 = vld [vmem:[#allocation7 + $0x240] sm:$0xff]
    %v2869 = vld [vmem:[#allocation7 + $0x248] sm:$0xf]
    %v2870 = vld [vmem:[#allocation7 + $0x24c] sm:$0xff]
    %v2871 = vld [vmem:[#allocation7 + $0x254] sm:$0xf]
    %v2872 = vld [vmem:[#allocation7 + $0x258] sm:$0xff]
    %v2873 = vld [vmem:[#allocation7 + $0x260] sm:$0xf]
    %v2874 = vld [vmem:[#allocation7 + $0x264] sm:$0xff]
    %v2875 = vld [vmem:[#allocation7 + $0x26c] sm:$0xf]
    %v2876 = vld [vmem:[#allocation7 + $0x270] sm:$0xff]
    %v2877 = vld [vmem:[#allocation7 + $0x278] sm:$0xf]
    %v2878 = vld [vmem:[#allocation7 + $0x27c] sm:$0xff]
    %v2879 = vld [vmem:[#allocation7 + $0x284] sm:$0xf]
    %v2880 = vld [vmem:[#allocation7 + $0x288] sm:$0xff]
    %v2881 = vld [vmem:[#allocation7 + $0x290] sm:$0xf]
    %v2882 = vld [vmem:[#allocation7 + $0x294] sm:$0xff]
    %v2883 = vld [vmem:[#allocation7 + $0x29c] sm:$0xf]
    %v2884 = vld [vmem:[#allocation7 + $0x2a0] sm:$0xff]
    %v2885 = vld [vmem:[#allocation7 + $0x2a8] sm:$0xf]
    %v2886 = vld [vmem:[#allocation7 + $0x2ac] sm:$0xff]
    %v2887 = vld [vmem:[#allocation7 + $0x2b4] sm:$0xf]
    %v2888 = vld [vmem:[#allocation7 + $0x2b8] sm:$0xff]
    %v2889 = vld [vmem:[#allocation7 + $0x2c0] sm:$0xf]
    %v2890 = vld [vmem:[#allocation7 + $0x2c4] sm:$0xff]
    %v2891 = vld [vmem:[#allocation7 + $0x2cc] sm:$0xf]
    %v2892 = vld [vmem:[#allocation7 + $0x2d0] sm:$0xff]
    %v2893 = vld [vmem:[#allocation7 + $0x2d8] sm:$0xf]
    %v2894 = vld [vmem:[#allocation7 + $0x2dc] sm:$0xff]
    %v2895 = vld [vmem:[#allocation7 + $0x2e4] sm:$0xf]
    %v2896 = vld [vmem:[#allocation7 + $0x2e8] sm:$0xff]
    %v2897 = vld [vmem:[#allocation7 + $0x2f0] sm:$0xf]
    %v2898 = vld [vmem:[#allocation7 + $0x2f4] sm:$0xff]
    %v2899 = vld [vmem:[#allocation7 + $0x2fc] sm:$0xf]
    %2900 = vmatprep.subr.mxu0 0.0
    %2901 = vmatpush1.xpose.msra.mxu0 0.0
    %2902 = vmatprep.subr.mxu0 0.0
    %2903 = vmatpush1.xpose.msra.mxu0 0.0
    %2904 = vmatprep.subr.mxu0 0.0
    %2905 = vmatpush1.xpose.msra.mxu0 0.0
    %2906 = vmatprep.subr.mxu0 0.0
    %2907 = vmatpush1.xpose.msra.mxu0 0.0
    %2908 = vmatprep.subr.mxu0 0.0
    %2909 = vmatpush1.xpose.msra.mxu0 0.0
    %2910 = vmatprep.subr.mxu0 0.0
    %2911 = vmatpush1.xpose.msra.mxu0 0.0
    %2912 = vmatprep.subr.mxu0 0.0
    %2913 = vmatpush1.xpose.msra.mxu0 0.0
    %2914 = vmatprep.subr.mxu0 0.0
    %2915 = vmatpush1.xpose.msra.mxu0 0.0
    %2916 = vmatprep.subr.mxu0 0.0
    %2917 = vmatpush1.xpose.msra.mxu0 0.0
    %2918 = vmatprep.subr.mxu0 0.0
    %2919 = vmatpush1.xpose.msra.mxu0 0.0
    %2920 = vmatprep.subr.mxu0 0.0
    %2921 = vmatpush1.xpose.msra.mxu0 0.0
    %2922 = vmatprep.subr.mxu0 0.0
    %2923 = vmatpush1.xpose.msra.mxu0 0.0
    %2924 = vmatprep.subr.mxu0 0.0
    %2925 = vmatpush1.xpose.msra.mxu0 %v2294
    %2926 = vmatprep.subr.mxu0 0.0
    %2927 = vmatpush1.xpose.msra.mxu0 %v2290
    %2928 = vmatprep.subr.mxu0 0.0
    %2929 = vmatpush1.xpose.msra.mxu0 %v2284
    %2930 = vmatprep.subr.mxu0 0.0
    %2931 = vmatpush1.xpose.msra.mxu0 %v2280
    %2932 = vmatprep.subr.mxu0 0.0
    %2933 = vmatpush2.xpose.msra.mxu0 0.0
    %2934 = vmatprep.subr.mxu0 0.0
    %2935 = vmatpush2.xpose.msra.mxu0 0.0
    %2936 = vmatprep.subr.mxu0 0.0
    %2937 = vmatpush2.xpose.msra.mxu0 0.0
    %2938 = vmatprep.subr.mxu0 0.0
    %2939 = vmatpush2.xpose.msra.mxu0 0.0
    %2940 = vmatprep.subr.mxu0 0.0
    %2941 = vmatpush2.xpose.msra.mxu0 0.0
    %2942 = vmatprep.subr.mxu0 0.0
    %2943 = vmatpush2.xpose.msra.mxu0 0.0
    %2944 = vmatprep.subr.mxu0 0.0
    %2945 = vmatpush2.xpose.msra.mxu0 0.0
    %2946 = vmatprep.subr.mxu0 0.0
    %2947 = vmatpush2.xpose.msra.mxu0 0.0
    %2948 = vmatprep.subr.mxu0 0.0
    %2949 = vmatpush2.xpose.msra.mxu0 0.0
    %2950 = vmatprep.subr.mxu0 0.0
    %2951 = vmatpush2.xpose.msra.mxu0 0.0
    %2952 = vmatprep.subr.mxu0 0.0
    %2953 = vmatpush2.xpose.msra.mxu0 0.0
    %2954 = vmatprep.subr.mxu0 0.0
    %2955 = vmatpush2.xpose.msra.mxu0 0.0
    %2956 = vmatprep.subr.mxu0 0.0
    %2957 = vmatpush2.xpose.msra.mxu0 0.0
    %2958 = vmatprep.subr.mxu0 0.0
    %2959 = vmatpush2.xpose.msra.mxu0 0.0
    %2960 = vmatprep.subr.mxu0 0.0
    %2961 = vmatpush2.xpose.msra.mxu0 0.0
    %2962 = vmatprep.subr.mxu0 0.0
    %2963 = vmatpush2.xpose.msra.mxu0 0.0
    %2964 = vmatprep.mubr.f32.mxu0 0.0
    %2965 = vmatmul.mubr.f32.gmra.mxu0 %v1988
    %v2966 = vpop.f32.mrf.mxu0
    %v2967 = vadd.f32 %v2767, %v2966
    %v2968 = vpop.f32.mrf.mxu0
    %2969 = vmatprep.mubr.f32.mxu0 0.0
    %2970 = vmatmul.mubr.f32.gmra.mxu0 %v1992
    %v2971 = vpop.f32.mrf.mxu0
    %v2972 = vadd.f32 %v2768, %v2971
    %v2973 = vpop.f32.mrf.mxu0
    %2974 = vmatprep.mubr.f32.mxu0 0.0
    %2975 = vmatmul.mubr.f32.gmra.mxu0 %v1998
    %v2976 = vpop.f32.mrf.mxu0
    %v2977 = vadd.f32 %v2769, %v2976
    %v2978 = vpop.f32.mrf.mxu0
    %2979 = vmatprep.mubr.f32.mxu0 0.0
    %2980 = vmatmul.mubr.f32.gmra.mxu0 %v2002
    %v2981 = vpop.f32.mrf.mxu0
    %v2982 = vadd.f32 %v2770, %v2981
    %v2983 = vpop.f32.mrf.mxu0
    %2984 = vdwg.mxu0
    %vm2985 = vcmask 261120
    %v2986 = vsel %vm2985, %v2967, -inf
    %2987 = vmax.xlane.f32.xlu0 %v2986
    %v2988 = vpop.xlane.xlu0 %2987
    %v2989 = vsel %vm2985, %v2972, -inf
    %2990 = vmax.xlane.f32.xlu0 %v2989
    %v2991 = vpop.xlane.xlu0 %2990
    %v2992 = vsel %vm2985, %v2977, -inf
    %2993 = vmax.xlane.f32.xlu0 %v2992
    %v2994 = vpop.xlane.xlu0 %2993
    %v2995 = vsel %vm2985, %v2982, -inf
    %2996 = vmax.xlane.f32.xlu0 %v2995
    %v2997 = vpop.xlane.xlu0 %2996
    %v2998 = vsub.f32 %v2967, %v2988
    %v2999 = vsub.f32 %v2972, %v2991
    %v3000 = vsub.f32 %v2977, %v2994
    %v3001 = vsub.f32 %v2982, %v2997
    %v3002 = vmul.f32 %v2998, 1.442695
    %v3003 = vpow.pop %v3002
    %v3004 = vmul.f32 %v2999, 1.442695
    %v3005 = vpow.pop %v3004
    %v3006 = vmul.f32 %v3000, 1.442695
    %v3007 = vpow.pop %v3006
    %v3008 = vmul.f32 %v3001, 1.442695
    %v3009 = vpow.pop %v3008
    %v3010 = vsel %vm2985, %v3003, 0.0
    %3011 = vadd.xlane.f32.xlu0 %v3010
    %v3012 = vpop.xlane.xlu0 %3011
    %v3013 = vsel %vm2985, %v3005, 0.0
    %3014 = vadd.xlane.f32.xlu0 %v3013
    %v3015 = vpop.xlane.xlu0 %3014
    %v3016 = vsel %vm2985, %v3007, 0.0
    %3017 = vadd.xlane.f32.xlu0 %v3016
    %v3018 = vpop.xlane.xlu0 %3017
    %v3019 = vsel %vm2985, %v3009, 0.0
    %3020 = vadd.xlane.f32.xlu0 %v3019
    %v3021 = vpop.xlane.xlu0 %3020
    %v3022 = vrcp.pop %v3012
    %v3023 = vrcp.pop %v3015
    %v3024 = vrcp.pop %v3018
    %v3025 = vrcp.pop %v3021
    %v3026 = vmul.f32 %v3003, %v3022
    %v3027 = vmul.f32 %v3005, %v3023
    %v3028 = vmul.f32 %v3007, %v3024
    %v3029 = vmul.f32 %v3009, %v3025
    %v3031 = vsel %vm2985, %v3026, 0
    %v3034 = vsel %vm2985, %v3027, 0
    %v3037 = vsel %vm2985, %v3028, 0
    %v3040 = vsel %vm2985, %v3029, 0
    %3042 = vmatprep.subr.mxu0 0.0
    %3043 = vmatpush1.msra.mxu0 0.0
    %3044 = vmatprep.subr.mxu0 0.0
    %3045 = vmatpush1.msra.mxu0 0.0
    %3046 = vmatprep.subr.mxu0 0.0
    %3047 = vmatpush1.msra.mxu0 0.0
    %3048 = vmatprep.subr.mxu0 0.0
    %3049 = vmatpush1.msra.mxu0 0.0
    %3050 = vmatprep.subr.mxu0 0.0
    %3051 = vmatpush1.msra.mxu0 0.0
    %3052 = vmatprep.subr.mxu0 0.0
    %3053 = vmatpush1.msra.mxu0 0.0
    %3054 = vmatprep.subr.mxu0 0.0
    %3055 = vmatpush1.msra.mxu0 0.0
    %3056 = vmatprep.subr.mxu0 0.0
    %3057 = vmatpush1.msra.mxu0 0.0
    %3058 = vmatprep.subr.mxu0 0.0
    %3059 = vmatpush1.msra.mxu0 0.0
    %3060 = vmatprep.subr.mxu0 0.0
    %3061 = vmatpush1.msra.mxu0 0.0
    %3062 = vmatprep.subr.mxu0 0.0
    %3063 = vmatpush1.msra.mxu0 0.0
    %3064 = vmatprep.subr.mxu0 0.0
    %3065 = vmatpush1.msra.mxu0 0.0
    %3066 = vmatprep.subr.mxu0 0.0
    %3067 = vmatpush1.msra.mxu0 %v2586
    %3068 = vmatprep.subr.mxu0 0.0
    %3069 = vmatpush1.msra.mxu0 %v2582
    %3070 = vmatprep.subr.mxu0 0.0
    %3071 = vmatpush1.msra.mxu0 %v2576
    %3072 = vmatprep.subr.mxu0 0.0
    %3073 = vmatpush1.msra.mxu0 %v2572
    %3074 = vmatprep.subr.mxu0 0.0
    %3075 = vmatpush2.msra.mxu0 0.0
    %3076 = vmatprep.subr.mxu0 0.0
    %3077 = vmatpush2.msra.mxu0 0.0
    %3078 = vmatprep.subr.mxu0 0.0
    %3079 = vmatpush2.msra.mxu0 0.0
    %3080 = vmatprep.subr.mxu0 0.0
    %3081 = vmatpush2.msra.mxu0 0.0
    %3082 = vmatprep.subr.mxu0 0.0
    %3083 = vmatpush2.msra.mxu0 0.0
    %3084 = vmatprep.subr.mxu0 0.0
    %3085 = vmatpush2.msra.mxu0 0.0
    %3086 = vmatprep.subr.mxu0 0.0
    %3087 = vmatpush2.msra.mxu0 0.0
    %3088 = vmatprep.subr.mxu0 0.0
    %3089 = vmatpush2.msra.mxu0 0.0
    %3090 = vmatprep.subr.mxu0 0.0
    %3091 = vmatpush2.msra.mxu0 0.0
    %3092 = vmatprep.subr.mxu0 0.0
    %3093 = vmatpush2.msra.mxu0 0.0
    %3094 = vmatprep.subr.mxu0 0.0
    %3095 = vmatpush2.msra.mxu0 0.0
    %3096 = vmatprep.subr.mxu0 0.0
    %3097 = vmatpush2.msra.mxu0 0.0
    %3098 = vmatprep.subr.mxu0 0.0
    %3099 = vmatpush2.msra.mxu0 0.0
    %3100 = vmatprep.subr.mxu0 0.0
    %3101 = vmatpush2.msra.mxu0 0.0
    %3102 = vmatprep.subr.mxu0 0.0
    %3103 = vmatpush2.msra.mxu0 0.0
    %3104 = vmatprep.subr.mxu0 0.0
    %3105 = vmatpush2.msra.mxu0 0.0
    %3106 = vmatprep.mubr.f32.mxu0 0.0
    %3107 = vmatmul.mubr.f32.gmra.mxu0 %v3031
    %v3108 = vpop.f32.mrf.mxu0
    %v3109 = vadd.f32 0.0, %v3108
    %v3110 = vpop.f32.mrf.mxu0
    %3111 = vmatprep.mubr.f32.mxu0 0.0
    %3112 = vmatmul.mubr.f32.gmra.mxu0 %v3034
    %v3113 = vpop.f32.mrf.mxu0
    %v3114 = vadd.f32 0.0, %v3113
    %v3115 = vpop.f32.mrf.mxu0
    %3116 = vmatprep.mubr.f32.mxu0 0.0
    %3117 = vmatmul.mubr.f32.gmra.mxu0 %v3037
    %v3118 = vpop.f32.mrf.mxu0
    %v3119 = vadd.f32 0.0, %v3118
    %v3120 = vpop.f32.mrf.mxu0
    %3121 = vmatprep.mubr.f32.mxu0 0.0
    %3122 = vmatmul.mubr.f32.gmra.mxu0 %v3040
    %v3123 = vpop.f32.mrf.mxu0
    %v3124 = vadd.f32 0.0, %v3123
    %v3125 = vpop.f32.mrf.mxu0
    %3126 = vdwg.mxu0
    %v3127 = vpack.c.bf16 %v3114, %v3109
    %v3128 = vpack.c.bf16 %v3124, %v3119
    %3129 = vmatprep.subr.mxu0 0.0
    %3130 = vmatpush1.xpose.msra.mxu0 0.0
    %3131 = vmatprep.subr.mxu0 0.0
    %3132 = vmatpush1.xpose.msra.mxu0 0.0
    %3133 = vmatprep.subr.mxu0 0.0
    %3134 = vmatpush1.xpose.msra.mxu0 0.0
    %3135 = vmatprep.subr.mxu0 0.0
    %3136 = vmatpush1.xpose.msra.mxu0 0.0
    %3137 = vmatprep.subr.mxu0 0.0
    %3138 = vmatpush1.xpose.msra.mxu0 0.0
    %3139 = vmatprep.subr.mxu0 0.0
    %3140 = vmatpush1.xpose.msra.mxu0 0.0
    %3141 = vmatprep.subr.mxu0 0.0
    %3142 = vmatpush1.xpose.msra.mxu0 0.0
    %3143 = vmatprep.subr.mxu0 0.0
    %3144 = vmatpush1.xpose.msra.mxu0 0.0
    %3145 = vmatprep.subr.mxu0 0.0
    %3146 = vmatpush1.xpose.msra.mxu0 0.0
    %3147 = vmatprep.subr.mxu0 0.0
    %3148 = vmatpush1.xpose.msra.mxu0 0.0
    %3149 = vmatprep.subr.mxu0 0.0
    %3150 = vmatpush1.xpose.msra.mxu0 0.0
    %3151 = vmatprep.subr.mxu0 0.0
    %3152 = vmatpush1.xpose.msra.mxu0 0.0
    %3153 = vmatprep.subr.mxu0 0.0
    %3154 = vmatpush1.xpose.msra.mxu0 %v2296
    %3155 = vmatprep.subr.mxu0 0.0
    %3156 = vmatpush1.xpose.msra.mxu0 %v2292
    %3157 = vmatprep.subr.mxu0 0.0
    %3158 = vmatpush1.xpose.msra.mxu0 %v2286
    %3159 = vmatprep.subr.mxu0 0.0
    %3160 = vmatpush1.xpose.msra.mxu0 %v2282
    %3161 = vmatprep.subr.mxu0 0.0
    %3162 = vmatpush2.xpose.msra.mxu0 0.0
    %3163 = vmatprep.subr.mxu0 0.0
    %3164 = vmatpush2.xpose.msra.mxu0 0.0
    %3165 = vmatprep.subr.mxu0 0.0
    %3166 = vmatpush2.xpose.msra.mxu0 0.0
    %3167 = vmatprep.subr.mxu0 0.0
    %3168 = vmatpush2.xpose.msra.mxu0 0.0
    %3169 = vmatprep.subr.mxu0 0.0
    %3170 = vmatpush2.xpose.msra.mxu0 0.0
    %3171 = vmatprep.subr.mxu0 0.0
    %3172 = vmatpush2.xpose.msra.mxu0 0.0
    %3173 = vmatprep.subr.mxu0 0.0
    %3174 = vmatpush2.xpose.msra.mxu0 0.0
    %3175 = vmatprep.subr.mxu0 0.0
    %3176 = vmatpush2.xpose.msra.mxu0 0.0
    %3177 = vmatprep.subr.mxu0 0.0
    %3178 = vmatpush2.xpose.msra.mxu0 0.0
    %3179 = vmatprep.subr.mxu0 0.0
    %3180 = vmatpush2.xpose.msra.mxu0 0.0
    %3181 = vmatprep.subr.mxu0 0.0
    %3182 = vmatpush2.xpose.msra.mxu0 0.0
    %3183 = vmatprep.subr.mxu0 0.0
    %3184 = vmatpush2.xpose.msra.mxu0 0.0
    %3185 = vmatprep.subr.mxu0 0.0
    %3186 = vmatpush2.xpose.msra.mxu0 0.0
    %3187 = vmatprep.subr.mxu0 0.0
    %3188 = vmatpush2.xpose.msra.mxu0 0.0
    %3189 = vmatprep.subr.mxu0 0.0
    %3190 = vmatpush2.xpose.msra.mxu0 0.0
    %3191 = vmatprep.subr.mxu0 0.0
    %3192 = vmatpush2.xpose.msra.mxu0 0.0
    %3193 = vmatprep.mubr.f32.mxu0 0.0
    %3194 = vmatmul.mubr.f32.gmra.mxu0 %v1990
    %v3195 = vpop.f32.mrf.mxu0
    %v3196 = vadd.f32 %v2767, %v3195
    %v3197 = vpop.f32.mrf.mxu0
    %3198 = vmatprep.mubr.f32.mxu0 0.0
    %3199 = vmatmul.mubr.f32.gmra.mxu0 %v1994
    %v3200 = vpop.f32.mrf.mxu0
    %v3201 = vadd.f32 %v2768, %v3200
    %v3202 = vpop.f32.mrf.mxu0
    %3203 = vmatprep.mubr.f32.mxu0 0.0
    %3204 = vmatmul.mubr.f32.gmra.mxu0 %v2000
    %v3205 = vpop.f32.mrf.mxu0
    %v3206 = vadd.f32 %v2769, %v3205
    %v3207 = vpop.f32.mrf.mxu0
    %3208 = vmatprep.mubr.f32.mxu0 0.0
    %3209 = vmatmul.mubr.f32.gmra.mxu0 %v2004
    %v3210 = vpop.f32.mrf.mxu0
    %v3211 = vadd.f32 %v2770, %v3210
    %v3212 = vpop.f32.mrf.mxu0
    %3213 = vdwg.mxu0
    %v3214 = vsel %vm2985, %v3196, -inf
    %3215 = vmax.xlane.f32.xlu0 %v3214
    %v3216 = vpop.xlane.xlu0 %3215
    %v3217 = vsel %vm2985, %v3201, -inf
    %3218 = vmax.xlane.f32.xlu0 %v3217
    %v3219 = vpop.xlane.xlu0 %3218
    %v3220 = vsel %vm2985, %v3206, -inf
    %3221 = vmax.xlane.f32.xlu0 %v3220
    %v3222 = vpop.xlane.xlu0 %3221
    %v3223 = vsel %vm2985, %v3211, -inf
    %3224 = vmax.xlane.f32.xlu0 %v3223
    %v3225 = vpop.xlane.xlu0 %3224
    %v3226 = vsub.f32 %v3196, %v3216
    %v3227 = vsub.f32 %v3201, %v3219
    %v3228 = vsub.f32 %v3206, %v3222
    %v3229 = vsub.f32 %v3211, %v3225
    %v3230 = vmul.f32 %v3226, 1.442695
    %v3231 = vpow.pop %v3230
    %v3232 = vmul.f32 %v3227, 1.442695
    %v3233 = vpow.pop %v3232
    %v3234 = vmul.f32 %v3228, 1.442695
    %v3235 = vpow.pop %v3234
    %v3236 = vmul.f32 %v3229, 1.442695
    %v3237 = vpow.pop %v3236
    %v3238 = vsel %vm2985, %v3231, 0.0
    %3239 = vadd.xlane.f32.xlu0 %v3238
    %v3240 = vpop.xlane.xlu0 %3239
    %v3241 = vsel %vm2985, %v3233, 0.0
    %3242 = vadd.xlane.f32.xlu0 %v3241
    %v3243 = vpop.xlane.xlu0 %3242
    %v3244 = vsel %vm2985, %v3235, 0.0
    %3245 = vadd.xlane.f32.xlu0 %v3244
    %v3246 = vpop.xlane.xlu0 %3245
    %v3247 = vsel %vm2985, %v3237, 0.0
    %3248 = vadd.xlane.f32.xlu0 %v3247
    %v3249 = vpop.xlane.xlu0 %3248
    %v3250 = vrcp.pop %v3240
    %v3251 = vrcp.pop %v3243
    %v3252 = vrcp.pop %v3246
    %v3253 = vrcp.pop %v3249
    %v3254 = vmul.f32 %v3231, %v3250
    %v3255 = vmul.f32 %v3233, %v3251
    %v3256 = vmul.f32 %v3235, %v3252
    %v3257 = vmul.f32 %v3237, %v3253
    %v3259 = vsel %vm2985, %v3254, 0
    %v3262 = vsel %vm2985, %v3255, 0
    %v3265 = vsel %vm2985, %v3256, 0
    %v3268 = vsel %vm2985, %v3257, 0
    %3270 = vmatprep.subr.mxu0 0.0
    %3271 = vmatpush1.msra.mxu0 0.0
    %3272 = vmatprep.subr.mxu0 0.0
    %3273 = vmatpush1.msra.mxu0 0.0
    %3274 = vmatprep.subr.mxu0 0.0
    %3275 = vmatpush1.msra.mxu0 0.0
    %3276 = vmatprep.subr.mxu0 0.0
    %3277 = vmatpush1.msra.mxu0 0.0
    %3278 = vmatprep.subr.mxu0 0.0
    %3279 = vmatpush1.msra.mxu0 0.0
    %3280 = vmatprep.subr.mxu0 0.0
    %3281 = vmatpush1.msra.mxu0 0.0
    %3282 = vmatprep.subr.mxu0 0.0
    %3283 = vmatpush1.msra.mxu0 0.0
    %3284 = vmatprep.subr.mxu0 0.0
    %3285 = vmatpush1.msra.mxu0 0.0
    %3286 = vmatprep.subr.mxu0 0.0
    %3287 = vmatpush1.msra.mxu0 0.0
    %3288 = vmatprep.subr.mxu0 0.0
    %3289 = vmatpush1.msra.mxu0 0.0
    %3290 = vmatprep.subr.mxu0 0.0
    %3291 = vmatpush1.msra.mxu0 0.0
    %3292 = vmatprep.subr.mxu0 0.0
    %3293 = vmatpush1.msra.mxu0 0.0
    %3294 = vmatprep.subr.mxu0 0.0
    %3295 = vmatpush1.msra.mxu0 %v2588
    %3296 = vmatprep.subr.mxu0 0.0
    %3297 = vmatpush1.msra.mxu0 %v2584
    %3298 = vmatprep.subr.mxu0 0.0
    %3299 = vmatpush1.msra.mxu0 %v2578
    %3300 = vmatprep.subr.mxu0 0.0
    %3301 = vmatpush1.msra.mxu0 %v2574
    %3302 = vmatprep.subr.mxu0 0.0
    %3303 = vmatpush2.msra.mxu0 0.0
    %3304 = vmatprep.subr.mxu0 0.0
    %3305 = vmatpush2.msra.mxu0 0.0
    %3306 = vmatprep.subr.mxu0 0.0
    %3307 = vmatpush2.msra.mxu0 0.0
    %3308 = vmatprep.subr.mxu0 0.0
    %3309 = vmatpush2.msra.mxu0 0.0
    %3310 = vmatprep.subr.mxu0 0.0
    %3311 = vmatpush2.msra.mxu0 0.0
    %3312 = vmatprep.subr.mxu0 0.0
    %3313 = vmatpush2.msra.mxu0 0.0
    %3314 = vmatprep.subr.mxu0 0.0
    %3315 = vmatpush2.msra.mxu0 0.0
    %3316 = vmatprep.subr.mxu0 0.0
    %3317 = vmatpush2.msra.mxu0 0.0
    %3318 = vmatprep.subr.mxu0 0.0
    %3319 = vmatpush2.msra.mxu0 0.0
    %3320 = vmatprep.subr.mxu0 0.0
    %3321 = vmatpush2.msra.mxu0 0.0
    %3322 = vmatprep.subr.mxu0 0.0
    %3323 = vmatpush2.msra.mxu0 0.0
    %3324 = vmatprep.subr.mxu0 0.0
    %3325 = vmatpush2.msra.mxu0 0.0
    %3326 = vmatprep.subr.mxu0 0.0
    %3327 = vmatpush2.msra.mxu0 0.0
    %3328 = vmatprep.subr.mxu0 0.0
    %3329 = vmatpush2.msra.mxu0 0.0
    %3330 = vmatprep.subr.mxu0 0.0
    %3331 = vmatpush2.msra.mxu0 0.0
    %3332 = vmatprep.subr.mxu0 0.0
    %3333 = vmatpush2.msra.mxu0 0.0
    %3334 = vmatprep.mubr.f32.mxu0 0.0
    %3335 = vmatmul.mubr.f32.gmra.mxu0 %v3259
    %v3336 = vpop.f32.mrf.mxu0
    %v3337 = vadd.f32 0.0, %v3336
    %v3338 = vpop.f32.mrf.mxu0
    %3339 = vmatprep.mubr.f32.mxu0 0.0
    %3340 = vmatmul.mubr.f32.gmra.mxu0 %v3262
    %v3341 = vpop.f32.mrf.mxu0
    %v3342 = vadd.f32 0.0, %v3341
    %v3343 = vpop.f32.mrf.mxu0
    %3344 = vmatprep.mubr.f32.mxu0 0.0
    %3345 = vmatmul.mubr.f32.gmra.mxu0 %v3265
    %v3346 = vpop.f32.mrf.mxu0
    %v3347 = vadd.f32 0.0, %v3346
    %v3348 = vpop.f32.mrf.mxu0
    %3349 = vmatprep.mubr.f32.mxu0 0.0
    %3350 = vmatmul.mubr.f32.gmra.mxu0 %v3268
    %v3351 = vpop.f32.mrf.mxu0
    %v3352 = vadd.f32 0.0, %v3351
    %v3353 = vpop.f32.mrf.mxu0
    %3354 = vdwg.mxu0
    %v3355 = vpack.c.bf16 %v3342, %v3337
    %v3356 = vpack.c.bf16 %v3352, %v3347
    %v3389 = vunpack.c.l.b16 %v2804
    %v3390 = vunpack.c.h.b16 %v2804
    %v3391 = vunpack.c.l.b16 %v2805
    %v3392 = vunpack.c.l.b16 %v2806
    %v3393 = vunpack.c.h.b16 %v2806
    %v3394 = vunpack.c.l.b16 %v2807
    %v3395 = vunpack.c.l.b16 %v2808
    %v3396 = vunpack.c.h.b16 %v2808
    %v3397 = vunpack.c.l.b16 %v2809
    %v3398 = vunpack.c.l.b16 %v2810
    %v3399 = vunpack.c.h.b16 %v2810
    %v3400 = vunpack.c.l.b16 %v2811
    %v3401 = vunpack.c.l.b16 %v2812
    %v3402 = vunpack.c.h.b16 %v2812
    %v3403 = vunpack.c.l.b16 %v2813
    %v3404 = vunpack.c.l.b16 %v2814
    %v3405 = vunpack.c.h.b16 %v2814
    %v3406 = vunpack.c.l.b16 %v2815
    %v3407 = vunpack.c.l.b16 %v2816
    %v3408 = vunpack.c.h.b16 %v2816
    %v3409 = vunpack.c.l.b16 %v2817
    %v3410 = vunpack.c.l.b16 %v2818
    %v3411 = vunpack.c.h.b16 %v2818
    %v3412 = vunpack.c.l.b16 %v2819
    %v3413 = vunpack.c.l.b16 %v2820
    %v3414 = vunpack.c.h.b16 %v2820
    %v3415 = vunpack.c.l.b16 %v2821
    %v3416 = vunpack.c.l.b16 %v2822
    %v3417 = vunpack.c.h.b16 %v2822
    %v3418 = vunpack.c.l.b16 %v2823
    %v3419 = vunpack.c.l.b16 %v2824
    %v3420 = vunpack.c.h.b16 %v2824
    %v3421 = vunpack.c.l.b16 %v2825
    %v3422 = vunpack.c.l.b16 %v2826
    %v3423 = vunpack.c.h.b16 %v2826
    %v3424 = vunpack.c.l.b16 %v2827
    %v3425 = vunpack.c.l.b16 %v2828
    %v3426 = vunpack.c.h.b16 %v2828
    %v3427 = vunpack.c.l.b16 %v2829
    %v3428 = vunpack.c.l.b16 %v2830
    %v3429 = vunpack.c.h.b16 %v2830
    %v3430 = vunpack.c.l.b16 %v2831
    %v3431 = vunpack.c.l.b16 %v2832
    %v3432 = vunpack.c.h.b16 %v2832
    %v3433 = vunpack.c.l.b16 %v2833
    %v3434 = vunpack.c.l.b16 %v2834
    %v3435 = vunpack.c.h.b16 %v2834
    %v3436 = vunpack.c.l.b16 %v2835
    %v3437 = vpack.c.b16 %v3392, %v3389
    %v3438 = vpack.c.b16 %v3393, %v3390
    %v3439 = vpack.c.b16 %v3394, %v3391
    %v3440 = vpack.c.b16 %v3398, %v3395
    %v3441 = vpack.c.b16 %v3399, %v3396
    %v3442 = vpack.c.b16 %v3400, %v3397
    %v3443 = vpack.c.b16 %v3404, %v3401
    %v3444 = vpack.c.b16 %v3405, %v3402
    %v3445 = vpack.c.b16 %v3406, %v3403
    %v3446 = vpack.c.b16 %v3410, %v3407
    %v3447 = vpack.c.b16 %v3411, %v3408
    %v3448 = vpack.c.b16 %v3412, %v3409
    %v3449 = vpack.c.b16 %v3416, %v3413
    %v3450 = vpack.c.b16 %v3417, %v3414
    %v3451 = vpack.c.b16 %v3418, %v3415
    %v3452 = vpack.c.b16 %v3422, %v3419
    %v3453 = vpack.c.b16 %v3423, %v3420
    %v3454 = vpack.c.b16 %v3424, %v3421
    %v3455 = vpack.c.b16 %v3428, %v3425
    %v3456 = vpack.c.b16 %v3429, %v3426
    %v3457 = vpack.c.b16 %v3430, %v3427
    %v3458 = vpack.c.b16 %v3434, %v3431
    %v3459 = vpack.c.b16 %v3435, %v3432
    %v3460 = vpack.c.b16 %v3436, %v3433
    %3485 = vmatprep.subr.bf16.mxu0 %v3459
    %3486 = vmatpush1.bf16.msra.mxu0 %v3458
    %3487 = vmatprep.subr.bf16.mxu0 %v3456
    %3488 = vmatpush1.bf16.msra.mxu0 %v3455
    %3489 = vmatprep.subr.bf16.mxu0 %v3453
    %3490 = vmatpush1.bf16.msra.mxu0 %v3452
    %3491 = vmatprep.subr.bf16.mxu0 %v3450
    %3492 = vmatpush1.bf16.msra.mxu0 %v3449
    %3493 = vmatprep.subr.bf16.mxu0 %v3447
    %3494 = vmatpush1.bf16.msra.mxu0 %v3446
    %3495 = vmatprep.subr.bf16.mxu0 %v3444
    %3496 = vmatpush1.bf16.msra.mxu0 %v3443
    %3497 = vmatprep.subr.bf16.mxu0 %v3441
    %3498 = vmatpush1.bf16.msra.mxu0 %v3440
    %3499 = vmatprep.subr.bf16.mxu0 %v3438
    %3500 = vmatpush1.bf16.msra.mxu0 %v3437
    %3501 = vmatprep.subr.bf16.mxu0 0
    %3502 = vmatpush2.bf16.msra.mxu0 0
    %3503 = vmatprep.subr.bf16.mxu0 0
    %3504 = vmatpush2.bf16.msra.mxu0 0
    %3505 = vmatprep.subr.bf16.mxu0 0
    %3506 = vmatpush2.bf16.msra.mxu0 0
    %3507 = vmatprep.subr.bf16.mxu0 0
    %3508 = vmatpush2.bf16.msra.mxu0 0
    %3509 = vmatprep.subr.bf16.mxu0 0
    %3510 = vmatpush2.bf16.msra.mxu0 0
    %3511 = vmatprep.subr.bf16.mxu0 0
    %3512 = vmatpush2.bf16.msra.mxu0 0
    %3513 = vmatprep.subr.bf16.mxu0 0
    %3514 = vmatpush2.bf16.msra.mxu0 0
    %3515 = vmatprep.subr.bf16.mxu0 0
    %3516 = vmatpush2.bf16.msra.mxu0 0
    %3517 = vmatprep.mubr.bf16.mxu0 0
    %3518 = vmatmul.mubr.bf16.gmra.mxu0 %v3355
    %v3519 = vpop.f32.mrf.mxu0
    %v3520 = vadd.f32 0.0, %v3519
    %v3521 = vpop.f32.mrf.mxu0
    %v3522 = vadd.f32 0.0, %v3521
    %v3523 = vpop.f32.mrf.mxu0
    %v3524 = vadd.f32 0.0, %v3523
    %v3525 = vpop.f32.mrf.mxu0
    %v3526 = vadd.f32 0.0, %v3525
    %3527 = vmatprep.mubr.bf16.mxu0 0
    %3528 = vmatmul.mubr.bf16.gmra.mxu0 %v3356
    %v3529 = vpop.f32.mrf.mxu0
    %v3530 = vadd.f32 0.0, %v3529
    %v3531 = vpop.f32.mrf.mxu0
    %v3532 = vadd.f32 0.0, %v3531
    %v3533 = vpop.f32.mrf.mxu0
    %v3534 = vadd.f32 0.0, %v3533
    %v3535 = vpop.f32.mrf.mxu0
    %v3536 = vadd.f32 0.0, %v3535
    %3537 = vdwg.mxu0
    %3538 = vmatprep.subr.bf16.mxu0 0
    %3539 = vmatpush1.bf16.msra.mxu0 %v3460
    %3540 = vmatprep.subr.bf16.mxu0 0
    %3541 = vmatpush1.bf16.msra.mxu0 %v3457
    %3542 = vmatprep.subr.bf16.mxu0 0
    %3543 = vmatpush1.bf16.msra.mxu0 %v3454
    %3544 = vmatprep.subr.bf16.mxu0 0
    %3545 = vmatpush1.bf16.msra.mxu0 %v3451
    %3546 = vmatprep.subr.bf16.mxu0 0
    %3547 = vmatpush1.bf16.msra.mxu0 %v3448
    %3548 = vmatprep.subr.bf16.mxu0 0
    %3549 = vmatpush1.bf16.msra.mxu0 %v3445
    %3550 = vmatprep.subr.bf16.mxu0 0
    %3551 = vmatpush1.bf16.msra.mxu0 %v3442
    %3552 = vmatprep.subr.bf16.mxu0 0
    %3553 = vmatpush1.bf16.msra.mxu0 %v3439
    %3554 = vmatprep.subr.bf16.mxu0 0
    %3555 = vmatpush2.bf16.msra.mxu0 0
    %3556 = vmatprep.subr.bf16.mxu0 0
    %3557 = vmatpush2.bf16.msra.mxu0 0
    %3558 = vmatprep.subr.bf16.mxu0 0
    %3559 = vmatpush2.bf16.msra.mxu0 0
    %3560 = vmatprep.subr.bf16.mxu0 0
    %3561 = vmatpush2.bf16.msra.mxu0 0
    %3562 = vmatprep.subr.bf16.mxu0 0
    %3563 = vmatpush2.bf16.msra.mxu0 0
    %3564 = vmatprep.subr.bf16.mxu0 0
    %3565 = vmatpush2.bf16.msra.mxu0 0
    %3566 = vmatprep.subr.bf16.mxu0 0
    %3567 = vmatpush2.bf16.msra.mxu0 0
    %3568 = vmatprep.subr.bf16.mxu0 0
    %3569 = vmatpush2.bf16.msra.mxu0 0
    %3570 = vmatprep.mubr.bf16.mxu0 0
    %3571 = vmatmul.mubr.bf16.gmra.mxu0 %v3355
    %v3572 = vpop.f32.mrf.mxu0
    %v3573 = vadd.f32 0.0, %v3572
    %v3574 = vpop.f32.mrf.mxu0
    %v3575 = vpop.f32.mrf.mxu0
    %v3576 = vadd.f32 0.0, %v3575
    %v3577 = vpop.f32.mrf.mxu0
    %3578 = vmatprep.mubr.bf16.mxu0 0
    %3579 = vmatmul.mubr.bf16.gmra.mxu0 %v3356
    %v3580 = vpop.f32.mrf.mxu0
    %v3581 = vadd.f32 0.0, %v3580
    %v3582 = vpop.f32.mrf.mxu0
    %v3583 = vpop.f32.mrf.mxu0
    %v3584 = vadd.f32 0.0, %v3583
    %v3585 = vpop.f32.mrf.mxu0
    %3586 = vdwg.mxu0
    %v3619 = vunpack.c.l.b16 %v2772
    %v3620 = vunpack.c.h.b16 %v2772
    %v3621 = vunpack.c.l.b16 %v2773
    %v3622 = vunpack.c.l.b16 %v2774
    %v3623 = vunpack.c.h.b16 %v2774
    %v3624 = vunpack.c.l.b16 %v2775
    %v3625 = vunpack.c.l.b16 %v2776
    %v3626 = vunpack.c.h.b16 %v2776
    %v3627 = vunpack.c.l.b16 %v2777
    %v3628 = vunpack.c.l.b16 %v2778
    %v3629 = vunpack.c.h.b16 %v2778
    %v3630 = vunpack.c.l.b16 %v2779
    %v3631 = vunpack.c.l.b16 %v2780
    %v3632 = vunpack.c.h.b16 %v2780
    %v3633 = vunpack.c.l.b16 %v2781
    %v3634 = vunpack.c.l.b16 %v2782
    %v3635 = vunpack.c.h.b16 %v2782
    %v3636 = vunpack.c.l.b16 %v2783
    %v3637 = vunpack.c.l.b16 %v2784
    %v3638 = vunpack.c.h.b16 %v2784
    %v3639 = vunpack.c.l.b16 %v2785
    %v3640 = vunpack.c.l.b16 %v2786
    %v3641 = vunpack.c.h.b16 %v2786
    %v3642 = vunpack.c.l.b16 %v2787
    %v3643 = vunpack.c.l.b16 %v2788
    %v3644 = vunpack.c.h.b16 %v2788
    %v3645 = vunpack.c.l.b16 %v2789
    %v3646 = vunpack.c.l.b16 %v2790
    %v3647 = vunpack.c.h.b16 %v2790
    %v3648 = vunpack.c.l.b16 %v2791
    %v3649 = vunpack.c.l.b16 %v2792
    %v3650 = vunpack.c.h.b16 %v2792
    %v3651 = vunpack.c.l.b16 %v2793
    %v3652 = vunpack.c.l.b16 %v2794
    %v3653 = vunpack.c.h.b16 %v2794
    %v3654 = vunpack.c.l.b16 %v2795
    %v3655 = vunpack.c.l.b16 %v2796
    %v3656 = vunpack.c.h.b16 %v2796
    %v3657 = vunpack.c.l.b16 %v2797
    %v3658 = vunpack.c.l.b16 %v2798
    %v3659 = vunpack.c.h.b16 %v2798
    %v3660 = vunpack.c.l.b16 %v2799
    %v3661 = vunpack.c.l.b16 %v2800
    %v3662 = vunpack.c.h.b16 %v2800
    %v3663 = vunpack.c.l.b16 %v2801
    %v3664 = vunpack.c.l.b16 %v2802
    %v3665 = vunpack.c.h.b16 %v2802
    %v3666 = vunpack.c.l.b16 %v2803
    %v3667 = vpack.c.b16 %v3622, %v3619
    %v3668 = vpack.c.b16 %v3623, %v3620
    %v3669 = vpack.c.b16 %v3624, %v3621
    %v3670 = vpack.c.b16 %v3628, %v3625
    %v3671 = vpack.c.b16 %v3629, %v3626
    %v3672 = vpack.c.b16 %v3630, %v3627
    %v3673 = vpack.c.b16 %v3634, %v3631
    %v3674 = vpack.c.b16 %v3635, %v3632
    %v3675 = vpack.c.b16 %v3636, %v3633
    %v3676 = vpack.c.b16 %v3640, %v3637
    %v3677 = vpack.c.b16 %v3641, %v3638
    %v3678 = vpack.c.b16 %v3642, %v3639
    %v3679 = vpack.c.b16 %v3646, %v3643
    %v3680 = vpack.c.b16 %v3647, %v3644
    %v3681 = vpack.c.b16 %v3648, %v3645
    %v3682 = vpack.c.b16 %v3652, %v3649
    %v3683 = vpack.c.b16 %v3653, %v3650
    %v3684 = vpack.c.b16 %v3654, %v3651
    %v3685 = vpack.c.b16 %v3658, %v3655
    %v3686 = vpack.c.b16 %v3659, %v3656
    %v3687 = vpack.c.b16 %v3660, %v3657
    %v3688 = vpack.c.b16 %v3664, %v3661
    %v3689 = vpack.c.b16 %v3665, %v3662
    %v3690 = vpack.c.b16 %v3666, %v3663
    %3715 = vmatprep.subr.bf16.mxu0 %v3689
    %3716 = vmatpush1.bf16.msra.mxu0 %v3688
    %3717 = vmatprep.subr.bf16.mxu0 %v3686
    %3718 = vmatpush1.bf16.msra.mxu0 %v3685
    %3719 = vmatprep.subr.bf16.mxu0 %v3683
    %3720 = vmatpush1.bf16.msra.mxu0 %v3682
    %3721 = vmatprep.subr.bf16.mxu0 %v3680
    %3722 = vmatpush1.bf16.msra.mxu0 %v3679
    %3723 = vmatprep.subr.bf16.mxu0 %v3677
    %3724 = vmatpush1.bf16.msra.mxu0 %v3676
    %3725 = vmatprep.subr.bf16.mxu0 %v3674
    %3726 = vmatpush1.bf16.msra.mxu0 %v3673
    %3727 = vmatprep.subr.bf16.mxu0 %v3671
    %3728 = vmatpush1.bf16.msra.mxu0 %v3670
    %3729 = vmatprep.subr.bf16.mxu0 %v3668
    %3730 = vmatpush1.bf16.msra.mxu0 %v3667
    %3731 = vmatprep.subr.bf16.mxu0 0
    %3732 = vmatpush2.bf16.msra.mxu0 0
    %3733 = vmatprep.subr.bf16.mxu0 0
    %3734 = vmatpush2.bf16.msra.mxu0 0
    %3735 = vmatprep.subr.bf16.mxu0 0
    %3736 = vmatpush2.bf16.msra.mxu0 0
    %3737 = vmatprep.subr.bf16.mxu0 0
    %3738 = vmatpush2.bf16.msra.mxu0 0
    %3739 = vmatprep.subr.bf16.mxu0 0
    %3740 = vmatpush2.bf16.msra.mxu0 0
    %3741 = vmatprep.subr.bf16.mxu0 0
    %3742 = vmatpush2.bf16.msra.mxu0 0
    %3743 = vmatprep.subr.bf16.mxu0 0
    %3744 = vmatpush2.bf16.msra.mxu0 0
    %3745 = vmatprep.subr.bf16.mxu0 0
    %3746 = vmatpush2.bf16.msra.mxu0 0
    %3747 = vmatprep.mubr.bf16.mxu0 0
    %3748 = vmatmul.mubr.bf16.gmra.mxu0 %v3127
    %v3749 = vpop.f32.mrf.mxu0
    %v3750 = vadd.f32 %v3520, %v3749
    %v3751 = vpop.f32.mrf.mxu0
    %v3752 = vadd.f32 %v3522, %v3751
    %v3753 = vpop.f32.mrf.mxu0
    %v3754 = vadd.f32 %v3524, %v3753
    %v3755 = vpop.f32.mrf.mxu0
    %v3756 = vadd.f32 %v3526, %v3755
    %3757 = vmatprep.mubr.bf16.mxu0 0
    %3758 = vmatmul.mubr.bf16.gmra.mxu0 %v3128
    %v3759 = vpop.f32.mrf.mxu0
    %v3760 = vadd.f32 %v3530, %v3759
    %v3761 = vpop.f32.mrf.mxu0
    %v3762 = vadd.f32 %v3532, %v3761
    %v3763 = vpop.f32.mrf.mxu0
    %v3764 = vadd.f32 %v3534, %v3763
    %v3765 = vpop.f32.mrf.mxu0
    %v3766 = vadd.f32 %v3536, %v3765
    %3767 = vdwg.mxu0
    %3768 = vmatprep.subr.bf16.mxu0 0
    %3769 = vmatpush1.bf16.msra.mxu0 %v3690
    %3770 = vmatprep.subr.bf16.mxu0 0
    %3771 = vmatpush1.bf16.msra.mxu0 %v3687
    %3772 = vmatprep.subr.bf16.mxu0 0
    %3773 = vmatpush1.bf16.msra.mxu0 %v3684
    %3774 = vmatprep.subr.bf16.mxu0 0
    %3775 = vmatpush1.bf16.msra.mxu0 %v3681
    %3776 = vmatprep.subr.bf16.mxu0 0
    %3777 = vmatpush1.bf16.msra.mxu0 %v3678
    %3778 = vmatprep.subr.bf16.mxu0 0
    %3779 = vmatpush1.bf16.msra.mxu0 %v3675
    %3780 = vmatprep.subr.bf16.mxu0 0
    %3781 = vmatpush1.bf16.msra.mxu0 %v3672
    %3782 = vmatprep.subr.bf16.mxu0 0
    %3783 = vmatpush1.bf16.msra.mxu0 %v3669
    %3784 = vmatprep.subr.bf16.mxu0 0
    %3785 = vmatpush2.bf16.msra.mxu0 0
    %3786 = vmatprep.subr.bf16.mxu0 0
    %3787 = vmatpush2.bf16.msra.mxu0 0
    %3788 = vmatprep.subr.bf16.mxu0 0
    %3789 = vmatpush2.bf16.msra.mxu0 0
    %3790 = vmatprep.subr.bf16.mxu0 0
    %3791 = vmatpush2.bf16.msra.mxu0 0
    %3792 = vmatprep.subr.bf16.mxu0 0
    %3793 = vmatpush2.bf16.msra.mxu0 0
    %3794 = vmatprep.subr.bf16.mxu0 0
    %3795 = vmatpush2.bf16.msra.mxu0 0
    %3796 = vmatprep.subr.bf16.mxu0 0
    %3797 = vmatpush2.bf16.msra.mxu0 0
    %3798 = vmatprep.subr.bf16.mxu0 0
    %3799 = vmatpush2.bf16.msra.mxu0 0
    %3800 = vmatprep.mubr.bf16.mxu0 0
    %3801 = vmatmul.mubr.bf16.gmra.mxu0 %v3127
    %v3802 = vpop.f32.mrf.mxu0
    %v3803 = vadd.f32 %v3573, %v3802
    %v3804 = vpop.f32.mrf.mxu0
    %v3805 = vpop.f32.mrf.mxu0
    %v3806 = vadd.f32 %v3576, %v3805
    %v3807 = vpop.f32.mrf.mxu0
    %3808 = vmatprep.mubr.bf16.mxu0 0
    %3809 = vmatmul.mubr.bf16.gmra.mxu0 %v3128
    %v3810 = vpop.f32.mrf.mxu0
    %v3811 = vadd.f32 %v3581, %v3810
    %v3812 = vpop.f32.mrf.mxu0
    %v3813 = vpop.f32.mrf.mxu0
    %v3814 = vadd.f32 %v3584, %v3813
    %v3815 = vpop.f32.mrf.mxu0
    %3816 = vdwg.mxu0
    %3817 = vmatprep.subr.mxu0 0.0
    %3818 = vmatpush1.xpose.msra.mxu0 0.0
    %3819 = vmatprep.subr.mxu0 0.0
    %3820 = vmatpush1.xpose.msra.mxu0 0.0
    %3821 = vmatprep.subr.mxu0 0.0
    %3822 = vmatpush1.xpose.msra.mxu0 0.0
    %3823 = vmatprep.subr.mxu0 0.0
    %3824 = vmatpush1.xpose.msra.mxu0 0.0
    %3825 = vmatprep.subr.mxu0 0.0
    %3826 = vmatpush1.xpose.msra.mxu0 0.0
    %3827 = vmatprep.subr.mxu0 0.0
    %3828 = vmatpush1.xpose.msra.mxu0 0.0
    %3829 = vmatprep.subr.mxu0 0.0
    %3830 = vmatpush1.xpose.msra.mxu0 0.0
    %3831 = vmatprep.subr.mxu0 0.0
    %3832 = vmatpush1.xpose.msra.mxu0 0.0
    %3833 = vmatprep.subr.mxu0 0.0
    %3834 = vmatpush1.xpose.msra.mxu0 0.0
    %3835 = vmatprep.subr.mxu0 0.0
    %3836 = vmatpush1.xpose.msra.mxu0 0.0
    %3837 = vmatprep.subr.mxu0 0.0
    %3838 = vmatpush1.xpose.msra.mxu0 0.0
    %3839 = vmatprep.subr.mxu0 0.0
    %3840 = vmatpush1.xpose.msra.mxu0 0.0
    %3841 = vmatprep.subr.mxu0 0.0
    %3842 = vmatpush1.xpose.msra.mxu0 %v2440
    %3843 = vmatprep.subr.mxu0 0.0
    %3844 = vmatpush1.xpose.msra.mxu0 %v2436
    %3845 = vmatprep.subr.mxu0 0.0
    %3846 = vmatpush1.xpose.msra.mxu0 %v2430
    %3847 = vmatprep.subr.mxu0 0.0
    %3848 = vmatpush1.xpose.msra.mxu0 %v2426
    %3849 = vmatprep.subr.mxu0 0.0
    %3850 = vmatpush2.xpose.msra.mxu0 0.0
    %3851 = vmatprep.subr.mxu0 0.0
    %3852 = vmatpush2.xpose.msra.mxu0 0.0
    %3853 = vmatprep.subr.mxu0 0.0
    %3854 = vmatpush2.xpose.msra.mxu0 0.0
    %3855 = vmatprep.subr.mxu0 0.0
    %3856 = vmatpush2.xpose.msra.mxu0 0.0
    %3857 = vmatprep.subr.mxu0 0.0
    %3858 = vmatpush2.xpose.msra.mxu0 0.0
    %3859 = vmatprep.subr.mxu0 0.0
    %3860 = vmatpush2.xpose.msra.mxu0 0.0
    %3861 = vmatprep.subr.mxu0 0.0
    %3862 = vmatpush2.xpose.msra.mxu0 0.0
    %3863 = vmatprep.subr.mxu0 0.0
    %3864 = vmatpush2.xpose.msra.mxu0 0.0
    %3865 = vmatprep.subr.mxu0 0.0
    %3866 = vmatpush2.xpose.msra.mxu0 0.0
    %3867 = vmatprep.subr.mxu0 0.0
    %3868 = vmatpush2.xpose.msra.mxu0 0.0
    %3869 = vmatprep.subr.mxu0 0.0
    %3870 = vmatpush2.xpose.msra.mxu0 0.0
    %3871 = vmatprep.subr.mxu0 0.0
    %3872 = vmatpush2.xpose.msra.mxu0 0.0
    %3873 = vmatprep.subr.mxu0 0.0
    %3874 = vmatpush2.xpose.msra.mxu0 0.0
    %3875 = vmatprep.subr.mxu0 0.0
    %3876 = vmatpush2.xpose.msra.mxu0 0.0
    %3877 = vmatprep.subr.mxu0 0.0
    %3878 = vmatpush2.xpose.msra.mxu0 0.0
    %3879 = vmatprep.subr.mxu0 0.0
    %3880 = vmatpush2.xpose.msra.mxu0 0.0
    %3881 = vmatprep.mubr.f32.mxu0 0.0
    %3882 = vmatmul.mubr.f32.gmra.mxu0 %v2134
    %v3883 = vpop.f32.mrf.mxu0
    %v3884 = vadd.f32 %v2767, %v3883
    %v3885 = vpop.f32.mrf.mxu0
    %3886 = vmatprep.mubr.f32.mxu0 0.0
    %3887 = vmatmul.mubr.f32.gmra.mxu0 %v2138
    %v3888 = vpop.f32.mrf.mxu0
    %v3889 = vadd.f32 %v2768, %v3888
    %v3890 = vpop.f32.mrf.mxu0
    %3891 = vmatprep.mubr.f32.mxu0 0.0
    %3892 = vmatmul.mubr.f32.gmra.mxu0 %v2144
    %v3893 = vpop.f32.mrf.mxu0
    %v3894 = vadd.f32 %v2769, %v3893
    %v3895 = vpop.f32.mrf.mxu0
    %3896 = vmatprep.mubr.f32.mxu0 0.0
    %3897 = vmatmul.mubr.f32.gmra.mxu0 %v2148
    %v3898 = vpop.f32.mrf.mxu0
    %v3899 = vadd.f32 %v2770, %v3898
    %v3900 = vpop.f32.mrf.mxu0
    %3901 = vdwg.mxu0
    %v3902 = vsel %vm2985, %v3884, -inf
    %3903 = vmax.xlane.f32.xlu0 %v3902
    %v3904 = vpop.xlane.xlu0 %3903
    %v3905 = vsel %vm2985, %v3889, -inf
    %3906 = vmax.xlane.f32.xlu0 %v3905
    %v3907 = vpop.xlane.xlu0 %3906
    %v3908 = vsel %vm2985, %v3894, -inf
    %3909 = vmax.xlane.f32.xlu0 %v3908
    %v3910 = vpop.xlane.xlu0 %3909
    %v3911 = vsel %vm2985, %v3899, -inf
    %3912 = vmax.xlane.f32.xlu0 %v3911
    %v3913 = vpop.xlane.xlu0 %3912
    %v3914 = vsub.f32 %v3884, %v3904
    %v3915 = vsub.f32 %v3889, %v3907
    %v3916 = vsub.f32 %v3894, %v3910
    %v3917 = vsub.f32 %v3899, %v3913
    %v3918 = vmul.f32 %v3914, 1.442695
    %v3919 = vpow.pop %v3918
    %v3920 = vmul.f32 %v3915, 1.442695
    %v3921 = vpow.pop %v3920
    %v3922 = vmul.f32 %v3916, 1.442695
    %v3923 = vpow.pop %v3922
    %v3924 = vmul.f32 %v3917, 1.442695
    %v3925 = vpow.pop %v3924
    %v3926 = vsel %vm2985, %v3919, 0.0
    %3927 = vadd.xlane.f32.xlu0 %v3926
    %v3928 = vpop.xlane.xlu0 %3927
    %v3929 = vsel %vm2985, %v3921, 0.0
    %3930 = vadd.xlane.f32.xlu0 %v3929
    %v3931 = vpop.xlane.xlu0 %3930
    %v3932 = vsel %vm2985, %v3923, 0.0
    %3933 = vadd.xlane.f32.xlu0 %v3932
    %v3934 = vpop.xlane.xlu0 %3933
    %v3935 = vsel %vm2985, %v3925, 0.0
    %3936 = vadd.xlane.f32.xlu0 %v3935
    %v3937 = vpop.xlane.xlu0 %3936
    %v3938 = vrcp.pop %v3928
    %v3939 = vrcp.pop %v3931
    %v3940 = vrcp.pop %v3934
    %v3941 = vrcp.pop %v3937
    %v3942 = vmul.f32 %v3919, %v3938
    %v3943 = vmul.f32 %v3921, %v3939
    %v3944 = vmul.f32 %v3923, %v3940
    %v3945 = vmul.f32 %v3925, %v3941
    %v3947 = vsel %vm2985, %v3942, 0
    %v3950 = vsel %vm2985, %v3943, 0
    %v3953 = vsel %vm2985, %v3944, 0
    %v3956 = vsel %vm2985, %v3945, 0
    %3958 = vmatprep.subr.mxu0 0.0
    %3959 = vmatpush1.msra.mxu0 0.0
    %3960 = vmatprep.subr.mxu0 0.0
    %3961 = vmatpush1.msra.mxu0 0.0
    %3962 = vmatprep.subr.mxu0 0.0
    %3963 = vmatpush1.msra.mxu0 0.0
    %3964 = vmatprep.subr.mxu0 0.0
    %3965 = vmatpush1.msra.mxu0 0.0
    %3966 = vmatprep.subr.mxu0 0.0
    %3967 = vmatpush1.msra.mxu0 0.0
    %3968 = vmatprep.subr.mxu0 0.0
    %3969 = vmatpush1.msra.mxu0 0.0
    %3970 = vmatprep.subr.mxu0 0.0
    %3971 = vmatpush1.msra.mxu0 0.0
    %3972 = vmatprep.subr.mxu0 0.0
    %3973 = vmatpush1.msra.mxu0 0.0
    %3974 = vmatprep.subr.mxu0 0.0
    %3975 = vmatpush1.msra.mxu0 0.0
    %3976 = vmatprep.subr.mxu0 0.0
    %3977 = vmatpush1.msra.mxu0 0.0
    %3978 = vmatprep.subr.mxu0 0.0
    %3979 = vmatpush1.msra.mxu0 0.0
    %3980 = vmatprep.subr.mxu0 0.0
    %3981 = vmatpush1.msra.mxu0 0.0
    %3982 = vmatprep.subr.mxu0 0.0
    %3983 = vmatpush1.msra.mxu0 %v2732
    %3984 = vmatprep.subr.mxu0 0.0
    %3985 = vmatpush1.msra.mxu0 %v2728
    %3986 = vmatprep.subr.mxu0 0.0
    %3987 = vmatpush1.msra.mxu0 %v2722
    %3988 = vmatprep.subr.mxu0 0.0
    %3989 = vmatpush1.msra.mxu0 %v2718
    %3990 = vmatprep.subr.mxu0 0.0
    %3991 = vmatpush2.msra.mxu0 0.0
    %3992 = vmatprep.subr.mxu0 0.0
    %3993 = vmatpush2.msra.mxu0 0.0
    %3994 = vmatprep.subr.mxu0 0.0
    %3995 = vmatpush2.msra.mxu0 0.0
    %3996 = vmatprep.subr.mxu0 0.0
    %3997 = vmatpush2.msra.mxu0 0.0
    %3998 = vmatprep.subr.mxu0 0.0
    %3999 = vmatpush2.msra.mxu0 0.0
    %4000 = vmatprep.subr.mxu0 0.0
    %4001 = vmatpush2.msra.mxu0 0.0
    %4002 = vmatprep.subr.mxu0 0.0
    %4003 = vmatpush2.msra.mxu0 0.0
    %4004 = vmatprep.subr.mxu0 0.0
    %4005 = vmatpush2.msra.mxu0 0.0
    %4006 = vmatprep.subr.mxu0 0.0
    %4007 = vmatpush2.msra.mxu0 0.0
    %4008 = vmatprep.subr.mxu0 0.0
    %4009 = vmatpush2.msra.mxu0 0.0
    %4010 = vmatprep.subr.mxu0 0.0
    %4011 = vmatpush2.msra.mxu0 0.0
    %4012 = vmatprep.subr.mxu0 0.0
    %4013 = vmatpush2.msra.mxu0 0.0
    %4014 = vmatprep.subr.mxu0 0.0
    %4015 = vmatpush2.msra.mxu0 0.0
    %4016 = vmatprep.subr.mxu0 0.0
    %4017 = vmatpush2.msra.mxu0 0.0
    %4018 = vmatprep.subr.mxu0 0.0
    %4019 = vmatpush2.msra.mxu0 0.0
    %4020 = vmatprep.subr.mxu0 0.0
    %4021 = vmatpush2.msra.mxu0 0.0
    %4022 = vmatprep.mubr.f32.mxu0 0.0
    %4023 = vmatmul.mubr.f32.gmra.mxu0 %v3947
    %v4024 = vpop.f32.mrf.mxu0
    %v4025 = vadd.f32 0.0, %v4024
    %v4026 = vpop.f32.mrf.mxu0
    %4027 = vmatprep.mubr.f32.mxu0 0.0
    %4028 = vmatmul.mubr.f32.gmra.mxu0 %v3950
    %v4029 = vpop.f32.mrf.mxu0
    %v4030 = vadd.f32 0.0, %v4029
    %v4031 = vpop.f32.mrf.mxu0
    %4032 = vmatprep.mubr.f32.mxu0 0.0
    %4033 = vmatmul.mubr.f32.gmra.mxu0 %v3953
    %v4034 = vpop.f32.mrf.mxu0
    %v4035 = vadd.f32 0.0, %v4034
    %v4036 = vpop.f32.mrf.mxu0
    %4037 = vmatprep.mubr.f32.mxu0 0.0
    %4038 = vmatmul.mubr.f32.gmra.mxu0 %v3956
    %v4039 = vpop.f32.mrf.mxu0
    %v4040 = vadd.f32 0.0, %v4039
    %v4041 = vpop.f32.mrf.mxu0
    %4042 = vdwg.mxu0
    %v4043 = vpack.c.bf16 %v4030, %v4025
    %v4044 = vpack.c.bf16 %v4040, %v4035
    %v4077 = vunpack.c.l.b16 %v2836
    %v4078 = vunpack.c.h.b16 %v2836
    %v4079 = vunpack.c.l.b16 %v2837
    %v4080 = vunpack.c.l.b16 %v2838
    %v4081 = vunpack.c.h.b16 %v2838
    %v4082 = vunpack.c.l.b16 %v2839
    %v4083 = vunpack.c.l.b16 %v2840
    %v4084 = vunpack.c.h.b16 %v2840
    %v4085 = vunpack.c.l.b16 %v2841
    %v4086 = vunpack.c.l.b16 %v2842
    %v4087 = vunpack.c.h.b16 %v2842
    %v4088 = vunpack.c.l.b16 %v2843
    %v4089 = vunpack.c.l.b16 %v2844
    %v4090 = vunpack.c.h.b16 %v2844
    %v4091 = vunpack.c.l.b16 %v2845
    %v4092 = vunpack.c.l.b16 %v2846
    %v4093 = vunpack.c.h.b16 %v2846
    %v4094 = vunpack.c.l.b16 %v2847
    %v4095 = vunpack.c.l.b16 %v2848
    %v4096 = vunpack.c.h.b16 %v2848
    %v4097 = vunpack.c.l.b16 %v2849
    %v4098 = vunpack.c.l.b16 %v2850
    %v4099 = vunpack.c.h.b16 %v2850
    %v4100 = vunpack.c.l.b16 %v2851
    %v4101 = vunpack.c.l.b16 %v2852
    %v4102 = vunpack.c.h.b16 %v2852
    %v4103 = vunpack.c.l.b16 %v2853
    %v4104 = vunpack.c.l.b16 %v2854
    %v4105 = vunpack.c.h.b16 %v2854
    %v4106 = vunpack.c.l.b16 %v2855
    %v4107 = vunpack.c.l.b16 %v2856
    %v4108 = vunpack.c.h.b16 %v2856
    %v4109 = vunpack.c.l.b16 %v2857
    %v4110 = vunpack.c.l.b16 %v2858
    %v4111 = vunpack.c.h.b16 %v2858
    %v4112 = vunpack.c.l.b16 %v2859
    %v4113 = vunpack.c.l.b16 %v2860
    %v4114 = vunpack.c.h.b16 %v2860
    %v4115 = vunpack.c.l.b16 %v2861
    %v4116 = vunpack.c.l.b16 %v2862
    %v4117 = vunpack.c.h.b16 %v2862
    %v4118 = vunpack.c.l.b16 %v2863
    %v4119 = vunpack.c.l.b16 %v2864
    %v4120 = vunpack.c.h.b16 %v2864
    %v4121 = vunpack.c.l.b16 %v2865
    %v4122 = vunpack.c.l.b16 %v2866
    %v4123 = vunpack.c.h.b16 %v2866
    %v4124 = vunpack.c.l.b16 %v2867
    %v4125 = vpack.c.b16 %v4080, %v4077
    %v4126 = vpack.c.b16 %v4081, %v4078
    %v4127 = vpack.c.b16 %v4082, %v4079
    %v4128 = vpack.c.b16 %v4086, %v4083
    %v4129 = vpack.c.b16 %v4087, %v4084
    %v4130 = vpack.c.b16 %v4088, %v4085
    %v4131 = vpack.c.b16 %v4092, %v4089
    %v4132 = vpack.c.b16 %v4093, %v4090
    %v4133 = vpack.c.b16 %v4094, %v4091
    %v4134 = vpack.c.b16 %v4098, %v4095
    %v4135 = vpack.c.b16 %v4099, %v4096
    %v4136 = vpack.c.b16 %v4100, %v4097
    %v4137 = vpack.c.b16 %v4104, %v4101
    %v4138 = vpack.c.b16 %v4105, %v4102
    %v4139 = vpack.c.b16 %v4106, %v4103
    %v4140 = vpack.c.b16 %v4110, %v4107
    %v4141 = vpack.c.b16 %v4111, %v4108
    %v4142 = vpack.c.b16 %v4112, %v4109
    %v4143 = vpack.c.b16 %v4116, %v4113
    %v4144 = vpack.c.b16 %v4117, %v4114
    %v4145 = vpack.c.b16 %v4118, %v4115
    %v4146 = vpack.c.b16 %v4122, %v4119
    %v4147 = vpack.c.b16 %v4123, %v4120
    %v4148 = vpack.c.b16 %v4124, %v4121
    %4173 = vmatprep.subr.bf16.mxu0 %v4147
    %4174 = vmatpush1.bf16.msra.mxu0 %v4146
    %4175 = vmatprep.subr.bf16.mxu0 %v4144
    %4176 = vmatpush1.bf16.msra.mxu0 %v4143
    %4177 = vmatprep.subr.bf16.mxu0 %v4141
    %4178 = vmatpush1.bf16.msra.mxu0 %v4140
    %4179 = vmatprep.subr.bf16.mxu0 %v4138
    %4180 = vmatpush1.bf16.msra.mxu0 %v4137
    %4181 = vmatprep.subr.bf16.mxu0 %v4135
    %4182 = vmatpush1.bf16.msra.mxu0 %v4134
    %4183 = vmatprep.subr.bf16.mxu0 %v4132
    %4184 = vmatpush1.bf16.msra.mxu0 %v4131
    %4185 = vmatprep.subr.bf16.mxu0 %v4129
    %4186 = vmatpush1.bf16.msra.mxu0 %v4128
    %4187 = vmatprep.subr.bf16.mxu0 %v4126
    %4188 = vmatpush1.bf16.msra.mxu0 %v4125
    %4189 = vmatprep.subr.bf16.mxu0 0
    %4190 = vmatpush2.bf16.msra.mxu0 0
    %4191 = vmatprep.subr.bf16.mxu0 0
    %4192 = vmatpush2.bf16.msra.mxu0 0
    %4193 = vmatprep.subr.bf16.mxu0 0
    %4194 = vmatpush2.bf16.msra.mxu0 0
    %4195 = vmatprep.subr.bf16.mxu0 0
    %4196 = vmatpush2.bf16.msra.mxu0 0
    %4197 = vmatprep.subr.bf16.mxu0 0
    %4198 = vmatpush2.bf16.msra.mxu0 0
    %4199 = vmatprep.subr.bf16.mxu0 0
    %4200 = vmatpush2.bf16.msra.mxu0 0
    %4201 = vmatprep.subr.bf16.mxu0 0
    %4202 = vmatpush2.bf16.msra.mxu0 0
    %4203 = vmatprep.subr.bf16.mxu0 0
    %4204 = vmatpush2.bf16.msra.mxu0 0
    %4205 = vmatprep.mubr.bf16.mxu0 0
    %4206 = vmatmul.mubr.bf16.gmra.mxu0 %v4043
    %v4207 = vpop.f32.mrf.mxu0
    %v4208 = vadd.f32 0.0, %v4207
    %v4209 = vpop.f32.mrf.mxu0
    %v4210 = vadd.f32 0.0, %v4209
    %v4211 = vpop.f32.mrf.mxu0
    %v4212 = vadd.f32 0.0, %v4211
    %v4213 = vpop.f32.mrf.mxu0
    %v4214 = vadd.f32 0.0, %v4213
    %4215 = vmatprep.mubr.bf16.mxu0 0
    %4216 = vmatmul.mubr.bf16.gmra.mxu0 %v4044
    %v4217 = vpop.f32.mrf.mxu0
    %v4218 = vadd.f32 0.0, %v4217
    %v4219 = vpop.f32.mrf.mxu0
    %v4220 = vadd.f32 0.0, %v4219
    %v4221 = vpop.f32.mrf.mxu0
    %v4222 = vadd.f32 0.0, %v4221
    %v4223 = vpop.f32.mrf.mxu0
    %v4224 = vadd.f32 0.0, %v4223
    %4225 = vdwg.mxu0
    %4226 = vmatprep.subr.bf16.mxu0 0
    %4227 = vmatpush1.bf16.msra.mxu0 %v4148
    %4228 = vmatprep.subr.bf16.mxu0 0
    %4229 = vmatpush1.bf16.msra.mxu0 %v4145
    %4230 = vmatprep.subr.bf16.mxu0 0
    %4231 = vmatpush1.bf16.msra.mxu0 %v4142
    %4232 = vmatprep.subr.bf16.mxu0 0
    %4233 = vmatpush1.bf16.msra.mxu0 %v4139
    %4234 = vmatprep.subr.bf16.mxu0 0
    %4235 = vmatpush1.bf16.msra.mxu0 %v4136
    %4236 = vmatprep.subr.bf16.mxu0 0
    %4237 = vmatpush1.bf16.msra.mxu0 %v4133
    %4238 = vmatprep.subr.bf16.mxu0 0
    %4239 = vmatpush1.bf16.msra.mxu0 %v4130
    %4240 = vmatprep.subr.bf16.mxu0 0
    %4241 = vmatpush1.bf16.msra.mxu0 %v4127
    %4242 = vmatprep.subr.bf16.mxu0 0
    %4243 = vmatpush2.bf16.msra.mxu0 0
    %4244 = vmatprep.subr.bf16.mxu0 0
    %4245 = vmatpush2.bf16.msra.mxu0 0
    %4246 = vmatprep.subr.bf16.mxu0 0
    %4247 = vmatpush2.bf16.msra.mxu0 0
    %4248 = vmatprep.subr.bf16.mxu0 0
    %4249 = vmatpush2.bf16.msra.mxu0 0
    %4250 = vmatprep.subr.bf16.mxu0 0
    %4251 = vmatpush2.bf16.msra.mxu0 0
    %4252 = vmatprep.subr.bf16.mxu0 0
    %4253 = vmatpush2.bf16.msra.mxu0 0
    %4254 = vmatprep.subr.bf16.mxu0 0
    %4255 = vmatpush2.bf16.msra.mxu0 0
    %4256 = vmatprep.subr.bf16.mxu0 0
    %4257 = vmatpush2.bf16.msra.mxu0 0
    %4258 = vmatprep.mubr.bf16.mxu0 0
    %4259 = vmatmul.mubr.bf16.gmra.mxu0 %v4043
    %v4260 = vpop.f32.mrf.mxu0
    %v4261 = vadd.f32 0.0, %v4260
    %v4262 = vpop.f32.mrf.mxu0
    %v4263 = vpop.f32.mrf.mxu0
    %v4264 = vadd.f32 0.0, %v4263
    %v4265 = vpop.f32.mrf.mxu0
    %4266 = vmatprep.mubr.bf16.mxu0 0
    %4267 = vmatmul.mubr.bf16.gmra.mxu0 %v4044
    %v4268 = vpop.f32.mrf.mxu0
    %v4269 = vadd.f32 0.0, %v4268
    %v4270 = vpop.f32.mrf.mxu0
    %v4271 = vpop.f32.mrf.mxu0
    %v4272 = vadd.f32 0.0, %v4271
    %v4273 = vpop.f32.mrf.mxu0
    %4274 = vdwg.mxu0
    %v4275 = vadd.f32 %v3750, %v4208
    %v4276 = vadd.f32 %v3752, %v4210
    %v4277 = vadd.f32 %v3803, %v4261
    %v4278 = vadd.f32 %v3754, %v4212
    %v4279 = vadd.f32 %v3756, %v4214
    %v4280 = vadd.f32 %v3806, %v4264
    %v4281 = vadd.f32 %v3760, %v4218
    %v4282 = vadd.f32 %v3762, %v4220
    %v4283 = vadd.f32 %v3811, %v4269
    %v4284 = vadd.f32 %v3764, %v4222
    %v4285 = vadd.f32 %v3766, %v4224
    %v4286 = vadd.f32 %v3814, %v4272
    %4287 = vmatprep.subr.mxu0 0.0
    %4288 = vmatpush1.xpose.msra.mxu0 0.0
    %4289 = vmatprep.subr.mxu0 0.0
    %4290 = vmatpush1.xpose.msra.mxu0 0.0
    %4291 = vmatprep.subr.mxu0 0.0
    %4292 = vmatpush1.xpose.msra.mxu0 0.0
    %4293 = vmatprep.subr.mxu0 0.0
    %4294 = vmatpush1.xpose.msra.mxu0 0.0
    %4295 = vmatprep.subr.mxu0 0.0
    %4296 = vmatpush1.xpose.msra.mxu0 0.0
    %4297 = vmatprep.subr.mxu0 0.0
    %4298 = vmatpush1.xpose.msra.mxu0 0.0
    %4299 = vmatprep.subr.mxu0 0.0
    %4300 = vmatpush1.xpose.msra.mxu0 0.0
    %4301 = vmatprep.subr.mxu0 0.0
    %4302 = vmatpush1.xpose.msra.mxu0 0.0
    %4303 = vmatprep.subr.mxu0 0.0
    %4304 = vmatpush1.xpose.msra.mxu0 0.0
    %4305 = vmatprep.subr.mxu0 0.0
    %4306 = vmatpush1.xpose.msra.mxu0 0.0
    %4307 = vmatprep.subr.mxu0 0.0
    %4308 = vmatpush1.xpose.msra.mxu0 0.0
    %4309 = vmatprep.subr.mxu0 0.0
    %4310 = vmatpush1.xpose.msra.mxu0 0.0
    %4311 = vmatprep.subr.mxu0 0.0
    %4312 = vmatpush1.xpose.msra.mxu0 %v2442
    %4313 = vmatprep.subr.mxu0 0.0
    %4314 = vmatpush1.xpose.msra.mxu0 %v2438
    %4315 = vmatprep.subr.mxu0 0.0
    %4316 = vmatpush1.xpose.msra.mxu0 %v2432
    %4317 = vmatprep.subr.mxu0 0.0
    %4318 = vmatpush1.xpose.msra.mxu0 %v2428
    %4319 = vmatprep.subr.mxu0 0.0
    %4320 = vmatpush2.xpose.msra.mxu0 0.0
    %4321 = vmatprep.subr.mxu0 0.0
    %4322 = vmatpush2.xpose.msra.mxu0 0.0
    %4323 = vmatprep.subr.mxu0 0.0
    %4324 = vmatpush2.xpose.msra.mxu0 0.0
    %4325 = vmatprep.subr.mxu0 0.0
    %4326 = vmatpush2.xpose.msra.mxu0 0.0
    %4327 = vmatprep.subr.mxu0 0.0
    %4328 = vmatpush2.xpose.msra.mxu0 0.0
    %4329 = vmatprep.subr.mxu0 0.0
    %4330 = vmatpush2.xpose.msra.mxu0 0.0
    %4331 = vmatprep.subr.mxu0 0.0
    %4332 = vmatpush2.xpose.msra.mxu0 0.0
    %4333 = vmatprep.subr.mxu0 0.0
    %4334 = vmatpush2.xpose.msra.mxu0 0.0
    %4335 = vmatprep.subr.mxu0 0.0
    %4336 = vmatpush2.xpose.msra.mxu0 0.0
    %4337 = vmatprep.subr.mxu0 0.0
    %4338 = vmatpush2.xpose.msra.mxu0 0.0
    %4339 = vmatprep.subr.mxu0 0.0
    %4340 = vmatpush2.xpose.msra.mxu0 0.0
    %4341 = vmatprep.subr.mxu0 0.0
    %4342 = vmatpush2.xpose.msra.mxu0 0.0
    %4343 = vmatprep.subr.mxu0 0.0
    %4344 = vmatpush2.xpose.msra.mxu0 0.0
    %4345 = vmatprep.subr.mxu0 0.0
    %4346 = vmatpush2.xpose.msra.mxu0 0.0
    %4347 = vmatprep.subr.mxu0 0.0
    %4348 = vmatpush2.xpose.msra.mxu0 0.0
    %4349 = vmatprep.subr.mxu0 0.0
    %4350 = vmatpush2.xpose.msra.mxu0 0.0
    %4351 = vmatprep.mubr.f32.mxu0 0.0
    %4352 = vmatmul.mubr.f32.gmra.mxu0 %v2136
    %v4353 = vpop.f32.mrf.mxu0
    %v4354 = vadd.f32 %v2767, %v4353
    %v4355 = vpop.f32.mrf.mxu0
    %4356 = vmatprep.mubr.f32.mxu0 0.0
    %4357 = vmatmul.mubr.f32.gmra.mxu0 %v2140
    %v4358 = vpop.f32.mrf.mxu0
    %v4359 = vadd.f32 %v2768, %v4358
    %v4360 = vpop.f32.mrf.mxu0
    %4361 = vmatprep.mubr.f32.mxu0 0.0
    %4362 = vmatmul.mubr.f32.gmra.mxu0 %v2146
    %v4363 = vpop.f32.mrf.mxu0
    %v4364 = vadd.f32 %v2769, %v4363
    %v4365 = vpop.f32.mrf.mxu0
    %4366 = vmatprep.mubr.f32.mxu0 0.0
    %4367 = vmatmul.mubr.f32.gmra.mxu0 %v2150
    %v4368 = vpop.f32.mrf.mxu0
    %v4369 = vadd.f32 %v2770, %v4368
    %v4370 = vpop.f32.mrf.mxu0
    %4371 = vdwg.mxu0
    %v4372 = vsel %vm2985, %v4354, -inf
    %4373 = vmax.xlane.f32.xlu0 %v4372
    %v4374 = vpop.xlane.xlu0 %4373
    %v4375 = vsel %vm2985, %v4359, -inf
    %4376 = vmax.xlane.f32.xlu0 %v4375
    %v4377 = vpop.xlane.xlu0 %4376
    %v4378 = vsel %vm2985, %v4364, -inf
    %4379 = vmax.xlane.f32.xlu0 %v4378
    %v4380 = vpop.xlane.xlu0 %4379
    %v4381 = vsel %vm2985, %v4369, -inf
    %4382 = vmax.xlane.f32.xlu0 %v4381
    %v4383 = vpop.xlane.xlu0 %4382
    %v4384 = vsub.f32 %v4354, %v4374
    %v4385 = vsub.f32 %v4359, %v4377
    %v4386 = vsub.f32 %v4364, %v4380
    %v4387 = vsub.f32 %v4369, %v4383
    %v4388 = vmul.f32 %v4384, 1.442695
    %v4389 = vpow.pop %v4388
    %v4390 = vmul.f32 %v4385, 1.442695
    %v4391 = vpow.pop %v4390
    %v4392 = vmul.f32 %v4386, 1.442695
    %v4393 = vpow.pop %v4392
    %v4394 = vmul.f32 %v4387, 1.442695
    %v4395 = vpow.pop %v4394
    %v4396 = vsel %vm2985, %v4389, 0.0
    %4397 = vadd.xlane.f32.xlu0 %v4396
    %v4398 = vpop.xlane.xlu0 %4397
    %v4399 = vsel %vm2985, %v4391, 0.0
    %4400 = vadd.xlane.f32.xlu0 %v4399
    %v4401 = vpop.xlane.xlu0 %4400
    %v4402 = vsel %vm2985, %v4393, 0.0
    %4403 = vadd.xlane.f32.xlu0 %v4402
    %v4404 = vpop.xlane.xlu0 %4403
    %v4405 = vsel %vm2985, %v4395, 0.0
    %4406 = vadd.xlane.f32.xlu0 %v4405
    %v4407 = vpop.xlane.xlu0 %4406
    %v4408 = vrcp.pop %v4398
    %v4409 = vrcp.pop %v4401
    %v4410 = vrcp.pop %v4404
    %v4411 = vrcp.pop %v4407
    %v4412 = vmul.f32 %v4389, %v4408
    %v4413 = vmul.f32 %v4391, %v4409
    %v4414 = vmul.f32 %v4393, %v4410
    %v4415 = vmul.f32 %v4395, %v4411
    %v4417 = vsel %vm2985, %v4412, 0
    %v4420 = vsel %vm2985, %v4413, 0
    %v4423 = vsel %vm2985, %v4414, 0
    %v4426 = vsel %vm2985, %v4415, 0
    %4428 = vmatprep.subr.mxu0 0.0
    %4429 = vmatpush1.msra.mxu0 0.0
    %4430 = vmatprep.subr.mxu0 0.0
    %4431 = vmatpush1.msra.mxu0 0.0
    %4432 = vmatprep.subr.mxu0 0.0
    %4433 = vmatpush1.msra.mxu0 0.0
    %4434 = vmatprep.subr.mxu0 0.0
    %4435 = vmatpush1.msra.mxu0 0.0
    %4436 = vmatprep.subr.mxu0 0.0
    %4437 = vmatpush1.msra.mxu0 0.0
    %4438 = vmatprep.subr.mxu0 0.0
    %4439 = vmatpush1.msra.mxu0 0.0
    %4440 = vmatprep.subr.mxu0 0.0
    %4441 = vmatpush1.msra.mxu0 0.0
    %4442 = vmatprep.subr.mxu0 0.0
    %4443 = vmatpush1.msra.mxu0 0.0
    %4444 = vmatprep.subr.mxu0 0.0
    %4445 = vmatpush1.msra.mxu0 0.0
    %4446 = vmatprep.subr.mxu0 0.0
    %4447 = vmatpush1.msra.mxu0 0.0
    %4448 = vmatprep.subr.mxu0 0.0
    %4449 = vmatpush1.msra.mxu0 0.0
    %4450 = vmatprep.subr.mxu0 0.0
    %4451 = vmatpush1.msra.mxu0 0.0
    %4452 = vmatprep.subr.mxu0 0.0
    %4453 = vmatpush1.msra.mxu0 %v2734
    %4454 = vmatprep.subr.mxu0 0.0
    %4455 = vmatpush1.msra.mxu0 %v2730
    %4456 = vmatprep.subr.mxu0 0.0
    %4457 = vmatpush1.msra.mxu0 %v2724
    %4458 = vmatprep.subr.mxu0 0.0
    %4459 = vmatpush1.msra.mxu0 %v2720
    %4460 = vmatprep.subr.mxu0 0.0
    %4461 = vmatpush2.msra.mxu0 0.0
    %4462 = vmatprep.subr.mxu0 0.0
    %4463 = vmatpush2.msra.mxu0 0.0
    %4464 = vmatprep.subr.mxu0 0.0
    %4465 = vmatpush2.msra.mxu0 0.0
    %4466 = vmatprep.subr.mxu0 0.0
    %4467 = vmatpush2.msra.mxu0 0.0
    %4468 = vmatprep.subr.mxu0 0.0
    %4469 = vmatpush2.msra.mxu0 0.0
    %4470 = vmatprep.subr.mxu0 0.0
    %4471 = vmatpush2.msra.mxu0 0.0
    %4472 = vmatprep.subr.mxu0 0.0
    %4473 = vmatpush2.msra.mxu0 0.0
    %4474 = vmatprep.subr.mxu0 0.0
    %4475 = vmatpush2.msra.mxu0 0.0
    %4476 = vmatprep.subr.mxu0 0.0
    %4477 = vmatpush2.msra.mxu0 0.0
    %4478 = vmatprep.subr.mxu0 0.0
    %4479 = vmatpush2.msra.mxu0 0.0
    %4480 = vmatprep.subr.mxu0 0.0
    %4481 = vmatpush2.msra.mxu0 0.0
    %4482 = vmatprep.subr.mxu0 0.0
    %4483 = vmatpush2.msra.mxu0 0.0
    %4484 = vmatprep.subr.mxu0 0.0
    %4485 = vmatpush2.msra.mxu0 0.0
    %4486 = vmatprep.subr.mxu0 0.0
    %4487 = vmatpush2.msra.mxu0 0.0
    %4488 = vmatprep.subr.mxu0 0.0
    %4489 = vmatpush2.msra.mxu0 0.0
    %4490 = vmatprep.subr.mxu0 0.0
    %4491 = vmatpush2.msra.mxu0 0.0
    %4492 = vmatprep.mubr.f32.mxu0 0.0
    %4493 = vmatmul.mubr.f32.gmra.mxu0 %v4417
    %v4494 = vpop.f32.mrf.mxu0
    %v4495 = vadd.f32 0.0, %v4494
    %v4496 = vpop.f32.mrf.mxu0
    %4497 = vmatprep.mubr.f32.mxu0 0.0
    %4498 = vmatmul.mubr.f32.gmra.mxu0 %v4420
    %v4499 = vpop.f32.mrf.mxu0
    %v4500 = vadd.f32 0.0, %v4499
    %v4501 = vpop.f32.mrf.mxu0
    %4502 = vmatprep.mubr.f32.mxu0 0.0
    %4503 = vmatmul.mubr.f32.gmra.mxu0 %v4423
    %v4504 = vpop.f32.mrf.mxu0
    %v4505 = vadd.f32 0.0, %v4504
    %v4506 = vpop.f32.mrf.mxu0
    %4507 = vmatprep.mubr.f32.mxu0 0.0
    %4508 = vmatmul.mubr.f32.gmra.mxu0 %v4426
    %v4509 = vpop.f32.mrf.mxu0
    %v4510 = vadd.f32 0.0, %v4509
    %v4511 = vpop.f32.mrf.mxu0
    %4512 = vdwg.mxu0
    %v4513 = vpack.c.bf16 %v4500, %v4495
    %v4514 = vpack.c.bf16 %v4510, %v4505
    %v4547 = vunpack.c.l.b16 %v2868
    %v4548 = vunpack.c.h.b16 %v2868
    %v4549 = vunpack.c.l.b16 %v2869
    %v4550 = vunpack.c.l.b16 %v2870
    %v4551 = vunpack.c.h.b16 %v2870
    %v4552 = vunpack.c.l.b16 %v2871
    %v4553 = vunpack.c.l.b16 %v2872
    %v4554 = vunpack.c.h.b16 %v2872
    %v4555 = vunpack.c.l.b16 %v2873
    %v4556 = vunpack.c.l.b16 %v2874
    %v4557 = vunpack.c.h.b16 %v2874
    %v4558 = vunpack.c.l.b16 %v2875
    %v4559 = vunpack.c.l.b16 %v2876
    %v4560 = vunpack.c.h.b16 %v2876
    %v4561 = vunpack.c.l.b16 %v2877
    %v4562 = vunpack.c.l.b16 %v2878
    %v4563 = vunpack.c.h.b16 %v2878
    %v4564 = vunpack.c.l.b16 %v2879
    %v4565 = vunpack.c.l.b16 %v2880
    %v4566 = vunpack.c.h.b16 %v2880
    %v4567 = vunpack.c.l.b16 %v2881
    %v4568 = vunpack.c.l.b16 %v2882
    %v4569 = vunpack.c.h.b16 %v2882
    %v4570 = vunpack.c.l.b16 %v2883
    %v4571 = vunpack.c.l.b16 %v2884
    %v4572 = vunpack.c.h.b16 %v2884
    %v4573 = vunpack.c.l.b16 %v2885
    %v4574 = vunpack.c.l.b16 %v2886
    %v4575 = vunpack.c.h.b16 %v2886
    %v4576 = vunpack.c.l.b16 %v2887
    %v4577 = vunpack.c.l.b16 %v2888
    %v4578 = vunpack.c.h.b16 %v2888
    %v4579 = vunpack.c.l.b16 %v2889
    %v4580 = vunpack.c.l.b16 %v2890
    %v4581 = vunpack.c.h.b16 %v2890
    %v4582 = vunpack.c.l.b16 %v2891
    %v4583 = vunpack.c.l.b16 %v2892
    %v4584 = vunpack.c.h.b16 %v2892
    %v4585 = vunpack.c.l.b16 %v2893
    %v4586 = vunpack.c.l.b16 %v2894
    %v4587 = vunpack.c.h.b16 %v2894
    %v4588 = vunpack.c.l.b16 %v2895
    %v4589 = vunpack.c.l.b16 %v2896
    %v4590 = vunpack.c.h.b16 %v2896
    %v4591 = vunpack.c.l.b16 %v2897
    %v4592 = vunpack.c.l.b16 %v2898
    %v4593 = vunpack.c.h.b16 %v2898
    %v4594 = vunpack.c.l.b16 %v2899
    %v4595 = vpack.c.b16 %v4550, %v4547
    %v4596 = vpack.c.b16 %v4551, %v4548
    %v4597 = vpack.c.b16 %v4552, %v4549
    %v4598 = vpack.c.b16 %v4556, %v4553
    %v4599 = vpack.c.b16 %v4557, %v4554
    %v4600 = vpack.c.b16 %v4558, %v4555
    %v4601 = vpack.c.b16 %v4562, %v4559
    %v4602 = vpack.c.b16 %v4563, %v4560
    %v4603 = vpack.c.b16 %v4564, %v4561
    %v4604 = vpack.c.b16 %v4568, %v4565
    %v4605 = vpack.c.b16 %v4569, %v4566
    %v4606 = vpack.c.b16 %v4570, %v4567
    %v4607 = vpack.c.b16 %v4574, %v4571
    %v4608 = vpack.c.b16 %v4575, %v4572
    %v4609 = vpack.c.b16 %v4576, %v4573
    %v4610 = vpack.c.b16 %v4580, %v4577
    %v4611 = vpack.c.b16 %v4581, %v4578
    %v4612 = vpack.c.b16 %v4582, %v4579
    %v4613 = vpack.c.b16 %v4586, %v4583
    %v4614 = vpack.c.b16 %v4587, %v4584
    %v4615 = vpack.c.b16 %v4588, %v4585
    %v4616 = vpack.c.b16 %v4592, %v4589
    %v4617 = vpack.c.b16 %v4593, %v4590
    %v4618 = vpack.c.b16 %v4594, %v4591
    %4643 = vmatprep.subr.bf16.mxu0 %v4617
    %4644 = vmatpush1.bf16.msra.mxu0 %v4616
    %4645 = vmatprep.subr.bf16.mxu0 %v4614
    %4646 = vmatpush1.bf16.msra.mxu0 %v4613
    %4647 = vmatprep.subr.bf16.mxu0 %v4611
    %4648 = vmatpush1.bf16.msra.mxu0 %v4610
    %4649 = vmatprep.subr.bf16.mxu0 %v4608
    %4650 = vmatpush1.bf16.msra.mxu0 %v4607
    %4651 = vmatprep.subr.bf16.mxu0 %v4605
    %4652 = vmatpush1.bf16.msra.mxu0 %v4604
    %4653 = vmatprep.subr.bf16.mxu0 %v4602
    %4654 = vmatpush1.bf16.msra.mxu0 %v4601
    %4655 = vmatprep.subr.bf16.mxu0 %v4599
    %4656 = vmatpush1.bf16.msra.mxu0 %v4598
    %4657 = vmatprep.subr.bf16.mxu0 %v4596
    %4658 = vmatpush1.bf16.msra.mxu0 %v4595
    %4659 = vmatprep.subr.bf16.mxu0 0
    %4660 = vmatpush2.bf16.msra.mxu0 0
    %4661 = vmatprep.subr.bf16.mxu0 0
    %4662 = vmatpush2.bf16.msra.mxu0 0
    %4663 = vmatprep.subr.bf16.mxu0 0
    %4664 = vmatpush2.bf16.msra.mxu0 0
    %4665 = vmatprep.subr.bf16.mxu0 0
    %4666 = vmatpush2.bf16.msra.mxu0 0
    %4667 = vmatprep.subr.bf16.mxu0 0
    %4668 = vmatpush2.bf16.msra.mxu0 0
    %4669 = vmatprep.subr.bf16.mxu0 0
    %4670 = vmatpush2.bf16.msra.mxu0 0
    %4671 = vmatprep.subr.bf16.mxu0 0
    %4672 = vmatpush2.bf16.msra.mxu0 0
    %4673 = vmatprep.subr.bf16.mxu0 0
    %4674 = vmatpush2.bf16.msra.mxu0 0
    %4675 = vmatprep.mubr.bf16.mxu0 0
    %4676 = vmatmul.mubr.bf16.gmra.mxu0 %v4513
    %v4677 = vpop.f32.mrf.mxu0
    %v4678 = vadd.f32 0.0, %v4677
    %v4679 = vpop.f32.mrf.mxu0
    %v4680 = vadd.f32 0.0, %v4679
    %v4681 = vpop.f32.mrf.mxu0
    %v4682 = vadd.f32 0.0, %v4681
    %v4683 = vpop.f32.mrf.mxu0
    %v4684 = vadd.f32 0.0, %v4683
    %4685 = vmatprep.mubr.bf16.mxu0 0
    %4686 = vmatmul.mubr.bf16.gmra.mxu0 %v4514
    %v4687 = vpop.f32.mrf.mxu0
    %v4688 = vadd.f32 0.0, %v4687
    %v4689 = vpop.f32.mrf.mxu0
    %v4690 = vadd.f32 0.0, %v4689
    %v4691 = vpop.f32.mrf.mxu0
    %v4692 = vadd.f32 0.0, %v4691
    %v4693 = vpop.f32.mrf.mxu0
    %v4694 = vadd.f32 0.0, %v4693
    %4695 = vdwg.mxu0
    %4696 = vmatprep.subr.bf16.mxu0 0
    %4697 = vmatpush1.bf16.msra.mxu0 %v4618
    %4698 = vmatprep.subr.bf16.mxu0 0
    %4699 = vmatpush1.bf16.msra.mxu0 %v4615
    %4700 = vmatprep.subr.bf16.mxu0 0
    %4701 = vmatpush1.bf16.msra.mxu0 %v4612
    %4702 = vmatprep.subr.bf16.mxu0 0
    %4703 = vmatpush1.bf16.msra.mxu0 %v4609
    %4704 = vmatprep.subr.bf16.mxu0 0
    %4705 = vmatpush1.bf16.msra.mxu0 %v4606
    %4706 = vmatprep.subr.bf16.mxu0 0
    %4707 = vmatpush1.bf16.msra.mxu0 %v4603
    %4708 = vmatprep.subr.bf16.mxu0 0
    %4709 = vmatpush1.bf16.msra.mxu0 %v4600
    %4710 = vmatprep.subr.bf16.mxu0 0
    %4711 = vmatpush1.bf16.msra.mxu0 %v4597
    %4712 = vmatprep.subr.bf16.mxu0 0
    %4713 = vmatpush2.bf16.msra.mxu0 0
    %4714 = vmatprep.subr.bf16.mxu0 0
    %4715 = vmatpush2.bf16.msra.mxu0 0
    %4716 = vmatprep.subr.bf16.mxu0 0
    %4717 = vmatpush2.bf16.msra.mxu0 0
    %4718 = vmatprep.subr.bf16.mxu0 0
    %4719 = vmatpush2.bf16.msra.mxu0 0
    %4720 = vmatprep.subr.bf16.mxu0 0
    %4721 = vmatpush2.bf16.msra.mxu0 0
    %4722 = vmatprep.subr.bf16.mxu0 0
    %4723 = vmatpush2.bf16.msra.mxu0 0
    %4724 = vmatprep.subr.bf16.mxu0 0
    %4725 = vmatpush2.bf16.msra.mxu0 0
    %4726 = vmatprep.subr.bf16.mxu0 0
    %4727 = vmatpush2.bf16.msra.mxu0 0
    %4728 = vmatprep.mubr.bf16.mxu0 0
    %4729 = vmatmul.mubr.bf16.gmra.mxu0 %v4513
    %v4730 = vpop.f32.mrf.mxu0
    %v4731 = vadd.f32 0.0, %v4730
    %v4732 = vpop.f32.mrf.mxu0
    %v4733 = vpop.f32.mrf.mxu0
    %v4734 = vadd.f32 0.0, %v4733
    %v4735 = vpop.f32.mrf.mxu0
    %4736 = vmatprep.mubr.bf16.mxu0 0
    %4737 = vmatmul.mubr.bf16.gmra.mxu0 %v4514
    %v4738 = vpop.f32.mrf.mxu0
    %v4739 = vadd.f32 0.0, %v4738
    %v4740 = vpop.f32.mrf.mxu0
    %v4741 = vpop.f32.mrf.mxu0
    %v4742 = vadd.f32 0.0, %v4741
    %v4743 = vpop.f32.mrf.mxu0
    %4744 = vdwg.mxu0
    %v4745 = vadd.f32 %v4275, %v4678
    %v4746 = vadd.f32 %v4276, %v4680
    %v4747 = vadd.f32 %v4277, %v4731
    %v4748 = vadd.f32 %v4278, %v4682
    %v4749 = vadd.f32 %v4279, %v4684
    %v4750 = vadd.f32 %v4280, %v4734
    %v4751 = vadd.f32 %v4281, %v4688
    %v4752 = vadd.f32 %v4282, %v4690
    %v4753 = vadd.f32 %v4283, %v4739
    %v4754 = vadd.f32 %v4284, %v4692
    %v4755 = vadd.f32 %v4285, %v4694
    %v4756 = vadd.f32 %v4286, %v4742
    %v4758 = vlaneseq
    %v4759 = vshrl.u32 %v4758, 7
    %v4760 = vsub.s32 0, %v4759
    %v4761 = vrot.slane %v2771, %v4760
    %v4762 = vlaneseq
    %v4763 = vshrl.u32 %v4762, 7
    %v4764 = vsub.s32 1, %v4763
    %v4765 = vrot.slane %v2771, %v4764
    %v4766 = vlaneseq
    %v4767 = vshrl.u32 %v4766, 7
    %v4768 = vsub.s32 2, %v4767
    %v4769 = vrot.slane %v2771, %v4768
    %v4773 = vadd.f32 %v4745, %v4761
    %v4774 = vadd.f32 %v4746, %v4765
    %v4775 = vadd.f32 %v4747, %v4769
    %v4776 = vadd.f32 %v4748, %v4761
    %v4777 = vadd.f32 %v4749, %v4765
    %v4778 = vadd.f32 %v4750, %v4769
    %v4779 = vadd.f32 %v4751, %v4761
    %v4780 = vadd.f32 %v4752, %v4765
    %v4781 = vadd.f32 %v4753, %v4769
    %v4782 = vadd.f32 %v4754, %v4761
    %v4783 = vadd.f32 %v4755, %v4765
    %v4784 = vadd.f32 %v4756, %v4769
    %4785 = vst [vmem:[#allocation10] sm:$0xff] %v4773
    %4786 = vst [vmem:[#allocation10 + $0x8] sm:$0xff] %v4774
    %4787 = vst [vmem:[#allocation10 + $0x10] sm:$0xff] %v4775
    %4788 = vst [vmem:[#allocation10 + $0x18] sm:$0xff] %v4776
    %4789 = vst [vmem:[#allocation10 + $0x20] sm:$0xff] %v4777
    %4790 = vst [vmem:[#allocation10 + $0x28] sm:$0xff] %v4778
    %4791 = vst [vmem:[#allocation10 + $0x30] sm:$0xff] %v4779
    %4792 = vst [vmem:[#allocation10 + $0x38] sm:$0xff] %v4780
    %4793 = vst [vmem:[#allocation10 + $0x40] sm:$0xff] %v4781
    %4794 = vst [vmem:[#allocation10 + $0x48] sm:$0xff] %v4782
    %4795 = vst [vmem:[#allocation10 + $0x50] sm:$0xff] %v4783
    %4796 = vst [vmem:[#allocation10 + $0x58] sm:$0xff] %v4784
    %4797 = vmatprep.subr.mxu0 0.0
    %4798 = vmatpush1.xpose.msra.mxu0 0.0
    %4799 = vmatprep.subr.mxu0 0.0
    %4800 = vmatpush1.xpose.msra.mxu0 0.0
    %4801 = vmatprep.subr.mxu0 0.0
    %4802 = vmatpush1.xpose.msra.mxu0 0.0
    %4803 = vmatprep.subr.mxu0 0.0
    %4804 = vmatpush1.xpose.msra.mxu0 0.0
    %4805 = vmatprep.subr.mxu0 0.0
    %4806 = vmatpush1.xpose.msra.mxu0 0.0
    %4807 = vmatprep.subr.mxu0 0.0
    %4808 = vmatpush1.xpose.msra.mxu0 0.0
    %4809 = vmatprep.subr.mxu0 0.0
    %4810 = vmatpush1.xpose.msra.mxu0 0.0
    %4811 = vmatprep.subr.mxu0 0.0
    %4812 = vmatpush1.xpose.msra.mxu0 0.0
    %4813 = vmatprep.subr.mxu0 0.0
    %4814 = vmatpush1.xpose.msra.mxu0 0.0
    %4815 = vmatprep.subr.mxu0 0.0
    %4816 = vmatpush1.xpose.msra.mxu0 0.0
    %4817 = vmatprep.subr.mxu0 0.0
    %4818 = vmatpush1.xpose.msra.mxu0 0.0
    %4819 = vmatprep.subr.mxu0 0.0
    %4820 = vmatpush1.xpose.msra.mxu0 0.0
    %4821 = vmatprep.subr.mxu0 0.0
    %4822 = vmatpush1.xpose.msra.mxu0 %v2314
    %4823 = vmatprep.subr.mxu0 0.0
    %4824 = vmatpush1.xpose.msra.mxu0 %v2310
    %4825 = vmatprep.subr.mxu0 0.0
    %4826 = vmatpush1.xpose.msra.mxu0 %v2304
    %4827 = vmatprep.subr.mxu0 0.0
    %4828 = vmatpush1.xpose.msra.mxu0 %v2300
    %4829 = vmatprep.subr.mxu0 0.0
    %4830 = vmatpush2.xpose.msra.mxu0 0.0
    %4831 = vmatprep.subr.mxu0 0.0
    %4832 = vmatpush2.xpose.msra.mxu0 0.0
    %4833 = vmatprep.subr.mxu0 0.0
    %4834 = vmatpush2.xpose.msra.mxu0 0.0
    %4835 = vmatprep.subr.mxu0 0.0
    %4836 = vmatpush2.xpose.msra.mxu0 0.0
    %4837 = vmatprep.subr.mxu0 0.0
    %4838 = vmatpush2.xpose.msra.mxu0 0.0
    %4839 = vmatprep.subr.mxu0 0.0
    %4840 = vmatpush2.xpose.msra.mxu0 0.0
    %4841 = vmatprep.subr.mxu0 0.0
    %4842 = vmatpush2.xpose.msra.mxu0 0.0
    %4843 = vmatprep.subr.mxu0 0.0
    %4844 = vmatpush2.xpose.msra.mxu0 0.0
    %4845 = vmatprep.subr.mxu0 0.0
    %4846 = vmatpush2.xpose.msra.mxu0 0.0
    %4847 = vmatprep.subr.mxu0 0.0
    %4848 = vmatpush2.xpose.msra.mxu0 0.0
    %4849 = vmatprep.subr.mxu0 0.0
    %4850 = vmatpush2.xpose.msra.mxu0 0.0
    %4851 = vmatprep.subr.mxu0 0.0
    %4852 = vmatpush2.xpose.msra.mxu0 0.0
    %4853 = vmatprep.subr.mxu0 0.0
    %4854 = vmatpush2.xpose.msra.mxu0 0.0
    %4855 = vmatprep.subr.mxu0 0.0
    %4856 = vmatpush2.xpose.msra.mxu0 0.0
    %4857 = vmatprep.subr.mxu0 0.0
    %4858 = vmatpush2.xpose.msra.mxu0 0.0
    %4859 = vmatprep.subr.mxu0 0.0
    %4860 = vmatpush2.xpose.msra.mxu0 0.0
    %4861 = vmatprep.mubr.f32.mxu0 0.0
    %4862 = vmatmul.mubr.f32.gmra.mxu0 %v2008
    %v4863 = vpop.f32.mrf.mxu0
    %v4864 = vadd.f32 %v2767, %v4863
    %v4865 = vpop.f32.mrf.mxu0
    %4866 = vmatprep.mubr.f32.mxu0 0.0
    %4867 = vmatmul.mubr.f32.gmra.mxu0 %v2012
    %v4868 = vpop.f32.mrf.mxu0
    %v4869 = vadd.f32 %v2768, %v4868
    %v4870 = vpop.f32.mrf.mxu0
    %4871 = vmatprep.mubr.f32.mxu0 0.0
    %4872 = vmatmul.mubr.f32.gmra.mxu0 %v2018
    %v4873 = vpop.f32.mrf.mxu0
    %v4874 = vadd.f32 %v2769, %v4873
    %v4875 = vpop.f32.mrf.mxu0
    %4876 = vmatprep.mubr.f32.mxu0 0.0
    %4877 = vmatmul.mubr.f32.gmra.mxu0 %v2022
    %v4878 = vpop.f32.mrf.mxu0
    %v4879 = vadd.f32 %v2770, %v4878
    %v4880 = vpop.f32.mrf.mxu0
    %4881 = vdwg.mxu0
    %v4882 = vsel %vm2985, %v4864, -inf
    %4883 = vmax.xlane.f32.xlu0 %v4882
    %v4884 = vpop.xlane.xlu0 %4883
    %v4885 = vsel %vm2985, %v4869, -inf
    %4886 = vmax.xlane.f32.xlu0 %v4885
    %v4887 = vpop.xlane.xlu0 %4886
    %v4888 = vsel %vm2985, %v4874, -inf
    %4889 = vmax.xlane.f32.xlu0 %v4888
    %v4890 = vpop.xlane.xlu0 %4889
    %v4891 = vsel %vm2985, %v4879, -inf
    %4892 = vmax.xlane.f32.xlu0 %v4891
    %v4893 = vpop.xlane.xlu0 %4892
    %v4894 = vsub.f32 %v4864, %v4884
    %v4895 = vsub.f32 %v4869, %v4887
    %v4896 = vsub.f32 %v4874, %v4890
    %v4897 = vsub.f32 %v4879, %v4893
    %v4898 = vmul.f32 %v4894, 1.442695
    %v4899 = vpow.pop %v4898
    %v4900 = vmul.f32 %v4895, 1.442695
    %v4901 = vpow.pop %v4900
    %v4902 = vmul.f32 %v4896, 1.442695
    %v4903 = vpow.pop %v4902
    %v4904 = vmul.f32 %v4897, 1.442695
    %v4905 = vpow.pop %v4904
    %v4906 = vsel %vm2985, %v4899, 0.0
    %4907 = vadd.xlane.f32.xlu0 %v4906
    %v4908 = vpop.xlane.xlu0 %4907
    %v4909 = vsel %vm2985, %v4901, 0.0
    %4910 = vadd.xlane.f32.xlu0 %v4909
    %v4911 = vpop.xlane.xlu0 %4910
    %v4912 = vsel %vm2985, %v4903, 0.0
    %4913 = vadd.xlane.f32.xlu0 %v4912
    %v4914 = vpop.xlane.xlu0 %4913
    %v4915 = vsel %vm2985, %v4905, 0.0
    %4916 = vadd.xlane.f32.xlu0 %v4915
    %v4917 = vpop.xlane.xlu0 %4916
    %v4918 = vrcp.pop %v4908
    %v4919 = vrcp.pop %v4911
    %v4920 = vrcp.pop %v4914
    %v4921 = vrcp.pop %v4917
    %v4922 = vmul.f32 %v4899, %v4918
    %v4923 = vmul.f32 %v4901, %v4919
    %v4924 = vmul.f32 %v4903, %v4920
    %v4925 = vmul.f32 %v4905, %v4921
    %v4927 = vsel %vm2985, %v4922, 0
    %v4930 = vsel %vm2985, %v4923, 0
    %v4933 = vsel %vm2985, %v4924, 0
    %v4936 = vsel %vm2985, %v4925, 0
    %4938 = vmatprep.subr.mxu0 0.0
    %4939 = vmatpush1.msra.mxu0 0.0
    %4940 = vmatprep.subr.mxu0 0.0
    %4941 = vmatpush1.msra.mxu0 0.0
    %4942 = vmatprep.subr.mxu0 0.0
    %4943 = vmatpush1.msra.mxu0 0.0
    %4944 = vmatprep.subr.mxu0 0.0
    %4945 = vmatpush1.msra.mxu0 0.0
    %4946 = vmatprep.subr.mxu0 0.0
    %4947 = vmatpush1.msra.mxu0 0.0
    %4948 = vmatprep.subr.mxu0 0.0
    %4949 = vmatpush1.msra.mxu0 0.0
    %4950 = vmatprep.subr.mxu0 0.0
    %4951 = vmatpush1.msra.mxu0 0.0
    %4952 = vmatprep.subr.mxu0 0.0
    %4953 = vmatpush1.msra.mxu0 0.0
    %4954 = vmatprep.subr.mxu0 0.0
    %4955 = vmatpush1.msra.mxu0 0.0
    %4956 = vmatprep.subr.mxu0 0.0
    %4957 = vmatpush1.msra.mxu0 0.0
    %4958 = vmatprep.subr.mxu0 0.0
    %4959 = vmatpush1.msra.mxu0 0.0
    %4960 = vmatprep.subr.mxu0 0.0
    %4961 = vmatpush1.msra.mxu0 0.0
    %4962 = vmatprep.subr.mxu0 0.0
    %4963 = vmatpush1.msra.mxu0 %v2606
    %4964 = vmatprep.subr.mxu0 0.0
    %4965 = vmatpush1.msra.mxu0 %v2602
    %4966 = vmatprep.subr.mxu0 0.0
    %4967 = vmatpush1.msra.mxu0 %v2596
    %4968 = vmatprep.subr.mxu0 0.0
    %4969 = vmatpush1.msra.mxu0 %v2592
    %4970 = vmatprep.subr.mxu0 0.0
    %4971 = vmatpush2.msra.mxu0 0.0
    %4972 = vmatprep.subr.mxu0 0.0
    %4973 = vmatpush2.msra.mxu0 0.0
    %4974 = vmatprep.subr.mxu0 0.0
    %4975 = vmatpush2.msra.mxu0 0.0
    %4976 = vmatprep.subr.mxu0 0.0
    %4977 = vmatpush2.msra.mxu0 0.0
    %4978 = vmatprep.subr.mxu0 0.0
    %4979 = vmatpush2.msra.mxu0 0.0
    %4980 = vmatprep.subr.mxu0 0.0
    %4981 = vmatpush2.msra.mxu0 0.0
    %4982 = vmatprep.subr.mxu0 0.0
    %4983 = vmatpush2.msra.mxu0 0.0
    %4984 = vmatprep.subr.mxu0 0.0
    %4985 = vmatpush2.msra.mxu0 0.0
    %4986 = vmatprep.subr.mxu0 0.0
    %4987 = vmatpush2.msra.mxu0 0.0
    %4988 = vmatprep.subr.mxu0 0.0
    %4989 = vmatpush2.msra.mxu0 0.0
    %4990 = vmatprep.subr.mxu0 0.0
    %4991 = vmatpush2.msra.mxu0 0.0
    %4992 = vmatprep.subr.mxu0 0.0
    %4993 = vmatpush2.msra.mxu0 0.0
    %4994 = vmatprep.subr.mxu0 0.0
    %4995 = vmatpush2.msra.mxu0 0.0
    %4996 = vmatprep.subr.mxu0 0.0
    %4997 = vmatpush2.msra.mxu0 0.0
    %4998 = vmatprep.subr.mxu0 0.0
    %4999 = vmatpush2.msra.mxu0 0.0
    %5000 = vmatprep.subr.mxu0 0.0
    %5001 = vmatpush2.msra.mxu0 0.0
    %5002 = vmatprep.mubr.f32.mxu0 0.0
    %5003 = vmatmul.mubr.f32.gmra.mxu0 %v4927
    %v5004 = vpop.f32.mrf.mxu0
    %v5005 = vadd.f32 0.0, %v5004
    %v5006 = vpop.f32.mrf.mxu0
    %5007 = vmatprep.mubr.f32.mxu0 0.0
    %5008 = vmatmul.mubr.f32.gmra.mxu0 %v4930
    %v5009 = vpop.f32.mrf.mxu0
    %v5010 = vadd.f32 0.0, %v5009
    %v5011 = vpop.f32.mrf.mxu0
    %5012 = vmatprep.mubr.f32.mxu0 0.0
    %5013 = vmatmul.mubr.f32.gmra.mxu0 %v4933
    %v5014 = vpop.f32.mrf.mxu0
    %v5015 = vadd.f32 0.0, %v5014
    %v5016 = vpop.f32.mrf.mxu0
    %5017 = vmatprep.mubr.f32.mxu0 0.0
    %5018 = vmatmul.mubr.f32.gmra.mxu0 %v4936
    %v5019 = vpop.f32.mrf.mxu0
    %v5020 = vadd.f32 0.0, %v5019
    %v5021 = vpop.f32.mrf.mxu0
    %5022 = vdwg.mxu0
    %v5023 = vpack.c.bf16 %v5010, %v5005
    %v5024 = vpack.c.bf16 %v5020, %v5015
    %5025 = vmatprep.subr.mxu0 0.0
    %5026 = vmatpush1.xpose.msra.mxu0 0.0
    %5027 = vmatprep.subr.mxu0 0.0
    %5028 = vmatpush1.xpose.msra.mxu0 0.0
    %5029 = vmatprep.subr.mxu0 0.0
    %5030 = vmatpush1.xpose.msra.mxu0 0.0
    %5031 = vmatprep.subr.mxu0 0.0
    %5032 = vmatpush1.xpose.msra.mxu0 0.0
    %5033 = vmatprep.subr.mxu0 0.0
    %5034 = vmatpush1.xpose.msra.mxu0 0.0
    %5035 = vmatprep.subr.mxu0 0.0
    %5036 = vmatpush1.xpose.msra.mxu0 0.0
    %5037 = vmatprep.subr.mxu0 0.0
    %5038 = vmatpush1.xpose.msra.mxu0 0.0
    %5039 = vmatprep.subr.mxu0 0.0
    %5040 = vmatpush1.xpose.msra.mxu0 0.0
    %5041 = vmatprep.subr.mxu0 0.0
    %5042 = vmatpush1.xpose.msra.mxu0 0.0
    %5043 = vmatprep.subr.mxu0 0.0
    %5044 = vmatpush1.xpose.msra.mxu0 0.0
    %5045 = vmatprep.subr.mxu0 0.0
    %5046 = vmatpush1.xpose.msra.mxu0 0.0
    %5047 = vmatprep.subr.mxu0 0.0
    %5048 = vmatpush1.xpose.msra.mxu0 0.0
    %5049 = vmatprep.subr.mxu0 0.0
    %5050 = vmatpush1.xpose.msra.mxu0 %v2316
    %5051 = vmatprep.subr.mxu0 0.0
    %5052 = vmatpush1.xpose.msra.mxu0 %v2312
    %5053 = vmatprep.subr.mxu0 0.0
    %5054 = vmatpush1.xpose.msra.mxu0 %v2306
    %5055 = vmatprep.subr.mxu0 0.0
    %5056 = vmatpush1.xpose.msra.mxu0 %v2302
    %5057 = vmatprep.subr.mxu0 0.0
    %5058 = vmatpush2.xpose.msra.mxu0 0.0
    %5059 = vmatprep.subr.mxu0 0.0
    %5060 = vmatpush2.xpose.msra.mxu0 0.0
    %5061 = vmatprep.subr.mxu0 0.0
    %5062 = vmatpush2.xpose.msra.mxu0 0.0
    %5063 = vmatprep.subr.mxu0 0.0
    %5064 = vmatpush2.xpose.msra.mxu0 0.0
    %5065 = vmatprep.subr.mxu0 0.0
    %5066 = vmatpush2.xpose.msra.mxu0 0.0
    %5067 = vmatprep.subr.mxu0 0.0
    %5068 = vmatpush2.xpose.msra.mxu0 0.0
    %5069 = vmatprep.subr.mxu0 0.0
    %5070 = vmatpush2.xpose.msra.mxu0 0.0
    %5071 = vmatprep.subr.mxu0 0.0
    %5072 = vmatpush2.xpose.msra.mxu0 0.0
    %5073 = vmatprep.subr.mxu0 0.0
    %5074 = vmatpush2.xpose.msra.mxu0 0.0
    %5075 = vmatprep.subr.mxu0 0.0
    %5076 = vmatpush2.xpose.msra.mxu0 0.0
    %5077 = vmatprep.subr.mxu0 0.0
    %5078 = vmatpush2.xpose.msra.mxu0 0.0
    %5079 = vmatprep.subr.mxu0 0.0
    %5080 = vmatpush2.xpose.msra.mxu0 0.0
    %5081 = vmatprep.subr.mxu0 0.0
    %5082 = vmatpush2.xpose.msra.mxu0 0.0
    %5083 = vmatprep.subr.mxu0 0.0
    %5084 = vmatpush2.xpose.msra.mxu0 0.0
    %5085 = vmatprep.subr.mxu0 0.0
    %5086 = vmatpush2.xpose.msra.mxu0 0.0
    %5087 = vmatprep.subr.mxu0 0.0
    %5088 = vmatpush2.xpose.msra.mxu0 0.0
    %5089 = vmatprep.mubr.f32.mxu0 0.0
    %5090 = vmatmul.mubr.f32.gmra.mxu0 %v2010
    %v5091 = vpop.f32.mrf.mxu0
    %v5092 = vadd.f32 %v2767, %v5091
    %v5093 = vpop.f32.mrf.mxu0
    %5094 = vmatprep.mubr.f32.mxu0 0.0
    %5095 = vmatmul.mubr.f32.gmra.mxu0 %v2014
    %v5096 = vpop.f32.mrf.mxu0
    %v5097 = vadd.f32 %v2768, %v5096
    %v5098 = vpop.f32.mrf.mxu0
    %5099 = vmatprep.mubr.f32.mxu0 0.0
    %5100 = vmatmul.mubr.f32.gmra.mxu0 %v2020
    %v5101 = vpop.f32.mrf.mxu0
    %v5102 = vadd.f32 %v2769, %v5101
    %v5103 = vpop.f32.mrf.mxu0
    %5104 = vmatprep.mubr.f32.mxu0 0.0
    %5105 = vmatmul.mubr.f32.gmra.mxu0 %v2024
    %v5106 = vpop.f32.mrf.mxu0
    %v5107 = vadd.f32 %v2770, %v5106
    %v5108 = vpop.f32.mrf.mxu0
    %5109 = vdwg.mxu0
    %v5110 = vsel %vm2985, %v5092, -inf
    %5111 = vmax.xlane.f32.xlu0 %v5110
    %v5112 = vpop.xlane.xlu0 %5111
    %v5113 = vsel %vm2985, %v5097, -inf
    %5114 = vmax.xlane.f32.xlu0 %v5113
    %v5115 = vpop.xlane.xlu0 %5114
    %v5116 = vsel %vm2985, %v5102, -inf
    %5117 = vmax.xlane.f32.xlu0 %v5116
    %v5118 = vpop.xlane.xlu0 %5117
    %v5119 = vsel %vm2985, %v5107, -inf
    %5120 = vmax.xlane.f32.xlu0 %v5119
    %v5121 = vpop.xlane.xlu0 %5120
    %v5122 = vsub.f32 %v5092, %v5112
    %v5123 = vsub.f32 %v5097, %v5115
    %v5124 = vsub.f32 %v5102, %v5118
    %v5125 = vsub.f32 %v5107, %v5121
    %v5126 = vmul.f32 %v5122, 1.442695
    %v5127 = vpow.pop %v5126
    %v5128 = vmul.f32 %v5123, 1.442695
    %v5129 = vpow.pop %v5128
    %v5130 = vmul.f32 %v5124, 1.442695
    %v5131 = vpow.pop %v5130
    %v5132 = vmul.f32 %v5125, 1.442695
    %v5133 = vpow.pop %v5132
    %v5134 = vsel %vm2985, %v5127, 0.0
    %5135 = vadd.xlane.f32.xlu0 %v5134
    %v5136 = vpop.xlane.xlu0 %5135
    %v5137 = vsel %vm2985, %v5129, 0.0
    %5138 = vadd.xlane.f32.xlu0 %v5137
    %v5139 = vpop.xlane.xlu0 %5138
    %v5140 = vsel %vm2985, %v5131, 0.0
    %5141 = vadd.xlane.f32.xlu0 %v5140
    %v5142 = vpop.xlane.xlu0 %5141
    %v5143 = vsel %vm2985, %v5133, 0.0
    %5144 = vadd.xlane.f32.xlu0 %v5143
    %v5145 = vpop.xlane.xlu0 %5144
    %v5146 = vrcp.pop %v5136
    %v5147 = vrcp.pop %v5139
    %v5148 = vrcp.pop %v5142
    %v5149 = vrcp.pop %v5145
    %v5150 = vmul.f32 %v5127, %v5146
    %v5151 = vmul.f32 %v5129, %v5147
    %v5152 = vmul.f32 %v5131, %v5148
    %v5153 = vmul.f32 %v5133, %v5149
    %v5155 = vsel %vm2985, %v5150, 0
    %v5158 = vsel %vm2985, %v5151, 0
    %v5161 = vsel %vm2985, %v5152, 0
    %v5164 = vsel %vm2985, %v5153, 0
    %5166 = vmatprep.subr.mxu0 0.0
    %5167 = vmatpush1.msra.mxu0 0.0
    %5168 = vmatprep.subr.mxu0 0.0
    %5169 = vmatpush1.msra.mxu0 0.0
    %5170 = vmatprep.subr.mxu0 0.0
    %5171 = vmatpush1.msra.mxu0 0.0
    %5172 = vmatprep.subr.mxu0 0.0
    %5173 = vmatpush1.msra.mxu0 0.0
    %5174 = vmatprep.subr.mxu0 0.0
    %5175 = vmatpush1.msra.mxu0 0.0
    %5176 = vmatprep.subr.mxu0 0.0
    %5177 = vmatpush1.msra.mxu0 0.0
    %5178 = vmatprep.subr.mxu0 0.0
    %5179 = vmatpush1.msra.mxu0 0.0
    %5180 = vmatprep.subr.mxu0 0.0
    %5181 = vmatpush1.msra.mxu0 0.0
    %5182 = vmatprep.subr.mxu0 0.0
    %5183 = vmatpush1.msra.mxu0 0.0
    %5184 = vmatprep.subr.mxu0 0.0
    %5185 = vmatpush1.msra.mxu0 0.0
    %5186 = vmatprep.subr.mxu0 0.0
    %5187 = vmatpush1.msra.mxu0 0.0
    %5188 = vmatprep.subr.mxu0 0.0
    %5189 = vmatpush1.msra.mxu0 0.0
    %5190 = vmatprep.subr.mxu0 0.0
    %5191 = vmatpush1.msra.mxu0 %v2608
    %5192 = vmatprep.subr.mxu0 0.0
    %5193 = vmatpush1.msra.mxu0 %v2604
    %5194 = vmatprep.subr.mxu0 0.0
    %5195 = vmatpush1.msra.mxu0 %v2598
    %5196 = vmatprep.subr.mxu0 0.0
    %5197 = vmatpush1.msra.mxu0 %v2594
    %5198 = vmatprep.subr.mxu0 0.0
    %5199 = vmatpush2.msra.mxu0 0.0
    %5200 = vmatprep.subr.mxu0 0.0
    %5201 = vmatpush2.msra.mxu0 0.0
    %5202 = vmatprep.subr.mxu0 0.0
    %5203 = vmatpush2.msra.mxu0 0.0
    %5204 = vmatprep.subr.mxu0 0.0
    %5205 = vmatpush2.msra.mxu0 0.0
    %5206 = vmatprep.subr.mxu0 0.0
    %5207 = vmatpush2.msra.mxu0 0.0
    %5208 = vmatprep.subr.mxu0 0.0
    %5209 = vmatpush2.msra.mxu0 0.0
    %5210 = vmatprep.subr.mxu0 0.0
    %5211 = vmatpush2.msra.mxu0 0.0
    %5212 = vmatprep.subr.mxu0 0.0
    %5213 = vmatpush2.msra.mxu0 0.0
    %5214 = vmatprep.subr.mxu0 0.0
    %5215 = vmatpush2.msra.mxu0 0.0
    %5216 = vmatprep.subr.mxu0 0.0
    %5217 = vmatpush2.msra.mxu0 0.0
    %5218 = vmatprep.subr.mxu0 0.0
    %5219 = vmatpush2.msra.mxu0 0.0
    %5220 = vmatprep.subr.mxu0 0.0
    %5221 = vmatpush2.msra.mxu0 0.0
    %5222 = vmatprep.subr.mxu0 0.0
    %5223 = vmatpush2.msra.mxu0 0.0
    %5224 = vmatprep.subr.mxu0 0.0
    %5225 = vmatpush2.msra.mxu0 0.0
    %5226 = vmatprep.subr.mxu0 0.0
    %5227 = vmatpush2.msra.mxu0 0.0
    %5228 = vmatprep.subr.mxu0 0.0
    %5229 = vmatpush2.msra.mxu0 0.0
    %5230 = vmatprep.mubr.f32.mxu0 0.0
    %5231 = vmatmul.mubr.f32.gmra.mxu0 %v5155
    %v5232 = vpop.f32.mrf.mxu0
    %v5233 = vadd.f32 0.0, %v5232
    %v5234 = vpop.f32.mrf.mxu0
    %5235 = vmatprep.mubr.f32.mxu0 0.0
    %5236 = vmatmul.mubr.f32.gmra.mxu0 %v5158
    %v5237 = vpop.f32.mrf.mxu0
    %v5238 = vadd.f32 0.0, %v5237
    %v5239 = vpop.f32.mrf.mxu0
    %5240 = vmatprep.mubr.f32.mxu0 0.0
    %5241 = vmatmul.mubr.f32.gmra.mxu0 %v5161
    %v5242 = vpop.f32.mrf.mxu0
    %v5243 = vadd.f32 0.0, %v5242
    %v5244 = vpop.f32.mrf.mxu0
    %5245 = vmatprep.mubr.f32.mxu0 0.0
    %5246 = vmatmul.mubr.f32.gmra.mxu0 %v5164
    %v5247 = vpop.f32.mrf.mxu0
    %v5248 = vadd.f32 0.0, %v5247
    %v5249 = vpop.f32.mrf.mxu0
    %5250 = vdwg.mxu0
    %v5251 = vpack.c.bf16 %v5238, %v5233
    %v5252 = vpack.c.bf16 %v5248, %v5243
    %5253 = vmatprep.subr.bf16.mxu0 %v3459
    %5254 = vmatpush1.bf16.msra.mxu0 %v3458
    %5255 = vmatprep.subr.bf16.mxu0 %v3456
    %5256 = vmatpush1.bf16.msra.mxu0 %v3455
    %5257 = vmatprep.subr.bf16.mxu0 %v3453
    %5258 = vmatpush1.bf16.msra.mxu0 %v3452
    %5259 = vmatprep.subr.bf16.mxu0 %v3450
    %5260 = vmatpush1.bf16.msra.mxu0 %v3449
    %5261 = vmatprep.subr.bf16.mxu0 %v3447
    %5262 = vmatpush1.bf16.msra.mxu0 %v3446
    %5263 = vmatprep.subr.bf16.mxu0 %v3444
    %5264 = vmatpush1.bf16.msra.mxu0 %v3443
    %5265 = vmatprep.subr.bf16.mxu0 %v3441
    %5266 = vmatpush1.bf16.msra.mxu0 %v3440
    %5267 = vmatprep.subr.bf16.mxu0 %v3438
    %5268 = vmatpush1.bf16.msra.mxu0 %v3437
    %5269 = vmatprep.subr.bf16.mxu0 0
    %5270 = vmatpush2.bf16.msra.mxu0 0
    %5271 = vmatprep.subr.bf16.mxu0 0
    %5272 = vmatpush2.bf16.msra.mxu0 0
    %5273 = vmatprep.subr.bf16.mxu0 0
    %5274 = vmatpush2.bf16.msra.mxu0 0
    %5275 = vmatprep.subr.bf16.mxu0 0
    %5276 = vmatpush2.bf16.msra.mxu0 0
    %5277 = vmatprep.subr.bf16.mxu0 0
    %5278 = vmatpush2.bf16.msra.mxu0 0
    %5279 = vmatprep.subr.bf16.mxu0 0
    %5280 = vmatpush2.bf16.msra.mxu0 0
    %5281 = vmatprep.subr.bf16.mxu0 0
    %5282 = vmatpush2.bf16.msra.mxu0 0
    %5283 = vmatprep.subr.bf16.mxu0 0
    %5284 = vmatpush2.bf16.msra.mxu0 0
    %5285 = vmatprep.mubr.bf16.mxu0 0
    %5286 = vmatmul.mubr.bf16.gmra.mxu0 %v5251
    %v5287 = vpop.f32.mrf.mxu0
    %v5288 = vadd.f32 0.0, %v5287
    %v5289 = vpop.f32.mrf.mxu0
    %v5290 = vadd.f32 0.0, %v5289
    %v5291 = vpop.f32.mrf.mxu0
    %v5292 = vadd.f32 0.0, %v5291
    %v5293 = vpop.f32.mrf.mxu0
    %v5294 = vadd.f32 0.0, %v5293
    %5295 = vmatprep.mubr.bf16.mxu0 0
    %5296 = vmatmul.mubr.bf16.gmra.mxu0 %v5252
    %v5297 = vpop.f32.mrf.mxu0
    %v5298 = vadd.f32 0.0, %v5297
    %v5299 = vpop.f32.mrf.mxu0
    %v5300 = vadd.f32 0.0, %v5299
    %v5301 = vpop.f32.mrf.mxu0
    %v5302 = vadd.f32 0.0, %v5301
    %v5303 = vpop.f32.mrf.mxu0
    %v5304 = vadd.f32 0.0, %v5303
    %5305 = vdwg.mxu0
    %5306 = vmatprep.subr.bf16.mxu0 0
    %5307 = vmatpush1.bf16.msra.mxu0 %v3460
    %5308 = vmatprep.subr.bf16.mxu0 0
    %5309 = vmatpush1.bf16.msra.mxu0 %v3457
    %5310 = vmatprep.subr.bf16.mxu0 0
    %5311 = vmatpush1.bf16.msra.mxu0 %v3454
    %5312 = vmatprep.subr.bf16.mxu0 0
    %5313 = vmatpush1.bf16.msra.mxu0 %v3451
    %5314 = vmatprep.subr.bf16.mxu0 0
    %5315 = vmatpush1.bf16.msra.mxu0 %v3448
    %5316 = vmatprep.subr.bf16.mxu0 0
    %5317 = vmatpush1.bf16.msra.mxu0 %v3445
    %5318 = vmatprep.subr.bf16.mxu0 0
    %5319 = vmatpush1.bf16.msra.mxu0 %v3442
    %5320 = vmatprep.subr.bf16.mxu0 0
    %5321 = vmatpush1.bf16.msra.mxu0 %v3439
    %5322 = vmatprep.subr.bf16.mxu0 0
    %5323 = vmatpush2.bf16.msra.mxu0 0
    %5324 = vmatprep.subr.bf16.mxu0 0
    %5325 = vmatpush2.bf16.msra.mxu0 0
    %5326 = vmatprep.subr.bf16.mxu0 0
    %5327 = vmatpush2.bf16.msra.mxu0 0
    %5328 = vmatprep.subr.bf16.mxu0 0
    %5329 = vmatpush2.bf16.msra.mxu0 0
    %5330 = vmatprep.subr.bf16.mxu0 0
    %5331 = vmatpush2.bf16.msra.mxu0 0
    %5332 = vmatprep.subr.bf16.mxu0 0
    %5333 = vmatpush2.bf16.msra.mxu0 0
    %5334 = vmatprep.subr.bf16.mxu0 0
    %5335 = vmatpush2.bf16.msra.mxu0 0
    %5336 = vmatprep.subr.bf16.mxu0 0
    %5337 = vmatpush2.bf16.msra.mxu0 0
    %5338 = vmatprep.mubr.bf16.mxu0 0
    %5339 = vmatmul.mubr.bf16.gmra.mxu0 %v5251
    %v5340 = vpop.f32.mrf.mxu0
    %v5341 = vadd.f32 0.0, %v5340
    %v5342 = vpop.f32.mrf.mxu0
    %v5343 = vpop.f32.mrf.mxu0
    %v5344 = vadd.f32 0.0, %v5343
    %v5345 = vpop.f32.mrf.mxu0
    %5346 = vmatprep.mubr.bf16.mxu0 0
    %5347 = vmatmul.mubr.bf16.gmra.mxu0 %v5252
    %v5348 = vpop.f32.mrf.mxu0
    %v5349 = vadd.f32 0.0, %v5348
    %v5350 = vpop.f32.mrf.mxu0
    %v5351 = vpop.f32.mrf.mxu0
    %v5352 = vadd.f32 0.0, %v5351
    %v5353 = vpop.f32.mrf.mxu0
    %5354 = vdwg.mxu0
    %5355 = vmatprep.subr.bf16.mxu0 %v3689
    %5356 = vmatpush1.bf16.msra.mxu0 %v3688
    %5357 = vmatprep.subr.bf16.mxu0 %v3686
    %5358 = vmatpush1.bf16.msra.mxu0 %v3685
    %5359 = vmatprep.subr.bf16.mxu0 %v3683
    %5360 = vmatpush1.bf16.msra.mxu0 %v3682
    %5361 = vmatprep.subr.bf16.mxu0 %v3680
    %5362 = vmatpush1.bf16.msra.mxu0 %v3679
    %5363 = vmatprep.subr.bf16.mxu0 %v3677
    %5364 = vmatpush1.bf16.msra.mxu0 %v3676
    %5365 = vmatprep.subr.bf16.mxu0 %v3674
    %5366 = vmatpush1.bf16.msra.mxu0 %v3673
    %5367 = vmatprep.subr.bf16.mxu0 %v3671
    %5368 = vmatpush1.bf16.msra.mxu0 %v3670
    %5369 = vmatprep.subr.bf16.mxu0 %v3668
    %5370 = vmatpush1.bf16.msra.mxu0 %v3667
    %5371 = vmatprep.subr.bf16.mxu0 0
    %5372 = vmatpush2.bf16.msra.mxu0 0
    %5373 = vmatprep.subr.bf16.mxu0 0
    %5374 = vmatpush2.bf16.msra.mxu0 0
    %5375 = vmatprep.subr.bf16.mxu0 0
    %5376 = vmatpush2.bf16.msra.mxu0 0
    %5377 = vmatprep.subr.bf16.mxu0 0
    %5378 = vmatpush2.bf16.msra.mxu0 0
    %5379 = vmatprep.subr.bf16.mxu0 0
    %5380 = vmatpush2.bf16.msra.mxu0 0
    %5381 = vmatprep.subr.bf16.mxu0 0
    %5382 = vmatpush2.bf16.msra.mxu0 0
    %5383 = vmatprep.subr.bf16.mxu0 0
    %5384 = vmatpush2.bf16.msra.mxu0 0
    %5385 = vmatprep.subr.bf16.mxu0 0
    %5386 = vmatpush2.bf16.msra.mxu0 0
    %5387 = vmatprep.mubr.bf16.mxu0 0
    %5388 = vmatmul.mubr.bf16.gmra.mxu0 %v5023
    %v5389 = vpop.f32.mrf.mxu0
    %v5390 = vadd.f32 %v5288, %v5389
    %v5391 = vpop.f32.mrf.mxu0
    %v5392 = vadd.f32 %v5290, %v5391
    %v5393 = vpop.f32.mrf.mxu0
    %v5394 = vadd.f32 %v5292, %v5393
    %v5395 = vpop.f32.mrf.mxu0
    %v5396 = vadd.f32 %v5294, %v5395
    %5397 = vmatprep.mubr.bf16.mxu0 0
    %5398 = vmatmul.mubr.bf16.gmra.mxu0 %v5024
    %v5399 = vpop.f32.mrf.mxu0
    %v5400 = vadd.f32 %v5298, %v5399
    %v5401 = vpop.f32.mrf.mxu0
    %v5402 = vadd.f32 %v5300, %v5401
    %v5403 = vpop.f32.mrf.mxu0
    %v5404 = vadd.f32 %v5302, %v5403
    %v5405 = vpop.f32.mrf.mxu0
    %v5406 = vadd.f32 %v5304, %v5405
    %5407 = vdwg.mxu0
    %5408 = vmatprep.subr.bf16.mxu0 0
    %5409 = vmatpush1.bf16.msra.mxu0 %v3690
    %5410 = vmatprep.subr.bf16.mxu0 0
    %5411 = vmatpush1.bf16.msra.mxu0 %v3687
    %5412 = vmatprep.subr.bf16.mxu0 0
    %5413 = vmatpush1.bf16.msra.mxu0 %v3684
    %5414 = vmatprep.subr.bf16.mxu0 0
    %5415 = vmatpush1.bf16.msra.mxu0 %v3681
    %5416 = vmatprep.subr.bf16.mxu0 0
    %5417 = vmatpush1.bf16.msra.mxu0 %v3678
    %5418 = vmatprep.subr.bf16.mxu0 0
    %5419 = vmatpush1.bf16.msra.mxu0 %v3675
    %5420 = vmatprep.subr.bf16.mxu0 0
    %5421 = vmatpush1.bf16.msra.mxu0 %v3672
    %5422 = vmatprep.subr.bf16.mxu0 0
    %5423 = vmatpush1.bf16.msra.mxu0 %v3669
    %5424 = vmatprep.subr.bf16.mxu0 0
    %5425 = vmatpush2.bf16.msra.mxu0 0
    %5426 = vmatprep.subr.bf16.mxu0 0
    %5427 = vmatpush2.bf16.msra.mxu0 0
    %5428 = vmatprep.subr.bf16.mxu0 0
    %5429 = vmatpush2.bf16.msra.mxu0 0
    %5430 = vmatprep.subr.bf16.mxu0 0
    %5431 = vmatpush2.bf16.msra.mxu0 0
    %5432 = vmatprep.subr.bf16.mxu0 0
    %5433 = vmatpush2.bf16.msra.mxu0 0
    %5434 = vmatprep.subr.bf16.mxu0 0
    %5435 = vmatpush2.bf16.msra.mxu0 0
    %5436 = vmatprep.subr.bf16.mxu0 0
    %5437 = vmatpush2.bf16.msra.mxu0 0
    %5438 = vmatprep.subr.bf16.mxu0 0
    %5439 = vmatpush2.bf16.msra.mxu0 0
    %5440 = vmatprep.mubr.bf16.mxu0 0
    %5441 = vmatmul.mubr.bf16.gmra.mxu0 %v5023
    %v5442 = vpop.f32.mrf.mxu0
    %v5443 = vadd.f32 %v5341, %v5442
    %v5444 = vpop.f32.mrf.mxu0
    %v5445 = vpop.f32.mrf.mxu0
    %v5446 = vadd.f32 %v5344, %v5445
    %v5447 = vpop.f32.mrf.mxu0
    %5448 = vmatprep.mubr.bf16.mxu0 0
    %5449 = vmatmul.mubr.bf16.gmra.mxu0 %v5024
    %v5450 = vpop.f32.mrf.mxu0
    %v5451 = vadd.f32 %v5349, %v5450
    %v5452 = vpop.f32.mrf.mxu0
    %v5453 = vpop.f32.mrf.mxu0
    %v5454 = vadd.f32 %v5352, %v5453
    %v5455 = vpop.f32.mrf.mxu0
    %5456 = vdwg.mxu0
    %5457 = vmatprep.subr.mxu0 0.0
    %5458 = vmatpush1.xpose.msra.mxu0 0.0
    %5459 = vmatprep.subr.mxu0 0.0
    %5460 = vmatpush1.xpose.msra.mxu0 0.0
    %5461 = vmatprep.subr.mxu0 0.0
    %5462 = vmatpush1.xpose.msra.mxu0 0.0
    %5463 = vmatprep.subr.mxu0 0.0
    %5464 = vmatpush1.xpose.msra.mxu0 0.0
    %5465 = vmatprep.subr.mxu0 0.0
    %5466 = vmatpush1.xpose.msra.mxu0 0.0
    %5467 = vmatprep.subr.mxu0 0.0
    %5468 = vmatpush1.xpose.msra.mxu0 0.0
    %5469 = vmatprep.subr.mxu0 0.0
    %5470 = vmatpush1.xpose.msra.mxu0 0.0
    %5471 = vmatprep.subr.mxu0 0.0
    %5472 = vmatpush1.xpose.msra.mxu0 0.0
    %5473 = vmatprep.subr.mxu0 0.0
    %5474 = vmatpush1.xpose.msra.mxu0 0.0
    %5475 = vmatprep.subr.mxu0 0.0
    %5476 = vmatpush1.xpose.msra.mxu0 0.0
    %5477 = vmatprep.subr.mxu0 0.0
    %5478 = vmatpush1.xpose.msra.mxu0 0.0
    %5479 = vmatprep.subr.mxu0 0.0
    %5480 = vmatpush1.xpose.msra.mxu0 0.0
    %5481 = vmatprep.subr.mxu0 0.0
    %5482 = vmatpush1.xpose.msra.mxu0 %v2460
    %5483 = vmatprep.subr.mxu0 0.0
    %5484 = vmatpush1.xpose.msra.mxu0 %v2456
    %5485 = vmatprep.subr.mxu0 0.0
    %5486 = vmatpush1.xpose.msra.mxu0 %v2450
    %5487 = vmatprep.subr.mxu0 0.0
    %5488 = vmatpush1.xpose.msra.mxu0 %v2446
    %5489 = vmatprep.subr.mxu0 0.0
    %5490 = vmatpush2.xpose.msra.mxu0 0.0
    %5491 = vmatprep.subr.mxu0 0.0
    %5492 = vmatpush2.xpose.msra.mxu0 0.0
    %5493 = vmatprep.subr.mxu0 0.0
    %5494 = vmatpush2.xpose.msra.mxu0 0.0
    %5495 = vmatprep.subr.mxu0 0.0
    %5496 = vmatpush2.xpose.msra.mxu0 0.0
    %5497 = vmatprep.subr.mxu0 0.0
    %5498 = vmatpush2.xpose.msra.mxu0 0.0
    %5499 = vmatprep.subr.mxu0 0.0
    %5500 = vmatpush2.xpose.msra.mxu0 0.0
    %5501 = vmatprep.subr.mxu0 0.0
    %5502 = vmatpush2.xpose.msra.mxu0 0.0
    %5503 = vmatprep.subr.mxu0 0.0
    %5504 = vmatpush2.xpose.msra.mxu0 0.0
    %5505 = vmatprep.subr.mxu0 0.0
    %5506 = vmatpush2.xpose.msra.mxu0 0.0
    %5507 = vmatprep.subr.mxu0 0.0
    %5508 = vmatpush2.xpose.msra.mxu0 0.0
    %5509 = vmatprep.subr.mxu0 0.0
    %5510 = vmatpush2.xpose.msra.mxu0 0.0
    %5511 = vmatprep.subr.mxu0 0.0
    %5512 = vmatpush2.xpose.msra.mxu0 0.0
    %5513 = vmatprep.subr.mxu0 0.0
    %5514 = vmatpush2.xpose.msra.mxu0 0.0
    %5515 = vmatprep.subr.mxu0 0.0
    %5516 = vmatpush2.xpose.msra.mxu0 0.0
    %5517 = vmatprep.subr.mxu0 0.0
    %5518 = vmatpush2.xpose.msra.mxu0 0.0
    %5519 = vmatprep.subr.mxu0 0.0
    %5520 = vmatpush2.xpose.msra.mxu0 0.0
    %5521 = vmatprep.mubr.f32.mxu0 0.0
    %5522 = vmatmul.mubr.f32.gmra.mxu0 %v2154
    %v5523 = vpop.f32.mrf.mxu0
    %v5524 = vadd.f32 %v2767, %v5523
    %v5525 = vpop.f32.mrf.mxu0
    %5526 = vmatprep.mubr.f32.mxu0 0.0
    %5527 = vmatmul.mubr.f32.gmra.mxu0 %v2158
    %v5528 = vpop.f32.mrf.mxu0
    %v5529 = vadd.f32 %v2768, %v5528
    %v5530 = vpop.f32.mrf.mxu0
    %5531 = vmatprep.mubr.f32.mxu0 0.0
    %5532 = vmatmul.mubr.f32.gmra.mxu0 %v2164
    %v5533 = vpop.f32.mrf.mxu0
    %v5534 = vadd.f32 %v2769, %v5533
    %v5535 = vpop.f32.mrf.mxu0
    %5536 = vmatprep.mubr.f32.mxu0 0.0
    %5537 = vmatmul.mubr.f32.gmra.mxu0 %v2168
    %v5538 = vpop.f32.mrf.mxu0
    %v5539 = vadd.f32 %v2770, %v5538
    %v5540 = vpop.f32.mrf.mxu0
    %5541 = vdwg.mxu0
    %v5542 = vsel %vm2985, %v5524, -inf
    %5543 = vmax.xlane.f32.xlu0 %v5542
    %v5544 = vpop.xlane.xlu0 %5543
    %v5545 = vsel %vm2985, %v5529, -inf
    %5546 = vmax.xlane.f32.xlu0 %v5545
    %v5547 = vpop.xlane.xlu0 %5546
    %v5548 = vsel %vm2985, %v5534, -inf
    %5549 = vmax.xlane.f32.xlu0 %v5548
    %v5550 = vpop.xlane.xlu0 %5549
    %v5551 = vsel %vm2985, %v5539, -inf
    %5552 = vmax.xlane.f32.xlu0 %v5551
    %v5553 = vpop.xlane.xlu0 %5552
    %v5554 = vsub.f32 %v5524, %v5544
    %v5555 = vsub.f32 %v5529, %v5547
    %v5556 = vsub.f32 %v5534, %v5550
    %v5557 = vsub.f32 %v5539, %v5553
    %v5558 = vmul.f32 %v5554, 1.442695
    %v5559 = vpow.pop %v5558
    %v5560 = vmul.f32 %v5555, 1.442695
    %v5561 = vpow.pop %v5560
    %v5562 = vmul.f32 %v5556, 1.442695
    %v5563 = vpow.pop %v5562
    %v5564 = vmul.f32 %v5557, 1.442695
    %v5565 = vpow.pop %v5564
    %v5566 = vsel %vm2985, %v5559, 0.0
    %5567 = vadd.xlane.f32.xlu0 %v5566
    %v5568 = vpop.xlane.xlu0 %5567
    %v5569 = vsel %vm2985, %v5561, 0.0
    %5570 = vadd.xlane.f32.xlu0 %v5569
    %v5571 = vpop.xlane.xlu0 %5570
    %v5572 = vsel %vm2985, %v5563, 0.0
    %5573 = vadd.xlane.f32.xlu0 %v5572
    %v5574 = vpop.xlane.xlu0 %5573
    %v5575 = vsel %vm2985, %v5565, 0.0
    %5576 = vadd.xlane.f32.xlu0 %v5575
    %v5577 = vpop.xlane.xlu0 %5576
    %v5578 = vrcp.pop %v5568
    %v5579 = vrcp.pop %v5571
    %v5580 = vrcp.pop %v5574
    %v5581 = vrcp.pop %v5577
    %v5582 = vmul.f32 %v5559, %v5578
    %v5583 = vmul.f32 %v5561, %v5579
    %v5584 = vmul.f32 %v5563, %v5580
    %v5585 = vmul.f32 %v5565, %v5581
    %v5587 = vsel %vm2985, %v5582, 0
    %v5590 = vsel %vm2985, %v5583, 0
    %v5593 = vsel %vm2985, %v5584, 0
    %v5596 = vsel %vm2985, %v5585, 0
    %5598 = vmatprep.subr.mxu0 0.0
    %5599 = vmatpush1.msra.mxu0 0.0
    %5600 = vmatprep.subr.mxu0 0.0
    %5601 = vmatpush1.msra.mxu0 0.0
    %5602 = vmatprep.subr.mxu0 0.0
    %5603 = vmatpush1.msra.mxu0 0.0
    %5604 = vmatprep.subr.mxu0 0.0
    %5605 = vmatpush1.msra.mxu0 0.0
    %5606 = vmatprep.subr.mxu0 0.0
    %5607 = vmatpush1.msra.mxu0 0.0
    %5608 = vmatprep.subr.mxu0 0.0
    %5609 = vmatpush1.msra.mxu0 0.0
    %5610 = vmatprep.subr.mxu0 0.0
    %5611 = vmatpush1.msra.mxu0 0.0
    %5612 = vmatprep.subr.mxu0 0.0
    %5613 = vmatpush1.msra.mxu0 0.0
    %5614 = vmatprep.subr.mxu0 0.0
    %5615 = vmatpush1.msra.mxu0 0.0
    %5616 = vmatprep.subr.mxu0 0.0
    %5617 = vmatpush1.msra.mxu0 0.0
    %5618 = vmatprep.subr.mxu0 0.0
    %5619 = vmatpush1.msra.mxu0 0.0
    %5620 = vmatprep.subr.mxu0 0.0
    %5621 = vmatpush1.msra.mxu0 0.0
    %5622 = vmatprep.subr.mxu0 0.0
    %5623 = vmatpush1.msra.mxu0 %v2752
    %5624 = vmatprep.subr.mxu0 0.0
    %5625 = vmatpush1.msra.mxu0 %v2748
    %5626 = vmatprep.subr.mxu0 0.0
    %5627 = vmatpush1.msra.mxu0 %v2742
    %5628 = vmatprep.subr.mxu0 0.0
    %5629 = vmatpush1.msra.mxu0 %v2738
    %5630 = vmatprep.subr.mxu0 0.0
    %5631 = vmatpush2.msra.mxu0 0.0
    %5632 = vmatprep.subr.mxu0 0.0
    %5633 = vmatpush2.msra.mxu0 0.0
    %5634 = vmatprep.subr.mxu0 0.0
    %5635 = vmatpush2.msra.mxu0 0.0
    %5636 = vmatprep.subr.mxu0 0.0
    %5637 = vmatpush2.msra.mxu0 0.0
    %5638 = vmatprep.subr.mxu0 0.0
    %5639 = vmatpush2.msra.mxu0 0.0
    %5640 = vmatprep.subr.mxu0 0.0
    %5641 = vmatpush2.msra.mxu0 0.0
    %5642 = vmatprep.subr.mxu0 0.0
    %5643 = vmatpush2.msra.mxu0 0.0
    %5644 = vmatprep.subr.mxu0 0.0
    %5645 = vmatpush2.msra.mxu0 0.0
    %5646 = vmatprep.subr.mxu0 0.0
    %5647 = vmatpush2.msra.mxu0 0.0
    %5648 = vmatprep.subr.mxu0 0.0
    %5649 = vmatpush2.msra.mxu0 0.0
    %5650 = vmatprep.subr.mxu0 0.0
    %5651 = vmatpush2.msra.mxu0 0.0
    %5652 = vmatprep.subr.mxu0 0.0
    %5653 = vmatpush2.msra.mxu0 0.0
    %5654 = vmatprep.subr.mxu0 0.0
    %5655 = vmatpush2.msra.mxu0 0.0
    %5656 = vmatprep.subr.mxu0 0.0
    %5657 = vmatpush2.msra.mxu0 0.0
    %5658 = vmatprep.subr.mxu0 0.0
    %5659 = vmatpush2.msra.mxu0 0.0
    %5660 = vmatprep.subr.mxu0 0.0
    %5661 = vmatpush2.msra.mxu0 0.0
    %5662 = vmatprep.mubr.f32.mxu0 0.0
    %5663 = vmatmul.mubr.f32.gmra.mxu0 %v5587
    %v5664 = vpop.f32.mrf.mxu0
    %v5665 = vadd.f32 0.0, %v5664
    %v5666 = vpop.f32.mrf.mxu0
    %5667 = vmatprep.mubr.f32.mxu0 0.0
    %5668 = vmatmul.mubr.f32.gmra.mxu0 %v5590
    %v5669 = vpop.f32.mrf.mxu0
    %v5670 = vadd.f32 0.0, %v5669
    %v5671 = vpop.f32.mrf.mxu0
    %5672 = vmatprep.mubr.f32.mxu0 0.0
    %5673 = vmatmul.mubr.f32.gmra.mxu0 %v5593
    %v5674 = vpop.f32.mrf.mxu0
    %v5675 = vadd.f32 0.0, %v5674
    %v5676 = vpop.f32.mrf.mxu0
    %5677 = vmatprep.mubr.f32.mxu0 0.0
    %5678 = vmatmul.mubr.f32.gmra.mxu0 %v5596
    %v5679 = vpop.f32.mrf.mxu0
    %v5680 = vadd.f32 0.0, %v5679
    %v5681 = vpop.f32.mrf.mxu0
    %5682 = vdwg.mxu0
    %v5683 = vpack.c.bf16 %v5670, %v5665
    %v5684 = vpack.c.bf16 %v5680, %v5675
    %5685 = vmatprep.subr.bf16.mxu0 %v4147
    %5686 = vmatpush1.bf16.msra.mxu0 %v4146
    %5687 = vmatprep.subr.bf16.mxu0 %v4144
    %5688 = vmatpush1.bf16.msra.mxu0 %v4143
    %5689 = vmatprep.subr.bf16.mxu0 %v4141
    %5690 = vmatpush1.bf16.msra.mxu0 %v4140
    %5691 = vmatprep.subr.bf16.mxu0 %v4138
    %5692 = vmatpush1.bf16.msra.mxu0 %v4137
    %5693 = vmatprep.subr.bf16.mxu0 %v4135
    %5694 = vmatpush1.bf16.msra.mxu0 %v4134
    %5695 = vmatprep.subr.bf16.mxu0 %v4132
    %5696 = vmatpush1.bf16.msra.mxu0 %v4131
    %5697 = vmatprep.subr.bf16.mxu0 %v4129
    %5698 = vmatpush1.bf16.msra.mxu0 %v4128
    %5699 = vmatprep.subr.bf16.mxu0 %v4126
    %5700 = vmatpush1.bf16.msra.mxu0 %v4125
    %5701 = vmatprep.subr.bf16.mxu0 0
    %5702 = vmatpush2.bf16.msra.mxu0 0
    %5703 = vmatprep.subr.bf16.mxu0 0
    %5704 = vmatpush2.bf16.msra.mxu0 0
    %5705 = vmatprep.subr.bf16.mxu0 0
    %5706 = vmatpush2.bf16.msra.mxu0 0
    %5707 = vmatprep.subr.bf16.mxu0 0
    %5708 = vmatpush2.bf16.msra.mxu0 0
    %5709 = vmatprep.subr.bf16.mxu0 0
    %5710 = vmatpush2.bf16.msra.mxu0 0
    %5711 = vmatprep.subr.bf16.mxu0 0
    %5712 = vmatpush2.bf16.msra.mxu0 0
    %5713 = vmatprep.subr.bf16.mxu0 0
    %5714 = vmatpush2.bf16.msra.mxu0 0
    %5715 = vmatprep.subr.bf16.mxu0 0
    %5716 = vmatpush2.bf16.msra.mxu0 0
    %5717 = vmatprep.mubr.bf16.mxu0 0
    %5718 = vmatmul.mubr.bf16.gmra.mxu0 %v5683
    %v5719 = vpop.f32.mrf.mxu0
    %v5720 = vadd.f32 0.0, %v5719
    %v5721 = vpop.f32.mrf.mxu0
    %v5722 = vadd.f32 0.0, %v5721
    %v5723 = vpop.f32.mrf.mxu0
    %v5724 = vadd.f32 0.0, %v5723
    %v5725 = vpop.f32.mrf.mxu0
    %v5726 = vadd.f32 0.0, %v5725
    %5727 = vmatprep.mubr.bf16.mxu0 0
    %5728 = vmatmul.mubr.bf16.gmra.mxu0 %v5684
    %v5729 = vpop.f32.mrf.mxu0
    %v5730 = vadd.f32 0.0, %v5729
    %v5731 = vpop.f32.mrf.mxu0
    %v5732 = vadd.f32 0.0, %v5731
    %v5733 = vpop.f32.mrf.mxu0
    %v5734 = vadd.f32 0.0, %v5733
    %v5735 = vpop.f32.mrf.mxu0
    %v5736 = vadd.f32 0.0, %v5735
    %5737 = vdwg.mxu0
    %5738 = vmatprep.subr.bf16.mxu0 0
    %5739 = vmatpush1.bf16.msra.mxu0 %v4148
    %5740 = vmatprep.subr.bf16.mxu0 0
    %5741 = vmatpush1.bf16.msra.mxu0 %v4145
    %5742 = vmatprep.subr.bf16.mxu0 0
    %5743 = vmatpush1.bf16.msra.mxu0 %v4142
    %5744 = vmatprep.subr.bf16.mxu0 0
    %5745 = vmatpush1.bf16.msra.mxu0 %v4139
    %5746 = vmatprep.subr.bf16.mxu0 0
    %5747 = vmatpush1.bf16.msra.mxu0 %v4136
    %5748 = vmatprep.subr.bf16.mxu0 0
    %5749 = vmatpush1.bf16.msra.mxu0 %v4133
    %5750 = vmatprep.subr.bf16.mxu0 0
    %5751 = vmatpush1.bf16.msra.mxu0 %v4130
    %5752 = vmatprep.subr.bf16.mxu0 0
    %5753 = vmatpush1.bf16.msra.mxu0 %v4127
    %5754 = vmatprep.subr.bf16.mxu0 0
    %5755 = vmatpush2.bf16.msra.mxu0 0
    %5756 = vmatprep.subr.bf16.mxu0 0
    %5757 = vmatpush2.bf16.msra.mxu0 0
    %5758 = vmatprep.subr.bf16.mxu0 0
    %5759 = vmatpush2.bf16.msra.mxu0 0
    %5760 = vmatprep.subr.bf16.mxu0 0
    %5761 = vmatpush2.bf16.msra.mxu0 0
    %5762 = vmatprep.subr.bf16.mxu0 0
    %5763 = vmatpush2.bf16.msra.mxu0 0
    %5764 = vmatprep.subr.bf16.mxu0 0
    %5765 = vmatpush2.bf16.msra.mxu0 0
    %5766 = vmatprep.subr.bf16.mxu0 0
    %5767 = vmatpush2.bf16.msra.mxu0 0
    %5768 = vmatprep.subr.bf16.mxu0 0
    %5769 = vmatpush2.bf16.msra.mxu0 0
    %5770 = vmatprep.mubr.bf16.mxu0 0
    %5771 = vmatmul.mubr.bf16.gmra.mxu0 %v5683
    %v5772 = vpop.f32.mrf.mxu0
    %v5773 = vadd.f32 0.0, %v5772
    %v5774 = vpop.f32.mrf.mxu0
    %v5775 = vpop.f32.mrf.mxu0
    %v5776 = vadd.f32 0.0, %v5775
    %v5777 = vpop.f32.mrf.mxu0
    %5778 = vmatprep.mubr.bf16.mxu0 0
    %5779 = vmatmul.mubr.bf16.gmra.mxu0 %v5684
    %v5780 = vpop.f32.mrf.mxu0
    %v5781 = vadd.f32 0.0, %v5780
    %v5782 = vpop.f32.mrf.mxu0
    %v5783 = vpop.f32.mrf.mxu0
    %v5784 = vadd.f32 0.0, %v5783
    %v5785 = vpop.f32.mrf.mxu0
    %5786 = vdwg.mxu0
    %v5787 = vadd.f32 %v5390, %v5720
    %v5788 = vadd.f32 %v5392, %v5722
    %v5789 = vadd.f32 %v5443, %v5773
    %v5790 = vadd.f32 %v5394, %v5724
    %v5791 = vadd.f32 %v5396, %v5726
    %v5792 = vadd.f32 %v5446, %v5776
    %v5793 = vadd.f32 %v5400, %v5730
    %v5794 = vadd.f32 %v5402, %v5732
    %v5795 = vadd.f32 %v5451, %v5781
    %v5796 = vadd.f32 %v5404, %v5734
    %v5797 = vadd.f32 %v5406, %v5736
    %v5798 = vadd.f32 %v5454, %v5784
    %5799 = vmatprep.subr.mxu0 0.0
    %5800 = vmatpush1.xpose.msra.mxu0 0.0
    %5801 = vmatprep.subr.mxu0 0.0
    %5802 = vmatpush1.xpose.msra.mxu0 0.0
    %5803 = vmatprep.subr.mxu0 0.0
    %5804 = vmatpush1.xpose.msra.mxu0 0.0
    %5805 = vmatprep.subr.mxu0 0.0
    %5806 = vmatpush1.xpose.msra.mxu0 0.0
    %5807 = vmatprep.subr.mxu0 0.0
    %5808 = vmatpush1.xpose.msra.mxu0 0.0
    %5809 = vmatprep.subr.mxu0 0.0
    %5810 = vmatpush1.xpose.msra.mxu0 0.0
    %5811 = vmatprep.subr.mxu0 0.0
    %5812 = vmatpush1.xpose.msra.mxu0 0.0
    %5813 = vmatprep.subr.mxu0 0.0
    %5814 = vmatpush1.xpose.msra.mxu0 0.0
    %5815 = vmatprep.subr.mxu0 0.0
    %5816 = vmatpush1.xpose.msra.mxu0 0.0
    %5817 = vmatprep.subr.mxu0 0.0
    %5818 = vmatpush1.xpose.msra.mxu0 0.0
    %5819 = vmatprep.subr.mxu0 0.0
    %5820 = vmatpush1.xpose.msra.mxu0 0.0
    %5821 = vmatprep.subr.mxu0 0.0
    %5822 = vmatpush1.xpose.msra.mxu0 0.0
    %5823 = vmatprep.subr.mxu0 0.0
    %5824 = vmatpush1.xpose.msra.mxu0 %v2462
    %5825 = vmatprep.subr.mxu0 0.0
    %5826 = vmatpush1.xpose.msra.mxu0 %v2458
    %5827 = vmatprep.subr.mxu0 0.0
    %5828 = vmatpush1.xpose.msra.mxu0 %v2452
    %5829 = vmatprep.subr.mxu0 0.0
    %5830 = vmatpush1.xpose.msra.mxu0 %v2448
    %5831 = vmatprep.subr.mxu0 0.0
    %5832 = vmatpush2.xpose.msra.mxu0 0.0
    %5833 = vmatprep.subr.mxu0 0.0
    %5834 = vmatpush2.xpose.msra.mxu0 0.0
    %5835 = vmatprep.subr.mxu0 0.0
    %5836 = vmatpush2.xpose.msra.mxu0 0.0
    %5837 = vmatprep.subr.mxu0 0.0
    %5838 = vmatpush2.xpose.msra.mxu0 0.0
    %5839 = vmatprep.subr.mxu0 0.0
    %5840 = vmatpush2.xpose.msra.mxu0 0.0
    %5841 = vmatprep.subr.mxu0 0.0
    %5842 = vmatpush2.xpose.msra.mxu0 0.0
    %5843 = vmatprep.subr.mxu0 0.0
    %5844 = vmatpush2.xpose.msra.mxu0 0.0
    %5845 = vmatprep.subr.mxu0 0.0
    %5846 = vmatpush2.xpose.msra.mxu0 0.0
    %5847 = vmatprep.subr.mxu0 0.0
    %5848 = vmatpush2.xpose.msra.mxu0 0.0
    %5849 = vmatprep.subr.mxu0 0.0
    %5850 = vmatpush2.xpose.msra.mxu0 0.0
    %5851 = vmatprep.subr.mxu0 0.0
    %5852 = vmatpush2.xpose.msra.mxu0 0.0
    %5853 = vmatprep.subr.mxu0 0.0
    %5854 = vmatpush2.xpose.msra.mxu0 0.0
    %5855 = vmatprep.subr.mxu0 0.0
    %5856 = vmatpush2.xpose.msra.mxu0 0.0
    %5857 = vmatprep.subr.mxu0 0.0
    %5858 = vmatpush2.xpose.msra.mxu0 0.0
    %5859 = vmatprep.subr.mxu0 0.0
    %5860 = vmatpush2.xpose.msra.mxu0 0.0
    %5861 = vmatprep.subr.mxu0 0.0
    %5862 = vmatpush2.xpose.msra.mxu0 0.0
    %5863 = vmatprep.mubr.f32.mxu0 0.0
    %5864 = vmatmul.mubr.f32.gmra.mxu0 %v2156
    %v5865 = vpop.f32.mrf.mxu0
    %v5866 = vadd.f32 %v2767, %v5865
    %v5867 = vpop.f32.mrf.mxu0
    %5868 = vmatprep.mubr.f32.mxu0 0.0
    %5869 = vmatmul.mubr.f32.gmra.mxu0 %v2160
    %v5870 = vpop.f32.mrf.mxu0
    %v5871 = vadd.f32 %v2768, %v5870
    %v5872 = vpop.f32.mrf.mxu0
    %5873 = vmatprep.mubr.f32.mxu0 0.0
    %5874 = vmatmul.mubr.f32.gmra.mxu0 %v2166
    %v5875 = vpop.f32.mrf.mxu0
    %v5876 = vadd.f32 %v2769, %v5875
    %v5877 = vpop.f32.mrf.mxu0
    %5878 = vmatprep.mubr.f32.mxu0 0.0
    %5879 = vmatmul.mubr.f32.gmra.mxu0 %v2170
    %v5880 = vpop.f32.mrf.mxu0
    %v5881 = vadd.f32 %v2770, %v5880
    %v5882 = vpop.f32.mrf.mxu0
    %5883 = vdwg.mxu0
    %v5884 = vsel %vm2985, %v5866, -inf
    %5885 = vmax.xlane.f32.xlu0 %v5884
    %v5886 = vpop.xlane.xlu0 %5885
    %v5887 = vsel %vm2985, %v5871, -inf
    %5888 = vmax.xlane.f32.xlu0 %v5887
    %v5889 = vpop.xlane.xlu0 %5888
    %v5890 = vsel %vm2985, %v5876, -inf
    %5891 = vmax.xlane.f32.xlu0 %v5890
    %v5892 = vpop.xlane.xlu0 %5891
    %v5893 = vsel %vm2985, %v5881, -inf
    %5894 = vmax.xlane.f32.xlu0 %v5893
    %v5895 = vpop.xlane.xlu0 %5894
    %v5896 = vsub.f32 %v5866, %v5886
    %v5897 = vsub.f32 %v5871, %v5889
    %v5898 = vsub.f32 %v5876, %v5892
    %v5899 = vsub.f32 %v5881, %v5895
    %v5900 = vmul.f32 %v5896, 1.442695
    %v5901 = vpow.pop %v5900
    %v5902 = vmul.f32 %v5897, 1.442695
    %v5903 = vpow.pop %v5902
    %v5904 = vmul.f32 %v5898, 1.442695
    %v5905 = vpow.pop %v5904
    %v5906 = vmul.f32 %v5899, 1.442695
    %v5907 = vpow.pop %v5906
    %v5908 = vsel %vm2985, %v5901, 0.0
    %5909 = vadd.xlane.f32.xlu0 %v5908
    %v5910 = vpop.xlane.xlu0 %5909
    %v5911 = vsel %vm2985, %v5903, 0.0
    %5912 = vadd.xlane.f32.xlu0 %v5911
    %v5913 = vpop.xlane.xlu0 %5912
    %v5914 = vsel %vm2985, %v5905, 0.0
    %5915 = vadd.xlane.f32.xlu0 %v5914
    %v5916 = vpop.xlane.xlu0 %5915
    %v5917 = vsel %vm2985, %v5907, 0.0
    %5918 = vadd.xlane.f32.xlu0 %v5917
    %v5919 = vpop.xlane.xlu0 %5918
    %v5920 = vrcp.pop %v5910
    %v5921 = vrcp.pop %v5913
    %v5922 = vrcp.pop %v5916
    %v5923 = vrcp.pop %v5919
    %v5924 = vmul.f32 %v5901, %v5920
    %v5925 = vmul.f32 %v5903, %v5921
    %v5926 = vmul.f32 %v5905, %v5922
    %v5927 = vmul.f32 %v5907, %v5923
    %v5929 = vsel %vm2985, %v5924, 0
    %v5932 = vsel %vm2985, %v5925, 0
    %v5935 = vsel %vm2985, %v5926, 0
    %v5938 = vsel %vm2985, %v5927, 0
    %5940 = vmatprep.subr.mxu0 0.0
    %5941 = vmatpush1.msra.mxu0 0.0
    %5942 = vmatprep.subr.mxu0 0.0
    %5943 = vmatpush1.msra.mxu0 0.0
    %5944 = vmatprep.subr.mxu0 0.0
    %5945 = vmatpush1.msra.mxu0 0.0
    %5946 = vmatprep.subr.mxu0 0.0
    %5947 = vmatpush1.msra.mxu0 0.0
    %5948 = vmatprep.subr.mxu0 0.0
    %5949 = vmatpush1.msra.mxu0 0.0
    %5950 = vmatprep.subr.mxu0 0.0
    %5951 = vmatpush1.msra.mxu0 0.0
    %5952 = vmatprep.subr.mxu0 0.0
    %5953 = vmatpush1.msra.mxu0 0.0
    %5954 = vmatprep.subr.mxu0 0.0
    %5955 = vmatpush1.msra.mxu0 0.0
    %5956 = vmatprep.subr.mxu0 0.0
    %5957 = vmatpush1.msra.mxu0 0.0
    %5958 = vmatprep.subr.mxu0 0.0
    %5959 = vmatpush1.msra.mxu0 0.0
    %5960 = vmatprep.subr.mxu0 0.0
    %5961 = vmatpush1.msra.mxu0 0.0
    %5962 = vmatprep.subr.mxu0 0.0
    %5963 = vmatpush1.msra.mxu0 0.0
    %5964 = vmatprep.subr.mxu0 0.0
    %5965 = vmatpush1.msra.mxu0 %v2754
    %5966 = vmatprep.subr.mxu0 0.0
    %5967 = vmatpush1.msra.mxu0 %v2750
    %5968 = vmatprep.subr.mxu0 0.0
    %5969 = vmatpush1.msra.mxu0 %v2744
    %5970 = vmatprep.subr.mxu0 0.0
    %5971 = vmatpush1.msra.mxu0 %v2740
    %5972 = vmatprep.subr.mxu0 0.0
    %5973 = vmatpush2.msra.mxu0 0.0
    %5974 = vmatprep.subr.mxu0 0.0
    %5975 = vmatpush2.msra.mxu0 0.0
    %5976 = vmatprep.subr.mxu0 0.0
    %5977 = vmatpush2.msra.mxu0 0.0
    %5978 = vmatprep.subr.mxu0 0.0
    %5979 = vmatpush2.msra.mxu0 0.0
    %5980 = vmatprep.subr.mxu0 0.0
    %5981 = vmatpush2.msra.mxu0 0.0
    %5982 = vmatprep.subr.mxu0 0.0
    %5983 = vmatpush2.msra.mxu0 0.0
    %5984 = vmatprep.subr.mxu0 0.0
    %5985 = vmatpush2.msra.mxu0 0.0
    %5986 = vmatprep.subr.mxu0 0.0
    %5987 = vmatpush2.msra.mxu0 0.0
    %5988 = vmatprep.subr.mxu0 0.0
    %5989 = vmatpush2.msra.mxu0 0.0
    %5990 = vmatprep.subr.mxu0 0.0
    %5991 = vmatpush2.msra.mxu0 0.0
    %5992 = vmatprep.subr.mxu0 0.0
    %5993 = vmatpush2.msra.mxu0 0.0
    %5994 = vmatprep.subr.mxu0 0.0
    %5995 = vmatpush2.msra.mxu0 0.0
    %5996 = vmatprep.subr.mxu0 0.0
    %5997 = vmatpush2.msra.mxu0 0.0
    %5998 = vmatprep.subr.mxu0 0.0
    %5999 = vmatpush2.msra.mxu0 0.0
    %6000 = vmatprep.subr.mxu0 0.0
    %6001 = vmatpush2.msra.mxu0 0.0
    %6002 = vmatprep.subr.mxu0 0.0
    %6003 = vmatpush2.msra.mxu0 0.0
    %6004 = vmatprep.mubr.f32.mxu0 0.0
    %6005 = vmatmul.mubr.f32.gmra.mxu0 %v5929
    %v6006 = vpop.f32.mrf.mxu0
    %v6007 = vadd.f32 0.0, %v6006
    %v6008 = vpop.f32.mrf.mxu0
    %6009 = vmatprep.mubr.f32.mxu0 0.0
    %6010 = vmatmul.mubr.f32.gmra.mxu0 %v5932
    %v6011 = vpop.f32.mrf.mxu0
    %v6012 = vadd.f32 0.0, %v6011
    %v6013 = vpop.f32.mrf.mxu0
    %6014 = vmatprep.mubr.f32.mxu0 0.0
    %6015 = vmatmul.mubr.f32.gmra.mxu0 %v5935
    %v6016 = vpop.f32.mrf.mxu0
    %v6017 = vadd.f32 0.0, %v6016
    %v6018 = vpop.f32.mrf.mxu0
    %6019 = vmatprep.mubr.f32.mxu0 0.0
    %6020 = vmatmul.mubr.f32.gmra.mxu0 %v5938
    %v6021 = vpop.f32.mrf.mxu0
    %v6022 = vadd.f32 0.0, %v6021
    %v6023 = vpop.f32.mrf.mxu0
    %6024 = vdwg.mxu0
    %v6025 = vpack.c.bf16 %v6012, %v6007
    %v6026 = vpack.c.bf16 %v6022, %v6017
    %6027 = vmatprep.subr.bf16.mxu0 %v4617
    %6028 = vmatpush1.bf16.msra.mxu0 %v4616
    %6029 = vmatprep.subr.bf16.mxu0 %v4614
    %6030 = vmatpush1.bf16.msra.mxu0 %v4613
    %6031 = vmatprep.subr.bf16.mxu0 %v4611
    %6032 = vmatpush1.bf16.msra.mxu0 %v4610
    %6033 = vmatprep.subr.bf16.mxu0 %v4608
    %6034 = vmatpush1.bf16.msra.mxu0 %v4607
    %6035 = vmatprep.subr.bf16.mxu0 %v4605
    %6036 = vmatpush1.bf16.msra.mxu0 %v4604
    %6037 = vmatprep.subr.bf16.mxu0 %v4602
    %6038 = vmatpush1.bf16.msra.mxu0 %v4601
    %6039 = vmatprep.subr.bf16.mxu0 %v4599
    %6040 = vmatpush1.bf16.msra.mxu0 %v4598
    %6041 = vmatprep.subr.bf16.mxu0 %v4596
    %6042 = vmatpush1.bf16.msra.mxu0 %v4595
    %6043 = vmatprep.subr.bf16.mxu0 0
    %6044 = vmatpush2.bf16.msra.mxu0 0
    %6045 = vmatprep.subr.bf16.mxu0 0
    %6046 = vmatpush2.bf16.msra.mxu0 0
    %6047 = vmatprep.subr.bf16.mxu0 0
    %6048 = vmatpush2.bf16.msra.mxu0 0
    %6049 = vmatprep.subr.bf16.mxu0 0
    %6050 = vmatpush2.bf16.msra.mxu0 0
    %6051 = vmatprep.subr.bf16.mxu0 0
    %6052 = vmatpush2.bf16.msra.mxu0 0
    %6053 = vmatprep.subr.bf16.mxu0 0
    %6054 = vmatpush2.bf16.msra.mxu0 0
    %6055 = vmatprep.subr.bf16.mxu0 0
    %6056 = vmatpush2.bf16.msra.mxu0 0
    %6057 = vmatprep.subr.bf16.mxu0 0
    %6058 = vmatpush2.bf16.msra.mxu0 0
    %6059 = vmatprep.mubr.bf16.mxu0 0
    %6060 = vmatmul.mubr.bf16.gmra.mxu0 %v6025
    %v6061 = vpop.f32.mrf.mxu0
    %v6062 = vadd.f32 0.0, %v6061
    %v6063 = vpop.f32.mrf.mxu0
    %v6064 = vadd.f32 0.0, %v6063
    %v6065 = vpop.f32.mrf.mxu0
    %v6066 = vadd.f32 0.0, %v6065
    %v6067 = vpop.f32.mrf.mxu0
    %v6068 = vadd.f32 0.0, %v6067
    %6069 = vmatprep.mubr.bf16.mxu0 0
    %6070 = vmatmul.mubr.bf16.gmra.mxu0 %v6026
    %v6071 = vpop.f32.mrf.mxu0
    %v6072 = vadd.f32 0.0, %v6071
    %v6073 = vpop.f32.mrf.mxu0
    %v6074 = vadd.f32 0.0, %v6073
    %v6075 = vpop.f32.mrf.mxu0
    %v6076 = vadd.f32 0.0, %v6075
    %v6077 = vpop.f32.mrf.mxu0
    %v6078 = vadd.f32 0.0, %v6077
    %6079 = vdwg.mxu0
    %6080 = vmatprep.subr.bf16.mxu0 0
    %6081 = vmatpush1.bf16.msra.mxu0 %v4618
    %6082 = vmatprep.subr.bf16.mxu0 0
    %6083 = vmatpush1.bf16.msra.mxu0 %v4615
    %6084 = vmatprep.subr.bf16.mxu0 0
    %6085 = vmatpush1.bf16.msra.mxu0 %v4612
    %6086 = vmatprep.subr.bf16.mxu0 0
    %6087 = vmatpush1.bf16.msra.mxu0 %v4609
    %6088 = vmatprep.subr.bf16.mxu0 0
    %6089 = vmatpush1.bf16.msra.mxu0 %v4606
    %6090 = vmatprep.subr.bf16.mxu0 0
    %6091 = vmatpush1.bf16.msra.mxu0 %v4603
    %6092 = vmatprep.subr.bf16.mxu0 0
    %6093 = vmatpush1.bf16.msra.mxu0 %v4600
    %6094 = vmatprep.subr.bf16.mxu0 0
    %6095 = vmatpush1.bf16.msra.mxu0 %v4597
    %6096 = vmatprep.subr.bf16.mxu0 0
    %6097 = vmatpush2.bf16.msra.mxu0 0
    %6098 = vmatprep.subr.bf16.mxu0 0
    %6099 = vmatpush2.bf16.msra.mxu0 0
    %6100 = vmatprep.subr.bf16.mxu0 0
    %6101 = vmatpush2.bf16.msra.mxu0 0
    %6102 = vmatprep.subr.bf16.mxu0 0
    %6103 = vmatpush2.bf16.msra.mxu0 0
    %6104 = vmatprep.subr.bf16.mxu0 0
    %6105 = vmatpush2.bf16.msra.mxu0 0
    %6106 = vmatprep.subr.bf16.mxu0 0
    %6107 = vmatpush2.bf16.msra.mxu0 0
    %6108 = vmatprep.subr.bf16.mxu0 0
    %6109 = vmatpush2.bf16.msra.mxu0 0
    %6110 = vmatprep.subr.bf16.mxu0 0
    %6111 = vmatpush2.bf16.msra.mxu0 0
    %6112 = vmatprep.mubr.bf16.mxu0 0
    %6113 = vmatmul.mubr.bf16.gmra.mxu0 %v6025
    %v6114 = vpop.f32.mrf.mxu0
    %v6115 = vadd.f32 0.0, %v6114
    %v6116 = vpop.f32.mrf.mxu0
    %v6117 = vpop.f32.mrf.mxu0
    %v6118 = vadd.f32 0.0, %v6117
    %v6119 = vpop.f32.mrf.mxu0
    %6120 = vmatprep.mubr.bf16.mxu0 0
    %6121 = vmatmul.mubr.bf16.gmra.mxu0 %v6026
    %v6122 = vpop.f32.mrf.mxu0
    %v6123 = vadd.f32 0.0, %v6122
    %v6124 = vpop.f32.mrf.mxu0
    %v6125 = vpop.f32.mrf.mxu0
    %v6126 = vadd.f32 0.0, %v6125
    %v6127 = vpop.f32.mrf.mxu0
    %6128 = vdwg.mxu0
    %v6129 = vadd.f32 %v5787, %v6062
    %v6130 = vadd.f32 %v5788, %v6064
    %v6131 = vadd.f32 %v5789, %v6115
    %v6132 = vadd.f32 %v5790, %v6066
    %v6133 = vadd.f32 %v5791, %v6068
    %v6134 = vadd.f32 %v5792, %v6118
    %v6135 = vadd.f32 %v5793, %v6072
    %v6136 = vadd.f32 %v5794, %v6074
    %v6137 = vadd.f32 %v5795, %v6123
    %v6138 = vadd.f32 %v5796, %v6076
    %v6139 = vadd.f32 %v5797, %v6078
    %v6140 = vadd.f32 %v5798, %v6126
    %v6141 = vadd.f32 %v6129, %v4761
    %v6142 = vadd.f32 %v6130, %v4765
    %v6143 = vadd.f32 %v6131, %v4769
    %v6144 = vadd.f32 %v6132, %v4761
    %v6145 = vadd.f32 %v6133, %v4765
    %v6146 = vadd.f32 %v6134, %v4769
    %v6147 = vadd.f32 %v6135, %v4761
    %v6148 = vadd.f32 %v6136, %v4765
    %v6149 = vadd.f32 %v6137, %v4769
    %v6150 = vadd.f32 %v6138, %v4761
    %v6151 = vadd.f32 %v6139, %v4765
    %v6152 = vadd.f32 %v6140, %v4769
    %s6153 = scalar_lea.vmem [#allocation10], 96
    %6154 = vst [vmem:[%s6153] sm:$0xff] %v6141
    %6155 = vst [vmem:[%s6153 + $0x8] sm:$0xff] %v6142
    %6156 = vst [vmem:[%s6153 + $0x10] sm:$0xff] %v6143
    %6157 = vst [vmem:[%s6153 + $0x18] sm:$0xff] %v6144
    %6158 = vst [vmem:[%s6153 + $0x20] sm:$0xff] %v6145
    %6159 = vst [vmem:[%s6153 + $0x28] sm:$0xff] %v6146
    %6160 = vst [vmem:[%s6153 + $0x30] sm:$0xff] %v6147
    %6161 = vst [vmem:[%s6153 + $0x38] sm:$0xff] %v6148
    %6162 = vst [vmem:[%s6153 + $0x40] sm:$0xff] %v6149
    %6163 = vst [vmem:[%s6153 + $0x48] sm:$0xff] %v6150
    %6164 = vst [vmem:[%s6153 + $0x50] sm:$0xff] %v6151
    %6165 = vst [vmem:[%s6153 + $0x58] sm:$0xff] %v6152
    // Predicated region
    $region34: #{tpu_custom_call.1} parent=1 // pred_check
      _
    $region35: #{tpu_custom_call.1} parent=1 // pred_check_branch
      %6167 = sbr.rel (0) target = $region37
    $region36: #{tpu_custom_call.1} parent=1 // pred_region
      %s6169 = ssub.s32 3072, 3072
      %6170 = vsyncadd [#allocation4], %s6169
      %s6171 = sshll.u32 [#allocation10], 4
      %s6172 = int_to_ptr.vmem [resolvable:$true] %s6171
      %6177 = dma.vmem_to_hbm [thread:$0]  %s6172, 3072, %s4, [#allocation4], 384, 384, 24
    $region37: #{tpu_custom_call.1} parent=1 // pred_fallthru
      _
    // Predicated region
    $region38: #{tpu_custom_call.1} parent=1 // pred_check
      _
    $region39: #{tpu_custom_call.1} parent=1 // pred_check_branch
      %6179 = sbr.rel (0) target = $region41
    $region40: #{tpu_custom_call.1} parent=1 // pred_region
      %6180 = dma.done [#allocation4], 3072
    $region41: #{tpu_custom_call.1} parent=1 // pred_fallthru
      _
    %6181 = vsyncpa [#allocation3], 1
    %6182 = vsyncpa [#allocation6], 1
    %6183 = vsyncpa [#allocation9], 1
    %6184 = vsyncpa [#allocation4], 1

</llo_original>
